<compile_context>
chip_gen: v5e
topology: v5e:2x2
jax: 0.10.0
libtpu: 0.0.40
codegen_flags: <defaults>
</compile_context>

<pallas_src>
import functools

import jax
import jax.numpy as jnp
from jax.experimental import pallas as pl
from jax.experimental.pallas import tpu as pltpu

SIGNAL_LENGTH = 400
NET_STRUCTURES = (2, 11, 9, 7, 1, 10, 11)
POOL_K = 3          # MaxPool1d kernel size produced by structure code 7
BN_EPS = 1e-5


def _round_up(n, m):
    return ((n + m - 1) // m) * m


# ----------------------------- fused kernel ------------------------------

def _target_net_kernel(x_ref, w1_ref, b1_ref, w2_ref, b2_ref, wh_ref, bh_ref,
                       o_ref, *, pool_k):
    """One batch tile of the Target_Net forward; activations never leave VMEM.

    x_ref : (TB, 400)        input signal tile (Cin = 1)                 [VMEM]
    w1_ref: (C1, K1)         conv1 weights (C1=2, K1=3)                  [SMEM]
    b1_ref: (C1,)            conv1 bias                                  [SMEM]
    w2_ref: (C2, C1)         conv2 (k=1) weights with eval-BN folded in  [SMEM]
    b2_ref: (C2,)            conv2 bias with eval-BN folded in           [SMEM]
    wh_ref: (C2, LF, NOUT)   head weights, zero-expanded to pre-pool-stride
                             positions (LF = pool_k * (L1 // pool_k))    [VMEM]
    bh_ref: (1, NOUT)        head bias                                   [VMEM]
    o_ref : (TB, NOUT)       softmax probabilities for this tile         [VMEM]
    """
    lin = x_ref.shape[1]
    c1, k1 = w1_ref.shape
    c2 = w2_ref.shape[0]
    lfull = wh_ref.shape[1]
    l1 = lin - (k1 - 1)

    xv = x_ref[...]                                   # single load of the tile

    # ---- conv1 (valid, stride 1) + ReLU: VPU multiply-add over K shifts ----
    y = []
    for c in range(c1):
        acc = w1_ref[c, 0] * xv[:, 0:l1]
        for k in range(1, k1):
            acc = acc + w1_ref[c, k] * xv[:, k:k + l1]
        y.append(jnp.maximum(acc + b1_ref[c], 0.0))   # kept in registers/VMEM temps

    # ---- MaxPool1d(pool_k): window max at *every* offset; the stride-pool_k
    #      subsampling is folded into wh (zeros at unused positions) ----
    m = []
    for c in range(c1):
        mc = y[c][:, 0:lfull]
        for d in range(1, pool_k):
            mc = jnp.maximum(mc, y[c][:, d:d + lfull])
        m.append(mc)

    # ---- conv2 (k=1) with eval-mode BatchNorm folded in, + ReLU ----
    z = []
    for co in range(c2):
        acc = w2_ref[co, 0] * m[0]
        for ci in range(1, c1):
            acc = acc + w2_ref[co, ci] * m[ci]
        z.append(jnp.maximum(acc + b2_ref[co], 0.0))

    # ---- Linear head on the MXU: sum of per-channel (TB, LF) @ (LF, NOUT),
    #      f32 accumulation (channel-major flatten is implicit in wh layout) ----
    logits = jnp.dot(z[0], wh_ref[0],
                     precision=jax.lax.Precision.HIGHEST,
                     preferred_element_type=jnp.float32)
    for co in range(1, c2):
        logits = logits + jnp.dot(z[co], wh_ref[co],
                                  precision=jax.lax.Precision.HIGHEST,
                                  preferred_element_type=jnp.float32)
    logits = logits + bh_ref[...]

    # ---- softmax over the 4 output lanes ----
    mmax = jnp.max(logits, axis=-1, keepdims=True)
    e = jnp.exp(logits - mmax)
    o_ref[...] = e / jnp.sum(e, axis=-1, keepdims=True)


def _fused_forward(x2d, w1s, b1, w2f, b2f, wh, bh2d, tb):
    bsz, lin = x2d.shape
    nout = bh2d.shape[1]
    kernel = functools.partial(_target_net_kernel, pool_k=POOL_K)
    return pl.pallas_call(
        kernel,
        out_shape=jax.ShapeDtypeStruct((bsz, nout), jnp.float32),
        grid=(bsz // tb,),
        in_specs=[
            # x tiles are double-buffered by the Pallas pipeline.
            # (pipeline_mode=pl.Buffered(3) is a cheap sweep if DMA is exposed.)
            pl.BlockSpec((tb, lin), lambda i: (i, 0)),
            pl.BlockSpec(memory_space=pltpu.MemorySpace.SMEM),   # w1 scalars
            pl.BlockSpec(memory_space=pltpu.MemorySpace.SMEM),   # b1 scalars
            pl.BlockSpec(memory_space=pltpu.MemorySpace.SMEM),   # w2 (BN folded)
            pl.BlockSpec(memory_space=pltpu.MemorySpace.SMEM),   # b2 (BN folded)
            pl.BlockSpec(memory_space=pltpu.MemorySpace.VMEM),   # head weight (resident)
            pl.BlockSpec(memory_space=pltpu.MemorySpace.VMEM),   # head bias
        ],
        out_specs=pl.BlockSpec((tb, nout), lambda i: (i, 0)),
        compiler_params=pltpu.CompilerParams(
            dimension_semantics=("parallel",)),      # megacore sharding on v7x
    )(x2d, w1s, b1, w2f, b2f, wh, bh2d)


@jax.jit
def target_net_forward(x, fused_params):
    """x: (B, 1, 400) float32 -> (B, 4) softmax probabilities."""
    w1s, b1, w2f, b2f, wh, bh2d = fused_params
    bsz, cin, lin = x.shape
    x2d = x.reshape(bsz, cin * lin)                   # first conv has Cin == 1
    # Batch tile: >=256 rows for large batches; small batches pad to a multiple
    # of 8 so every vreg uses all sublanes.
    tb = 256 if bsz >= 256 else _round_up(max(bsz, 1), 8)
    bp = _round_up(bsz, tb)
    if bp != bsz:
        x2d = jnp.pad(x2d, ((0, bp - bsz), (0, 0)))   # padded rows sliced off below
    out = _fused_forward(x2d, w1s, b1, w2f, b2f, wh, bh2d, tb)
    return out[:bsz]


# --------------------- parameter construction / folding ------------------

def build_target_net_params(key, net_structures=NET_STRUCTURES):
    """Mirrors Target_Net.__init__: returns (layers, (w_head, b_head))."""
    signal_length = SIGNAL_LENGTH
    in_channels = 1
    layers = []
    conv_kernel = {1: 1, 2: 3, 3: 5, 4: 1, 5: 3, 6: 5}
    for ns in net_structures:
        if ns == 0:
            break
        if ns in (1, 2, 3, 4, 5, 6):
            out_channels = in_channels * 2 if ns in (1, 2, 3) else max(in_channels // 2, 1)
            k = conv_kernel[ns]
            signal_length -= (k - 1)
            key, wk, bk = jax.random.split(key, 3)
            bound = 1.0 / float(in_channels * k) ** 0.5
            w = jax.random.uniform(wk, (out_channels, in_channels, k),
                                   jnp.float32, -bound, bound)
            b = jax.random.uniform(bk, (out_channels,), jnp.float32, -bound, bound)
            layers.append(("conv", (w, b)))
            in_channels = out_channels
        elif ns == 7:
            layers.append(("maxpool", 3))
            signal_length //= 3
        elif ns == 8:
            layers.append(("maxpool", 5))
            signal_length //= 5
        elif ns == 9:
            # TODO(synk): training-mode Dropout is stochastic; eval-mode identity used.
            layers.append(("dropout", None))
        elif ns == 10:
            key, gk, bk2, mk, vk = jax.random.split(key, 5)
            gamma = 1.0 + 0.1 * jax.random.normal(gk, (in_channels,), jnp.float32)
            beta = 0.1 * jax.random.normal(bk2, (in_channels,), jnp.float32)
            rmean = 0.1 * jax.random.normal(mk, (in_channels,), jnp.float32)
            rvar = jnp.abs(jax.random.normal(vk, (in_channels,), jnp.float32)) + 0.5
            layers.append(("bn", (gamma, beta, rmean, rvar)))
        elif ns == 11:
            layers.append(("relu", None))
    feat = signal_length * in_channels
    key, wk, bk = jax.random.split(key, 3)
    bound = 1.0 / float(feat) ** 0.5
    w_last = jax.random.uniform(wk, (4, feat), jnp.float32, -bound, bound)
    b_last = jax.random.uniform(bk, (4,), jnp.float32, -bound, bound)
    return layers, (w_last, b_last)


def fold_fused_params(layers, head):
    """Fold the layer list for NET_STRUCTURES=(2,11,9,7,1,10,11) into the fused
    kernel inputs: BN -> conv2 affine; maxpool stride + flatten -> (C2, LF, NOUT)
    zero-expanded head weight consumed by per-channel MXU dots."""
    kinds = [k for k, _ in layers]
    assert kinds == ["conv", "relu", "dropout", "maxpool", "conv", "bn", "relu"], kinds
    w1, b1 = layers[0][1]                        # (C1, 1, K1), (C1,)
    pool_k = layers[3][1]
    assert pool_k == POOL_K
    w2, b2 = layers[4][1]                        # (C2, C1, 1), (C2,)
    gamma, beta, rmean, rvar = layers[5][1]
    w_head, b_head = head                        # (NOUT, C2*LOUT), (NOUT,)

    assert w1.shape[1] == 1, "first conv must have Cin == 1"
    w1s = w1[:, 0, :]                            # (C1, K1)

    # eval-mode BatchNorm folded into the k=1 conv
    scale = gamma / jnp.sqrt(rvar + BN_EPS)      # (C2,)
    shift = beta - rmean * scale
    w2f = w2[:, :, 0] * scale[:, None]           # (C2, C1)
    b2f = b2 * scale + shift                     # (C2,)

    # Head weights transposed to (C2, LF, NOUT) and zero-expanded so the
    # MaxPool stride-k subsampling becomes plain MXU contraction over the full
    # (pre-subsample) pooled length LF = LOUT * pool_k.
    nout, feat = w_head.shape
    c2 = w2f.shape[0]
    lout = feat // c2
    lfull = lout * pool_k
    w_head_r = jnp.transpose(w_head.reshape(nout, c2, lout), (1, 2, 0))  # (C2, LOUT, NOUT)
    wh = jnp.zeros((c2, lfull, nout), jnp.float32).at[:, ::pool_k, :].set(w_head_r)
    bh2d = b_head.reshape(1, nout)
    return (w1s, b1, w2f, b2f, wh, bh2d)


# -------------------- pure-JAX reference (for checking) ------------------

def reference_forward(x, layers, head):
    """Unfused eval-mode forward in plain JAX, full f32 precision."""
    hi = jax.lax.Precision.HIGHEST
    for kind, p in layers:
        if kind == "conv":
            w, b = p
            cout, cin, k = w.shape
            bsz, _, l = x.shape
            lout = l - k + 1
            acc = jnp.zeros((bsz, cout, lout), jnp.float32)
            for kk in range(k):
                acc = acc + jnp.einsum("oc,bcl->bol", w[:, :, kk],
                                       x[:, :, kk:kk + lout], precision=hi)
            x = acc + b[None, :, None]
        elif kind == "maxpool":
            k = p
            bsz, c, l = x.shape
            lo = l // k
            x = jnp.max(x[:, :, :lo * k].reshape(bsz, c, lo, k), axis=-1)
        elif kind == "bn":
            gamma, beta, rmean, rvar = p
            scale = gamma / jnp.sqrt(rvar + BN_EPS)
            shift = beta - rmean * scale
            x = x * scale[None, :, None] + shift[None, :, None]
        elif kind == "relu":
            x = jnp.maximum(x, 0.0)
        # dropout: eval-mode identity
    f = x.reshape(x.shape[0], -1)
    w, b = head
    logits = jnp.einsum("bf,of->bo", f, w, precision=hi) + b
    return jax.nn.softmax(logits, axis=-1)


if __name__ == "__main__":
    key = jax.random.PRNGKey(0)
    pkey, xkey = jax.random.split(key)
    layers, head = build_target_net_params(pkey, NET_STRUCTURES)
    fused = fold_fused_params(layers, head)

    x = jax.random.normal(xkey, (2, 1, SIGNAL_LENGTH), jnp.float32)  # (B, 1, 400)
    out = jax.block_until_ready(target_net_forward(x, fused))

    assert out.shape == (2, 4), out.shape
    assert bool(jnp.all(jnp.isfinite(out)))
    assert bool(jnp.allclose(jnp.sum(out, axis=1), 1.0, atol=1e-5))

    ref = reference_forward(x, layers, head)
    # Tolerance allows for MXU pass rounding of the f32 head contraction.
    assert bool(jnp.allclose(out, ref, atol=1e-3, rtol=1e-3)), (out, ref)
    print("KERNEL_OK")
</pallas_src>

<mosaic_0001>
module attributes {stable_mosaic.version = 11 : i64} {
  func.func @_target_net_kernel(%arg0: i32, %arg1: memref<8x400xf32, #tpu.memory_space<vmem>>, %arg2: memref<2x3xf32, #tpu.memory_space<smem>>, %arg3: memref<2xf32, #tpu.memory_space<smem>>, %arg4: memref<4x2xf32, #tpu.memory_space<smem>>, %arg5: memref<4xf32, #tpu.memory_space<smem>>, %arg6: memref<4x396x4xf32, #tpu.memory_space<vmem>>, %arg7: memref<1x4xf32, #tpu.memory_space<vmem>>, %arg8: memref<8x4xf32, #tpu.memory_space<vmem>>) attributes {dimension_semantics = [#tpu.dimension_semantics<parallel>], iteration_bounds = array<i64: 1>, scalar_prefetch = 0 : i64, scratch_operands = 0 : i64, tpu.core_type = #tpu.core_type<tc>, window_params = [{transform_indices = @transform_0, window_bounds = array<i64: 8, 400>}, {transform_indices = @transform_1, window_bounds = array<i64: 2, 3>}, {transform_indices = @transform_2, window_bounds = array<i64: 2>}, {transform_indices = @transform_3, window_bounds = array<i64: 4, 2>}, {transform_indices = @transform_4, window_bounds = array<i64: 4>}, {pipeline_mode = #tpu.pipeline_mode<synchronous>, transform_indices = @transform_5, window_bounds = array<i64: 4, 396, 4>}, {pipeline_mode = #tpu.pipeline_mode<synchronous>, transform_indices = @transform_6, window_bounds = array<i64: 1, 4>}, {transform_indices = @transform_7, window_bounds = array<i64: 8, 4>}]} {
    %c0 = arith.constant 0 : index
    %c0_0 = arith.constant 0 : index
    %0 = vector.load %arg1[%c0, %c0_0] : memref<8x400xf32, #tpu.memory_space<vmem>>, vector<8x400xf32>
    %c0_1 = arith.constant 0 : index
    %c0_2 = arith.constant 0 : index
    %1 = memref.load %arg2[%c0_1, %c0_2] : memref<2x3xf32, #tpu.memory_space<smem>>
    %2 = vector.extract_strided_slice %0 {offsets = [0, 0], sizes = [8, 398], strides = [1, 1]} : vector<8x400xf32> to vector<8x398xf32>
    %3 = vector.broadcast %1 : f32 to vector<8x398xf32>
    %4 = arith.mulf %3, %2 : vector<8x398xf32>
    %c0_3 = arith.constant 0 : index
    %c1 = arith.constant 1 : index
    %5 = memref.load %arg2[%c0_3, %c1] : memref<2x3xf32, #tpu.memory_space<smem>>
    %6 = vector.extract_strided_slice %0 {offsets = [0, 1], sizes = [8, 398], strides = [1, 1]} : vector<8x400xf32> to vector<8x398xf32>
    %7 = vector.broadcast %5 : f32 to vector<8x398xf32>
    %8 = arith.mulf %7, %6 : vector<8x398xf32>
    %9 = arith.addf %4, %8 : vector<8x398xf32>
    %c0_4 = arith.constant 0 : index
    %c2 = arith.constant 2 : index
    %10 = memref.load %arg2[%c0_4, %c2] : memref<2x3xf32, #tpu.memory_space<smem>>
    %11 = vector.extract_strided_slice %0 {offsets = [0, 2], sizes = [8, 398], strides = [1, 1]} : vector<8x400xf32> to vector<8x398xf32>
    %12 = vector.broadcast %10 : f32 to vector<8x398xf32>
    %13 = arith.mulf %12, %11 : vector<8x398xf32>
    %14 = arith.addf %9, %13 : vector<8x398xf32>
    %c0_5 = arith.constant 0 : index
    %15 = memref.load %arg3[%c0_5] : memref<2xf32, #tpu.memory_space<smem>>
    %16 = vector.broadcast %15 : f32 to vector<8x398xf32>
    %17 = arith.addf %14, %16 : vector<8x398xf32>
    %cst = arith.constant 0.000000e+00 : f32
    %18 = vector.broadcast %cst : f32 to vector<8x398xf32>
    %19 = arith.maximumf %17, %18 : vector<8x398xf32>
    %c1_6 = arith.constant 1 : index
    %c0_7 = arith.constant 0 : index
    %20 = memref.load %arg2[%c1_6, %c0_7] : memref<2x3xf32, #tpu.memory_space<smem>>
    %21 = vector.extract_strided_slice %0 {offsets = [0, 0], sizes = [8, 398], strides = [1, 1]} : vector<8x400xf32> to vector<8x398xf32>
    %22 = vector.broadcast %20 : f32 to vector<8x398xf32>
    %23 = arith.mulf %22, %21 : vector<8x398xf32>
    %c1_8 = arith.constant 1 : index
    %c1_9 = arith.constant 1 : index
    %24 = memref.load %arg2[%c1_8, %c1_9] : memref<2x3xf32, #tpu.memory_space<smem>>
    %25 = vector.extract_strided_slice %0 {offsets = [0, 1], sizes = [8, 398], strides = [1, 1]} : vector<8x400xf32> to vector<8x398xf32>
    %26 = vector.broadcast %24 : f32 to vector<8x398xf32>
    %27 = arith.mulf %26, %25 : vector<8x398xf32>
    %28 = arith.addf %23, %27 : vector<8x398xf32>
    %c1_10 = arith.constant 1 : index
    %c2_11 = arith.constant 2 : index
    %29 = memref.load %arg2[%c1_10, %c2_11] : memref<2x3xf32, #tpu.memory_space<smem>>
    %30 = vector.extract_strided_slice %0 {offsets = [0, 2], sizes = [8, 398], strides = [1, 1]} : vector<8x400xf32> to vector<8x398xf32>
    %31 = vector.broadcast %29 : f32 to vector<8x398xf32>
    %32 = arith.mulf %31, %30 : vector<8x398xf32>
    %33 = arith.addf %28, %32 : vector<8x398xf32>
    %c1_12 = arith.constant 1 : index
    %34 = memref.load %arg3[%c1_12] : memref<2xf32, #tpu.memory_space<smem>>
    %35 = vector.broadcast %34 : f32 to vector<8x398xf32>
    %36 = arith.addf %33, %35 : vector<8x398xf32>
    %cst_13 = arith.constant 0.000000e+00 : f32
    %37 = vector.broadcast %cst_13 : f32 to vector<8x398xf32>
    %38 = arith.maximumf %36, %37 : vector<8x398xf32>
    %39 = vector.extract_strided_slice %19 {offsets = [0, 0], sizes = [8, 396], strides = [1, 1]} : vector<8x398xf32> to vector<8x396xf32>
    %40 = vector.extract_strided_slice %19 {offsets = [0, 1], sizes = [8, 396], strides = [1, 1]} : vector<8x398xf32> to vector<8x396xf32>
    %41 = arith.maximumf %39, %40 : vector<8x396xf32>
    %42 = vector.extract_strided_slice %19 {offsets = [0, 2], sizes = [8, 396], strides = [1, 1]} : vector<8x398xf32> to vector<8x396xf32>
    %43 = arith.maximumf %41, %42 : vector<8x396xf32>
    %44 = vector.extract_strided_slice %38 {offsets = [0, 0], sizes = [8, 396], strides = [1, 1]} : vector<8x398xf32> to vector<8x396xf32>
    %45 = vector.extract_strided_slice %38 {offsets = [0, 1], sizes = [8, 396], strides = [1, 1]} : vector<8x398xf32> to vector<8x396xf32>
    %46 = arith.maximumf %44, %45 : vector<8x396xf32>
    %47 = vector.extract_strided_slice %38 {offsets = [0, 2], sizes = [8, 396], strides = [1, 1]} : vector<8x398xf32> to vector<8x396xf32>
    %48 = arith.maximumf %46, %47 : vector<8x396xf32>
    %c0_14 = arith.constant 0 : index
    %c0_15 = arith.constant 0 : index
    %49 = memref.load %arg4[%c0_14, %c0_15] : memref<4x2xf32, #tpu.memory_space<smem>>
    %50 = vector.broadcast %49 : f32 to vector<8x396xf32>
    %51 = arith.mulf %50, %43 : vector<8x396xf32>
    %c0_16 = arith.constant 0 : index
    %c1_17 = arith.constant 1 : index
    %52 = memref.load %arg4[%c0_16, %c1_17] : memref<4x2xf32, #tpu.memory_space<smem>>
    %53 = vector.broadcast %52 : f32 to vector<8x396xf32>
    %54 = arith.mulf %53, %48 : vector<8x396xf32>
    %55 = arith.addf %51, %54 : vector<8x396xf32>
    %c0_18 = arith.constant 0 : index
    %56 = memref.load %arg5[%c0_18] : memref<4xf32, #tpu.memory_space<smem>>
    %57 = vector.broadcast %56 : f32 to vector<8x396xf32>
    %58 = arith.addf %55, %57 : vector<8x396xf32>
    %cst_19 = arith.constant 0.000000e+00 : f32
    %59 = vector.broadcast %cst_19 : f32 to vector<8x396xf32>
    %60 = arith.maximumf %58, %59 : vector<8x396xf32>
    %c1_20 = arith.constant 1 : index
    %c0_21 = arith.constant 0 : index
    %61 = memref.load %arg4[%c1_20, %c0_21] : memref<4x2xf32, #tpu.memory_space<smem>>
    %62 = vector.broadcast %61 : f32 to vector<8x396xf32>
    %63 = arith.mulf %62, %43 : vector<8x396xf32>
    %c1_22 = arith.constant 1 : index
    %c1_23 = arith.constant 1 : index
    %64 = memref.load %arg4[%c1_22, %c1_23] : memref<4x2xf32, #tpu.memory_space<smem>>
    %65 = vector.broadcast %64 : f32 to vector<8x396xf32>
    %66 = arith.mulf %65, %48 : vector<8x396xf32>
    %67 = arith.addf %63, %66 : vector<8x396xf32>
    %c1_24 = arith.constant 1 : index
    %68 = memref.load %arg5[%c1_24] : memref<4xf32, #tpu.memory_space<smem>>
    %69 = vector.broadcast %68 : f32 to vector<8x396xf32>
    %70 = arith.addf %67, %69 : vector<8x396xf32>
    %cst_25 = arith.constant 0.000000e+00 : f32
    %71 = vector.broadcast %cst_25 : f32 to vector<8x396xf32>
    %72 = arith.maximumf %70, %71 : vector<8x396xf32>
    %c2_26 = arith.constant 2 : index
    %c0_27 = arith.constant 0 : index
    %73 = memref.load %arg4[%c2_26, %c0_27] : memref<4x2xf32, #tpu.memory_space<smem>>
    %74 = vector.broadcast %73 : f32 to vector<8x396xf32>
    %75 = arith.mulf %74, %43 : vector<8x396xf32>
    %c2_28 = arith.constant 2 : index
    %c1_29 = arith.constant 1 : index
    %76 = memref.load %arg4[%c2_28, %c1_29] : memref<4x2xf32, #tpu.memory_space<smem>>
    %77 = vector.broadcast %76 : f32 to vector<8x396xf32>
    %78 = arith.mulf %77, %48 : vector<8x396xf32>
    %79 = arith.addf %75, %78 : vector<8x396xf32>
    %c2_30 = arith.constant 2 : index
    %80 = memref.load %arg5[%c2_30] : memref<4xf32, #tpu.memory_space<smem>>
    %81 = vector.broadcast %80 : f32 to vector<8x396xf32>
    %82 = arith.addf %79, %81 : vector<8x396xf32>
    %cst_31 = arith.constant 0.000000e+00 : f32
    %83 = vector.broadcast %cst_31 : f32 to vector<8x396xf32>
    %84 = arith.maximumf %82, %83 : vector<8x396xf32>
    %c3 = arith.constant 3 : index
    %c0_32 = arith.constant 0 : index
    %85 = memref.load %arg4[%c3, %c0_32] : memref<4x2xf32, #tpu.memory_space<smem>>
    %86 = vector.broadcast %85 : f32 to vector<8x396xf32>
    %87 = arith.mulf %86, %43 : vector<8x396xf32>
    %c3_33 = arith.constant 3 : index
    %c1_34 = arith.constant 1 : index
    %88 = memref.load %arg4[%c3_33, %c1_34] : memref<4x2xf32, #tpu.memory_space<smem>>
    %89 = vector.broadcast %88 : f32 to vector<8x396xf32>
    %90 = arith.mulf %89, %48 : vector<8x396xf32>
    %91 = arith.addf %87, %90 : vector<8x396xf32>
    %c3_35 = arith.constant 3 : index
    %92 = memref.load %arg5[%c3_35] : memref<4xf32, #tpu.memory_space<smem>>
    %93 = vector.broadcast %92 : f32 to vector<8x396xf32>
    %94 = arith.addf %91, %93 : vector<8x396xf32>
    %cst_36 = arith.constant 0.000000e+00 : f32
    %95 = vector.broadcast %cst_36 : f32 to vector<8x396xf32>
    %96 = arith.maximumf %94, %95 : vector<8x396xf32>
    %c0_37 = arith.constant 0 : index
    %c0_38 = arith.constant 0 : index
    %c0_39 = arith.constant 0 : index
    %97 = vector.load %arg6[%c0_37, %c0_38, %c0_39] : memref<4x396x4xf32, #tpu.memory_space<vmem>>, vector<1x396x4xf32>
    %98 = vector.shape_cast %97 : vector<1x396x4xf32> to vector<396x4xf32>
    %cst_40 = arith.constant dense<0.000000e+00> : vector<8x4xf32>
    %99 = tpu.matmul %60, %98, %cst_40 {dimension_numbers = #tpu.dot_dimension_numbers<[1], [0], [0], [1], [0, 0, 1, 1], [], []>, precision = #tpu.contract_precision<fp32>} : vector<8x396xf32>, vector<396x4xf32>, vector<8x4xf32> -> vector<8x4xf32>
    %c1_41 = arith.constant 1 : index
    %c0_42 = arith.constant 0 : index
    %c0_43 = arith.constant 0 : index
    %100 = vector.load %arg6[%c1_41, %c0_42, %c0_43] : memref<4x396x4xf32, #tpu.memory_space<vmem>>, vector<1x396x4xf32>
    %101 = vector.shape_cast %100 : vector<1x396x4xf32> to vector<396x4xf32>
    %cst_44 = arith.constant dense<0.000000e+00> : vector<8x4xf32>
    %102 = tpu.matmul %72, %101, %cst_44 {dimension_numbers = #tpu.dot_dimension_numbers<[1], [0], [0], [1], [0, 0, 1, 1], [], []>, precision = #tpu.contract_precision<fp32>} : vector<8x396xf32>, vector<396x4xf32>, vector<8x4xf32> -> vector<8x4xf32>
    %103 = arith.addf %99, %102 : vector<8x4xf32>
    %c2_45 = arith.constant 2 : index
    %c0_46 = arith.constant 0 : index
    %c0_47 = arith.constant 0 : index
    %104 = vector.load %arg6[%c2_45, %c0_46, %c0_47] : memref<4x396x4xf32, #tpu.memory_space<vmem>>, vector<1x396x4xf32>
    %105 = vector.shape_cast %104 : vector<1x396x4xf32> to vector<396x4xf32>
    %cst_48 = arith.constant dense<0.000000e+00> : vector<8x4xf32>
    %106 = tpu.matmul %84, %105, %cst_48 {dimension_numbers = #tpu.dot_dimension_numbers<[1], [0], [0], [1], [0, 0, 1, 1], [], []>, precision = #tpu.contract_precision<fp32>} : vector<8x396xf32>, vector<396x4xf32>, vector<8x4xf32> -> vector<8x4xf32>
    %107 = arith.addf %103, %106 : vector<8x4xf32>
    %c3_49 = arith.constant 3 : index
    %c0_50 = arith.constant 0 : index
    %c0_51 = arith.constant 0 : index
    %108 = vector.load %arg6[%c3_49, %c0_50, %c0_51] : memref<4x396x4xf32, #tpu.memory_space<vmem>>, vector<1x396x4xf32>
    %109 = vector.shape_cast %108 : vector<1x396x4xf32> to vector<396x4xf32>
    %cst_52 = arith.constant dense<0.000000e+00> : vector<8x4xf32>
    %110 = tpu.matmul %96, %109, %cst_52 {dimension_numbers = #tpu.dot_dimension_numbers<[1], [0], [0], [1], [0, 0, 1, 1], [], []>, precision = #tpu.contract_precision<fp32>} : vector<8x396xf32>, vector<396x4xf32>, vector<8x4xf32> -> vector<8x4xf32>
    %111 = arith.addf %107, %110 : vector<8x4xf32>
    %c0_53 = arith.constant 0 : index
    %c0_54 = arith.constant 0 : index
    %112 = vector.load %arg7[%c0_53, %c0_54] : memref<1x4xf32, #tpu.memory_space<vmem>>, vector<1x4xf32>
    %113 = vector.broadcast %112 : vector<1x4xf32> to vector<8x4xf32>
    %114 = arith.addf %111, %113 : vector<8x4xf32>
    %cst_55 = arith.constant dense<0xFF800000> : vector<8xf32>
    %115 = vector.multi_reduction <maximumf>, %114, %cst_55 [1] : vector<8x4xf32> to vector<8xf32>
    %116 = vector.shape_cast %115 : vector<8xf32> to vector<8x1xf32>
    %117 = vector.broadcast %116 : vector<8x1xf32> to vector<8x4xf32>
    %118 = arith.subf %114, %117 : vector<8x4xf32>
    %119 = math.exp %118 : vector<8x4xf32>
    %cst_56 = arith.constant dense<0.000000e+00> : vector<8xf32>
    %120 = vector.multi_reduction <add>, %119, %cst_56 [1] : vector<8x4xf32> to vector<8xf32>
    %121 = vector.shape_cast %120 : vector<8xf32> to vector<8x1xf32>
    %122 = vector.broadcast %121 : vector<8x1xf32> to vector<8x4xf32>
    %123 = arith.divf %119, %122 : vector<8x4xf32>
    %c0_57 = arith.constant 0 : index
    %c0_58 = arith.constant 0 : index
    %124 = vector.load %arg8[%c0_57, %c0_58] : memref<8x4xf32, #tpu.memory_space<vmem>>, vector<8x4xf32>
    tpu.vector_store %arg8[%c0_57, %c0_58], %123 {strides = array<i32>} : memref<8x4xf32, #tpu.memory_space<vmem>>, vector<8x4xf32>,
    return
  }
  func.func @transform_0(%arg0: i32) -> (i32, i32) {
    %c0_i32 = arith.constant 0 : i32
    %c0_i32_0 = arith.constant 0 : i32
    return %arg0, %c0_i32 : i32, i32
  }
  func.func @transform_1(%arg0: i32) -> (i32, i32) {
    %c0_i32 = arith.constant 0 : i32
    %c0_i32_0 = arith.constant 0 : i32
    %c0_i32_1 = arith.constant 0 : i32
    return %c0_i32, %c0_i32_0 : i32, i32
  }
  func.func @transform_2(%arg0: i32) -> i32 {
    %c0_i32 = arith.constant 0 : i32
    %c0_i32_0 = arith.constant 0 : i32
    return %c0_i32 : i32
  }
  func.func @transform_3(%arg0: i32) -> (i32, i32) {
    %c0_i32 = arith.constant 0 : i32
    %c0_i32_0 = arith.constant 0 : i32
    %c0_i32_1 = arith.constant 0 : i32
    return %c0_i32, %c0_i32_0 : i32, i32
  }
  func.func @transform_4(%arg0: i32) -> i32 {
    %c0_i32 = arith.constant 0 : i32
    %c0_i32_0 = arith.constant 0 : i32
    return %c0_i32 : i32
  }
  func.func @transform_5(%arg0: i32) -> (i32, i32, i32) {
    %c0_i32 = arith.constant 0 : i32
    %c0_i32_0 = arith.constant 0 : i32
    %c0_i32_1 = arith.constant 0 : i32
    %c0_i32_2 = arith.constant 0 : i32
    return %c0_i32, %c0_i32_0, %c0_i32_1 : i32, i32, i32
  }
  func.func @transform_6(%arg0: i32) -> (i32, i32) {
    %c0_i32 = arith.constant 0 : i32
    %c0_i32_0 = arith.constant 0 : i32
    %c0_i32_1 = arith.constant 0 : i32
    return %c0_i32, %c0_i32_0 : i32, i32
  }
  func.func @transform_7(%arg0: i32) -> (i32, i32) {
    %c0_i32 = arith.constant 0 : i32
    %c0_i32_0 = arith.constant 0 : i32
    return %arg0, %c0_i32 : i32, i32
  }
}

</mosaic_0001>

<llo_original>
// kernel: target_net_forward.1
$region0: #{target_net_forward.1}
  #allocation0 [shape = 'u32[]', space=smem, size = 0x4, offset = 0x4, fixed_abs, tag = 'smem constant byte address 0x4 - core index']
  #allocation1 [shape = 'u32[72,128]{1,0:T(1,128)}', space=vmem, size = 0x9000, scoped, tag = 'internal scratch']
  %s0 = inlined_call_operand.vmem [shape: f32[8,400], index: 0, kind: input, shape index: {}]
  %s1 = inlined_call_operand.vmem [shape: f32[2,3], index: 1, kind: input, shape index: {}]
  %s2 = inlined_call_operand.vmem [shape: f32[2], index: 2, kind: input, shape index: {}]
  %s3 = inlined_call_operand.vmem [shape: f32[4,2], index: 3, kind: input, shape index: {}]
  %s4 = inlined_call_operand.vmem [shape: f32[4], index: 4, kind: input, shape index: {}]
  %s5 = inlined_call_operand.vmem [shape: f32[4,396,4], index: 5, kind: input, shape index: {}]
  %s6 = inlined_call_operand.vmem [shape: f32[1,4], index: 6, kind: input, shape index: {}]
  %s7 = inlined_call_operand.vmem [shape: f32[8,4], index: 7, kind: output, shape index: {}]
  %s8 = sld [smem:[#allocation0]]
  $region54: #{target_net_forward.1} parent=0
    _
  %s10 = ssub.s32 1, %s8
  %s11 = scalar_select 0, %s10, %s8
  $region1: #{target_net_forward.1} parent=0
    #allocation2 [shape = 'u8[1024]{0}', space=smem, size = 0x400, scoped, tag = 'input window, operand 1, single buffered']
    #allocation3 [shape = 's32[1]{0}', space=sflag, size = 0x4, scoped, tag = 'scoped memory for target_net_forward.1']
    #allocation4 [shape = 'u8[512]{0}', space=smem, size = 0x200, scoped, tag = 'input window, operand 2, single buffered']
    #allocation5 [shape = 's32[1]{0}', space=sflag, size = 0x4, scoped, tag = 'scoped memory for target_net_forward.1']
    #allocation6 [shape = 'u8[2048]{0}', space=smem, size = 0x800, scoped, tag = 'input window, operand 3, single buffered']
    #allocation7 [shape = 'u8[512]{0}', space=smem, size = 0x200, scoped, tag = 'input window, operand 4, single buffered']
    #allocation8 [shape = 's32[1]{0}', space=sflag, size = 0x4, scoped, tag = 'scoped memory for target_net_forward.1']
    %12 = vsyncpa [#allocation3], 0
    %13 = vsyncpa [#allocation5], 0
    %14 = vsyncpa [#allocation8], 0
    // Predicated region
    $region2: #{target_net_forward.1} parent=1 // pred_check
      _
    $region3: #{target_net_forward.1} parent=1 // pred_check_branch
      %16 = sbr.rel (0) target = $region5
    $region4: #{target_net_forward.1} parent=1 // pred_region
      _
    $region5: #{target_net_forward.1} parent=1 // pred_fallthru
      _
    // Predicated region
    $region6: #{target_net_forward.1} parent=1 // pred_check
      _
    $region7: #{target_net_forward.1} parent=1 // pred_check_branch
      %18 = sbr.rel (0) target = $region9
    $region8: #{target_net_forward.1} parent=1 // pred_region
      %20 = vsyncadd [#allocation3], 0
      %s22 = sshll.u32 %s1, 4
      %s23 = int_to_ptr.vmem [resolvable:$true] %s22
      %25 = dma.vmem_to_smem %s23, 32, [#allocation2], [#allocation3]
    $region9: #{target_net_forward.1} parent=1 // pred_fallthru
      _
    // Predicated region
    $region10: #{target_net_forward.1} parent=1 // pred_check
      _
    $region11: #{target_net_forward.1} parent=1 // pred_check_branch
      %27 = sbr.rel (0) target = $region13
    $region12: #{target_net_forward.1} parent=1 // pred_region
      %29 = vsyncadd [#allocation5], 0
      %s31 = sshll.u32 %s2, 4
      %s32 = int_to_ptr.vmem [resolvable:$true] %s31
      %34 = dma.vmem_to_smem %s32, 16, [#allocation4], [#allocation5]
    $region13: #{target_net_forward.1} parent=1 // pred_fallthru
      _
    // Predicated region
    $region14: #{target_net_forward.1} parent=1 // pred_check
      _
    $region15: #{target_net_forward.1} parent=1 // pred_check_branch
      %36 = sbr.rel (0) target = $region17
    $region16: #{target_net_forward.1} parent=1 // pred_region
      %38 = vsyncadd [#allocation5], 0
      %s40 = sshll.u32 %s3, 4
      %s41 = int_to_ptr.vmem [resolvable:$true] %s40
      %43 = dma.vmem_to_smem %s41, 64, [#allocation6], [#allocation5]
    $region17: #{target_net_forward.1} parent=1 // pred_fallthru
      _
    // Predicated region
    $region18: #{target_net_forward.1} parent=1 // pred_check
      _
    $region19: #{target_net_forward.1} parent=1 // pred_check_branch
      %45 = sbr.rel (0) target = $region21
    $region20: #{target_net_forward.1} parent=1 // pred_region
      %47 = vsyncadd [#allocation8], 0
      %s49 = sshll.u32 %s4, 4
      %s50 = int_to_ptr.vmem [resolvable:$true] %s49
      %52 = dma.vmem_to_smem %s50, 16, [#allocation7], [#allocation8]
    $region21: #{target_net_forward.1} parent=1 // pred_fallthru
      _
    // Predicated region
    $region22: #{target_net_forward.1} parent=1 // pred_check
      _
    $region23: #{target_net_forward.1} parent=1 // pred_check_branch
      %54 = sbr.rel (0) target = $region25
    $region24: #{target_net_forward.1} parent=1 // pred_region
      _
    $region25: #{target_net_forward.1} parent=1 // pred_fallthru
      _
    // Predicated region
    $region26: #{target_net_forward.1} parent=1 // pred_check
      _
    $region27: #{target_net_forward.1} parent=1 // pred_check_branch
      %56 = sbr.rel (0) target = $region29
    $region28: #{target_net_forward.1} parent=1 // pred_region
      _
    $region29: #{target_net_forward.1} parent=1 // pred_fallthru
      _
    // Predicated region
    $region30: #{target_net_forward.1} parent=1 // pred_check
      _
    $region31: #{target_net_forward.1} parent=1 // pred_check_branch
      %58 = sbr.rel (0) target = $region33
    $region32: #{target_net_forward.1} parent=1 // pred_region
      %60 = dma.done [#allocation3], 32
    $region33: #{target_net_forward.1} parent=1 // pred_fallthru
      _
    // Predicated region
    $region34: #{target_net_forward.1} parent=1 // pred_check
      _
    $region35: #{target_net_forward.1} parent=1 // pred_check_branch
      %62 = sbr.rel (0) target = $region37
    $region36: #{target_net_forward.1} parent=1 // pred_region
      %64 = dma.done [#allocation5], 16
    $region37: #{target_net_forward.1} parent=1 // pred_fallthru
      _
    // Predicated region
    $region38: #{target_net_forward.1} parent=1 // pred_check
      _
    $region39: #{target_net_forward.1} parent=1 // pred_check_branch
      %66 = sbr.rel (0) target = $region41
    $region40: #{target_net_forward.1} parent=1 // pred_region
      %68 = dma.done [#allocation5], 64
    $region41: #{target_net_forward.1} parent=1 // pred_fallthru
      _
    // Predicated region
    $region42: #{target_net_forward.1} parent=1 // pred_check
      _
    $region43: #{target_net_forward.1} parent=1 // pred_check_branch
      %70 = sbr.rel (0) target = $region45
    $region44: #{target_net_forward.1} parent=1 // pred_region
      %72 = dma.done [#allocation8], 16
    $region45: #{target_net_forward.1} parent=1 // pred_fallthru
      _
    %73 = sfence
    %v74 = vld [vmem:[%s0] sm:$0xff]
    %v75 = vld [vmem:[%s0 + $0x8] sm:$0xff]
    %v76 = vld [vmem:[%s0 + $0x10] sm:$0xff]
    %v77 = vld [vmem:[%s0 + $0x18] sm:$0xff]
    %s78 = sld [smem:[#allocation2]]
    %v79 = vstv %s78
    %v80 = vmul.f32 %v79, %v74
    %v81 = vmul.f32 %v79, %v75
    %v82 = vmul.f32 %v79, %v76
    %v83 = vmul.f32 %v79, %v77
    %s84 = sld [smem:[#allocation2 + $0x1]]
    %v85 = vstv %s84
    %v86 = vmul.f32 %v85, %v74
    %v87 = vmul.f32 %v85, %v75
    %v88 = vmul.f32 %v85, %v76
    %v89 = vmul.f32 %v85, %v77
    %94 = vrot.lane.b32.xlu0 %v86, 127
    %v95 = vpop.permute.xlu0 %94
    %96 = vrot.lane.b32.xlu0 %v87, 127
    %v97 = vpop.permute.xlu0 %96
    %98 = vrot.lane.b32.xlu0 %v88, 127
    %v99 = vpop.permute.xlu0 %98
    %100 = vrot.lane.b32.xlu0 %v89, 127
    %v101 = vpop.permute.xlu0 %100
    %vm102 = vcmask 1039360
    %v103 = vsel %vm102, %v95, %v97
    %v104 = vsel %vm102, %v97, %v99
    %v105 = vsel %vm102, %v99, %v101
    %v110 = vadd.f32 %v80, %v103
    %v111 = vadd.f32 %v81, %v104
    %v112 = vadd.f32 %v82, %v105
    %v113 = vadd.f32 %v83, %v101
    %s114 = sld [smem:[#allocation2 + $0x2]]
    %v115 = vstv %s114
    %v116 = vmul.f32 %v115, %v74
    %v117 = vmul.f32 %v115, %v75
    %v118 = vmul.f32 %v115, %v76
    %v119 = vmul.f32 %v115, %v77
    %124 = vrot.lane.b32.xlu0 %v116, 126
    %v125 = vpop.permute.xlu0 %124
    %126 = vrot.lane.b32.xlu0 %v117, 126
    %v127 = vpop.permute.xlu0 %126
    %128 = vrot.lane.b32.xlu0 %v118, 126
    %v129 = vpop.permute.xlu0 %128
    %130 = vrot.lane.b32.xlu0 %v119, 126
    %v131 = vpop.permute.xlu0 %130
    %vm132 = vcmask 1031168
    %v133 = vsel %vm132, %v125, %v127
    %v134 = vsel %vm132, %v127, %v129
    %v135 = vsel %vm132, %v129, %v131
    %v140 = vadd.f32 %v110, %v133
    %v141 = vadd.f32 %v111, %v134
    %v142 = vadd.f32 %v112, %v135
    %v143 = vadd.f32 %v113, %v131
    %s144 = sld [smem:[#allocation4]]
    %v145 = vstv %s144
    %v146 = vadd.f32 %v140, %v145
    %v147 = vadd.f32 %v141, %v145
    %v148 = vadd.f32 %v142, %v145
    %v149 = vadd.f32 %v143, %v145
    %v150 = vmax.f32 %v146, 0.0
    %v151 = vmax.f32 %v147, 0.0
    %v152 = vmax.f32 %v148, 0.0
    %v153 = vmax.f32 %v149, 0.0
    %s154 = sld [smem:[#allocation2 + $0x80]]
    %v155 = vstv %s154
    %v156 = vmul.f32 %v155, %v74
    %v157 = vmul.f32 %v155, %v75
    %v158 = vmul.f32 %v155, %v76
    %v159 = vmul.f32 %v155, %v77
    %s160 = sld [smem:[#allocation2 + $0x81]]
    %v161 = vstv %s160
    %v162 = vmul.f32 %v161, %v74
    %v163 = vmul.f32 %v161, %v75
    %v164 = vmul.f32 %v161, %v76
    %v165 = vmul.f32 %v161, %v77
    %170 = vrot.lane.b32.xlu0 %v162, 127
    %v171 = vpop.permute.xlu0 %170
    %172 = vrot.lane.b32.xlu0 %v163, 127
    %v173 = vpop.permute.xlu0 %172
    %174 = vrot.lane.b32.xlu0 %v164, 127
    %v175 = vpop.permute.xlu0 %174
    %176 = vrot.lane.b32.xlu0 %v165, 127
    %v177 = vpop.permute.xlu0 %176
    %v178 = vsel %vm102, %v171, %v173
    %v179 = vsel %vm102, %v173, %v175
    %v180 = vsel %vm102, %v175, %v177
    %v185 = vadd.f32 %v156, %v178
    %v186 = vadd.f32 %v157, %v179
    %v187 = vadd.f32 %v158, %v180
    %v188 = vadd.f32 %v159, %v177
    %s189 = sld [smem:[#allocation2 + $0x82]]
    %v190 = vstv %s189
    %v191 = vmul.f32 %v190, %v74
    %v192 = vmul.f32 %v190, %v75
    %v193 = vmul.f32 %v190, %v76
    %v194 = vmul.f32 %v190, %v77
    %199 = vrot.lane.b32.xlu0 %v191, 126
    %v200 = vpop.permute.xlu0 %199
    %201 = vrot.lane.b32.xlu0 %v192, 126
    %v202 = vpop.permute.xlu0 %201
    %203 = vrot.lane.b32.xlu0 %v193, 126
    %v204 = vpop.permute.xlu0 %203
    %205 = vrot.lane.b32.xlu0 %v194, 126
    %v206 = vpop.permute.xlu0 %205
    %v207 = vsel %vm132, %v200, %v202
    %v208 = vsel %vm132, %v202, %v204
    %v209 = vsel %vm132, %v204, %v206
    %v214 = vadd.f32 %v185, %v207
    %v215 = vadd.f32 %v186, %v208
    %v216 = vadd.f32 %v187, %v209
    %v217 = vadd.f32 %v188, %v206
    %s218 = sld [smem:[#allocation4 + $0x1]]
    %v219 = vstv %s218
    %v220 = vadd.f32 %v214, %v219
    %v221 = vadd.f32 %v215, %v219
    %v222 = vadd.f32 %v216, %v219
    %v223 = vadd.f32 %v217, %v219
    %v224 = vmax.f32 %v220, 0.0
    %v225 = vmax.f32 %v221, 0.0
    %v226 = vmax.f32 %v222, 0.0
    %v227 = vmax.f32 %v223, 0.0
    %232 = vrot.lane.b32.xlu0 %v150, 127
    %v233 = vpop.permute.xlu0 %232
    %234 = vrot.lane.b32.xlu0 %v151, 127
    %v235 = vpop.permute.xlu0 %234
    %236 = vrot.lane.b32.xlu0 %v152, 127
    %v237 = vpop.permute.xlu0 %236
    %238 = vrot.lane.b32.xlu0 %v153, 127
    %v239 = vpop.permute.xlu0 %238
    %v240 = vsel %vm102, %v233, %v235
    %v241 = vsel %vm102, %v235, %v237
    %v242 = vsel %vm102, %v237, %v239
    %v247 = vmax.f32 %v150, %v240
    %v248 = vmax.f32 %v151, %v241
    %v249 = vmax.f32 %v152, %v242
    %v250 = vmax.f32 %v153, %v239
    %251 = vrot.lane.b32.xlu0 %v150, 126
    %v252 = vpop.permute.xlu0 %251
    %253 = vrot.lane.b32.xlu0 %v151, 126
    %v254 = vpop.permute.xlu0 %253
    %255 = vrot.lane.b32.xlu0 %v152, 126
    %v256 = vpop.permute.xlu0 %255
    %257 = vrot.lane.b32.xlu0 %v153, 126
    %v258 = vpop.permute.xlu0 %257
    %v259 = vsel %vm132, %v252, %v254
    %v260 = vsel %vm132, %v254, %v256
    %v261 = vsel %vm132, %v256, %v258
    %v266 = vmax.f32 %v247, %v259
    %v267 = vmax.f32 %v248, %v260
    %v268 = vmax.f32 %v249, %v261
    %v269 = vmax.f32 %v250, %v258
    %274 = vrot.lane.b32.xlu0 %v224, 127
    %v275 = vpop.permute.xlu0 %274
    %276 = vrot.lane.b32.xlu0 %v225, 127
    %v277 = vpop.permute.xlu0 %276
    %278 = vrot.lane.b32.xlu0 %v226, 127
    %v279 = vpop.permute.xlu0 %278
    %280 = vrot.lane.b32.xlu0 %v227, 127
    %v281 = vpop.permute.xlu0 %280
    %v282 = vsel %vm102, %v275, %v277
    %v283 = vsel %vm102, %v277, %v279
    %v284 = vsel %vm102, %v279, %v281
    %v289 = vmax.f32 %v224, %v282
    %v290 = vmax.f32 %v225, %v283
    %v291 = vmax.f32 %v226, %v284
    %v292 = vmax.f32 %v227, %v281
    %293 = vrot.lane.b32.xlu0 %v224, 126
    %v294 = vpop.permute.xlu0 %293
    %295 = vrot.lane.b32.xlu0 %v225, 126
    %v296 = vpop.permute.xlu0 %295
    %297 = vrot.lane.b32.xlu0 %v226, 126
    %v298 = vpop.permute.xlu0 %297
    %299 = vrot.lane.b32.xlu0 %v227, 126
    %v300 = vpop.permute.xlu0 %299
    %v301 = vsel %vm132, %v294, %v296
    %v302 = vsel %vm132, %v296, %v298
    %v303 = vsel %vm132, %v298, %v300
    %v308 = vmax.f32 %v289, %v301
    %v309 = vmax.f32 %v290, %v302
    %v310 = vmax.f32 %v291, %v303
    %v311 = vmax.f32 %v292, %v300
    %s312 = sld [smem:[#allocation6]]
    %v313 = vstv %s312
    %v314 = vmul.f32 %v313, %v266
    %v315 = vmul.f32 %v313, %v267
    %v316 = vmul.f32 %v313, %v268
    %v317 = vmul.f32 %v313, %v269
    %s318 = sld [smem:[#allocation6 + $0x1]]
    %v319 = vstv %s318
    %v320 = vmul.f32 %v319, %v308
    %v321 = vmul.f32 %v319, %v309
    %v322 = vmul.f32 %v319, %v310
    %v323 = vmul.f32 %v319, %v311
    %v324 = vadd.f32 %v314, %v320
    %v325 = vadd.f32 %v315, %v321
    %v326 = vadd.f32 %v316, %v322
    %v327 = vadd.f32 %v317, %v323
    %s328 = sld [smem:[#allocation7]]
    %v329 = vstv %s328
    %v330 = vadd.f32 %v324, %v329
    %v331 = vadd.f32 %v325, %v329
    %v332 = vadd.f32 %v326, %v329
    %v333 = vadd.f32 %v327, %v329
    %v334 = vmax.f32 %v330, 0.0
    %v335 = vmax.f32 %v331, 0.0
    %v336 = vmax.f32 %v332, 0.0
    %v337 = vmax.f32 %v333, 0.0
    %s338 = sld [smem:[#allocation6 + $0x80]]
    %v339 = vstv %s338
    %v340 = vmul.f32 %v339, %v266
    %v341 = vmul.f32 %v339, %v267
    %v342 = vmul.f32 %v339, %v268
    %v343 = vmul.f32 %v339, %v269
    %s344 = sld [smem:[#allocation6 + $0x81]]
    %v345 = vstv %s344
    %v346 = vmul.f32 %v345, %v308
    %v347 = vmul.f32 %v345, %v309
    %v348 = vmul.f32 %v345, %v310
    %v349 = vmul.f32 %v345, %v311
    %v350 = vadd.f32 %v340, %v346
    %v351 = vadd.f32 %v341, %v347
    %v352 = vadd.f32 %v342, %v348
    %v353 = vadd.f32 %v343, %v349
    %s354 = sld [smem:[#allocation7 + $0x1]]
    %v355 = vstv %s354
    %v356 = vadd.f32 %v350, %v355
    %v357 = vadd.f32 %v351, %v355
    %v358 = vadd.f32 %v352, %v355
    %v359 = vadd.f32 %v353, %v355
    %v360 = vmax.f32 %v356, 0.0
    %v361 = vmax.f32 %v357, 0.0
    %v362 = vmax.f32 %v358, 0.0
    %v363 = vmax.f32 %v359, 0.0
    %s364 = sld [smem:[#allocation6 + $0x100]]
    %v365 = vstv %s364
    %v366 = vmul.f32 %v365, %v266
    %v367 = vmul.f32 %v365, %v267
    %v368 = vmul.f32 %v365, %v268
    %v369 = vmul.f32 %v365, %v269
    %s370 = sld [smem:[#allocation6 + $0x101]]
    %v371 = vstv %s370
    %v372 = vmul.f32 %v371, %v308
    %v373 = vmul.f32 %v371, %v309
    %v374 = vmul.f32 %v371, %v310
    %v375 = vmul.f32 %v371, %v311
    %v376 = vadd.f32 %v366, %v372
    %v377 = vadd.f32 %v367, %v373
    %v378 = vadd.f32 %v368, %v374
    %v379 = vadd.f32 %v369, %v375
    %s380 = sld [smem:[#allocation7 + $0x2]]
    %v381 = vstv %s380
    %v382 = vadd.f32 %v376, %v381
    %v383 = vadd.f32 %v377, %v381
    %v384 = vadd.f32 %v378, %v381
    %v385 = vadd.f32 %v379, %v381
    %v386 = vmax.f32 %v382, 0.0
    %v387 = vmax.f32 %v383, 0.0
    %v388 = vmax.f32 %v384, 0.0
    %v389 = vmax.f32 %v385, 0.0
    %s390 = sld [smem:[#allocation6 + $0x180]]
    %v391 = vstv %s390
    %v392 = vmul.f32 %v391, %v266
    %v393 = vmul.f32 %v391, %v267
    %v394 = vmul.f32 %v391, %v268
    %v395 = vmul.f32 %v391, %v269
    %s396 = sld [smem:[#allocation6 + $0x181]]
    %v397 = vstv %s396
    %v398 = vmul.f32 %v397, %v308
    %v399 = vmul.f32 %v397, %v309
    %v400 = vmul.f32 %v397, %v310
    %v401 = vmul.f32 %v397, %v311
    %v402 = vadd.f32 %v392, %v398
    %v403 = vadd.f32 %v393, %v399
    %v404 = vadd.f32 %v394, %v400
    %v405 = vadd.f32 %v395, %v401
    %s406 = sld [smem:[#allocation7 + $0x3]]
    %v407 = vstv %s406
    %v408 = vadd.f32 %v402, %v407
    %v409 = vadd.f32 %v403, %v407
    %v410 = vadd.f32 %v404, %v407
    %v411 = vadd.f32 %v405, %v407
    %v412 = vmax.f32 %v408, 0.0
    %v413 = vmax.f32 %v409, 0.0
    %v414 = vmax.f32 %v410, 0.0
    %v415 = vmax.f32 %v411, 0.0
    %v416 = vld [vmem:[%s5] sm:$0xff]
    %v417 = vld [vmem:[%s5 + $0x8] sm:$0xff]
    %v418 = vld [vmem:[%s5 + $0x10] sm:$0xff]
    %v419 = vld [vmem:[%s5 + $0x18] sm:$0xff]
    %v420 = vld [vmem:[%s5 + $0x20] sm:$0xff]
    %v421 = vld [vmem:[%s5 + $0x28] sm:$0xff]
    %v422 = vld [vmem:[%s5 + $0x30] sm:$0xff]
    %v423 = vld [vmem:[%s5 + $0x38] sm:$0xff]
    %v424 = vld [vmem:[%s5 + $0x40] sm:$0xff]
    %v425 = vld [vmem:[%s5 + $0x48] sm:$0xff]
    %v426 = vld [vmem:[%s5 + $0x50] sm:$0xff]
    %v427 = vld [vmem:[%s5 + $0x58] sm:$0xff]
    %v428 = vld [vmem:[%s5 + $0x60] sm:$0xff]
    %v429 = vld [vmem:[%s5 + $0x68] sm:$0xff]
    %v430 = vld [vmem:[%s5 + $0x70] sm:$0xff]
    %v431 = vld [vmem:[%s5 + $0x78] sm:$0xff]
    %v432 = vld [vmem:[%s5 + $0x80] sm:$0xff]
    %v433 = vld [vmem:[%s5 + $0x88] sm:$0xff]
    %v434 = vld [vmem:[%s5 + $0x90] sm:$0xff]
    %v435 = vld [vmem:[%s5 + $0x98] sm:$0xff]
    %v436 = vld [vmem:[%s5 + $0xa0] sm:$0xff]
    %v437 = vld [vmem:[%s5 + $0xa8] sm:$0xff]
    %v438 = vld [vmem:[%s5 + $0xb0] sm:$0xff]
    %v439 = vld [vmem:[%s5 + $0xb8] sm:$0xff]
    %v440 = vld [vmem:[%s5 + $0xc0] sm:$0xff]
    %v441 = vld [vmem:[%s5 + $0xc8] sm:$0xff]
    %v442 = vld [vmem:[%s5 + $0xd0] sm:$0xff]
    %v443 = vld [vmem:[%s5 + $0xd8] sm:$0xff]
    %v444 = vld [vmem:[%s5 + $0xe0] sm:$0xff]
    %v445 = vld [vmem:[%s5 + $0xe8] sm:$0xff]
    %v446 = vld [vmem:[%s5 + $0xf0] sm:$0xff]
    %v447 = vld [vmem:[%s5 + $0xf8] sm:$0xff]
    %v448 = vld [vmem:[%s5 + $0x100] sm:$0xff]
    %v449 = vld [vmem:[%s5 + $0x108] sm:$0xff]
    %v450 = vld [vmem:[%s5 + $0x110] sm:$0xff]
    %v451 = vld [vmem:[%s5 + $0x118] sm:$0xff]
    %v452 = vld [vmem:[%s5 + $0x120] sm:$0xff]
    %v453 = vld [vmem:[%s5 + $0x128] sm:$0xff]
    %v454 = vld [vmem:[%s5 + $0x130] sm:$0xff]
    %v455 = vld [vmem:[%s5 + $0x138] sm:$0xff]
    %v456 = vld [vmem:[%s5 + $0x140] sm:$0xff]
    %v457 = vld [vmem:[%s5 + $0x148] sm:$0xff]
    %v458 = vld [vmem:[%s5 + $0x150] sm:$0xff]
    %v459 = vld [vmem:[%s5 + $0x158] sm:$0xff]
    %v460 = vld [vmem:[%s5 + $0x160] sm:$0xff]
    %v461 = vld [vmem:[%s5 + $0x168] sm:$0xff]
    %v462 = vld [vmem:[%s5 + $0x170] sm:$0xff]
    %v463 = vld [vmem:[%s5 + $0x178] sm:$0xff]
    %v464 = vld [vmem:[%s5 + $0x180] sm:$0xff]
    %v465 = vld [vmem:[%s5 + $0x188] sm:$0xf]
    %s466 = scalar_lea.vmem %s5, 400
    %v467 = vld [vmem:[%s466] sm:$0xff]
    %v468 = vld [vmem:[%s466 + $0x8] sm:$0xff]
    %v469 = vld [vmem:[%s466 + $0x10] sm:$0xff]
    %v470 = vld [vmem:[%s466 + $0x18] sm:$0xff]
    %v471 = vld [vmem:[%s466 + $0x20] sm:$0xff]
    %v472 = vld [vmem:[%s466 + $0x28] sm:$0xff]
    %v473 = vld [vmem:[%s466 + $0x30] sm:$0xff]
    %v474 = vld [vmem:[%s466 + $0x38] sm:$0xff]
    %v475 = vld [vmem:[%s466 + $0x40] sm:$0xff]
    %v476 = vld [vmem:[%s466 + $0x48] sm:$0xff]
    %v477 = vld [vmem:[%s466 + $0x50] sm:$0xff]
    %v478 = vld [vmem:[%s466 + $0x58] sm:$0xff]
    %v479 = vld [vmem:[%s466 + $0x60] sm:$0xff]
    %v480 = vld [vmem:[%s466 + $0x68] sm:$0xff]
    %v481 = vld [vmem:[%s466 + $0x70] sm:$0xff]
    %v482 = vld [vmem:[%s466 + $0x78] sm:$0xff]
    %v483 = vld [vmem:[%s466 + $0x80] sm:$0xff]
    %v484 = vld [vmem:[%s466 + $0x88] sm:$0xff]
    %v485 = vld [vmem:[%s466 + $0x90] sm:$0xff]
    %v486 = vld [vmem:[%s466 + $0x98] sm:$0xff]
    %v487 = vld [vmem:[%s466 + $0xa0] sm:$0xff]
    %v488 = vld [vmem:[%s466 + $0xa8] sm:$0xff]
    %v489 = vld [vmem:[%s466 + $0xb0] sm:$0xff]
    %v490 = vld [vmem:[%s466 + $0xb8] sm:$0xff]
    %v491 = vld [vmem:[%s466 + $0xc0] sm:$0xff]
    %v492 = vld [vmem:[%s466 + $0xc8] sm:$0xff]
    %v493 = vld [vmem:[%s466 + $0xd0] sm:$0xff]
    %v494 = vld [vmem:[%s466 + $0xd8] sm:$0xff]
    %v495 = vld [vmem:[%s466 + $0xe0] sm:$0xff]
    %v496 = vld [vmem:[%s466 + $0xe8] sm:$0xff]
    %v497 = vld [vmem:[%s466 + $0xf0] sm:$0xff]
    %v498 = vld [vmem:[%s466 + $0xf8] sm:$0xff]
    %v499 = vld [vmem:[%s466 + $0x100] sm:$0xff]
    %v500 = vld [vmem:[%s466 + $0x108] sm:$0xff]
    %v501 = vld [vmem:[%s466 + $0x110] sm:$0xff]
    %v502 = vld [vmem:[%s466 + $0x118] sm:$0xff]
    %v503 = vld [vmem:[%s466 + $0x120] sm:$0xff]
    %v504 = vld [vmem:[%s466 + $0x128] sm:$0xff]
    %v505 = vld [vmem:[%s466 + $0x130] sm:$0xff]
    %v506 = vld [vmem:[%s466 + $0x138] sm:$0xff]
    %v507 = vld [vmem:[%s466 + $0x140] sm:$0xff]
    %v508 = vld [vmem:[%s466 + $0x148] sm:$0xff]
    %v509 = vld [vmem:[%s466 + $0x150] sm:$0xff]
    %v510 = vld [vmem:[%s466 + $0x158] sm:$0xff]
    %v511 = vld [vmem:[%s466 + $0x160] sm:$0xff]
    %v512 = vld [vmem:[%s466 + $0x168] sm:$0xff]
    %v513 = vld [vmem:[%s466 + $0x170] sm:$0xff]
    %v514 = vld [vmem:[%s466 + $0x178] sm:$0xff]
    %v515 = vld [vmem:[%s466 + $0x180] sm:$0xff]
    %v516 = vld [vmem:[%s466 + $0x188] sm:$0xf]
    %vm517 = vcmask 97280
    %v519 = vsel %vm517, %v363, 0
    %vm521 = vcmask 1043456
    %v523 = vsel %vm521, %v516, 0
    %v525 = vand.u32 %v482, 4294901760
    %526 = vmatpush.msra.mxu0 %v525
    %v527 = vand.u32 %v481, 4294901760
    %528 = vmatpush.msra.mxu0 %v527
    %v529 = vand.u32 %v480, 4294901760
    %530 = vmatpush.msra.mxu0 %v529
    %v531 = vand.u32 %v479, 4294901760
    %532 = vmatpush.msra.mxu0 %v531
    %v533 = vand.u32 %v478, 4294901760
    %534 = vmatpush.msra.mxu0 %v533
    %v535 = vand.u32 %v477, 4294901760
    %536 = vmatpush.msra.mxu0 %v535
    %v537 = vand.u32 %v476, 4294901760
    %538 = vmatpush.msra.mxu0 %v537
    %v539 = vand.u32 %v475, 4294901760
    %540 = vmatpush.msra.mxu0 %v539
    %v541 = vand.u32 %v474, 4294901760
    %542 = vmatpush.msra.mxu0 %v541
    %v543 = vand.u32 %v473, 4294901760
    %544 = vmatpush.msra.mxu0 %v543
    %v545 = vand.u32 %v472, 4294901760
    %546 = vmatpush.msra.mxu0 %v545
    %v547 = vand.u32 %v471, 4294901760
    %548 = vmatpush.msra.mxu0 %v547
    %v549 = vand.u32 %v470, 4294901760
    %550 = vmatpush.msra.mxu0 %v549
    %v551 = vand.u32 %v469, 4294901760
    %552 = vmatpush.msra.mxu0 %v551
    %v553 = vand.u32 %v468, 4294901760
    %554 = vmatpush.msra.mxu0 %v553
    %v555 = vand.u32 %v467, 4294901760
    %556 = vmatpush.msra.mxu0 %v555
    %v557 = vand.u32 %v360, 4294901760
    %v558 = vsub.f32 %v360, %v557
    %v559 = vand.u32 %v558, 4294901760
    %v560 = vsub.f32 %v558, %v559
    %v561 = vand.u32 %v560, 4294901760
    %562 = vmatmul.f32.gmra.mxu0 %v561
    %v563 = vpop.f32.mrf.mxu0
    %v564 = vadd.f32 0.0, %v563
    %565 = vdwg.mxu0
    %v566 = vand.u32 %v482, 4294901760
    %v567 = vsub.f32 %v482, %v566
    %v568 = vand.u32 %v567, 4294901760
    %v569 = vsub.f32 %v567, %v568
    %v570 = vand.u32 %v569, 4294901760
    %571 = vmatpush.msra.mxu0 %v570
    %v572 = vand.u32 %v481, 4294901760
    %v573 = vsub.f32 %v481, %v572
    %v574 = vand.u32 %v573, 4294901760
    %v575 = vsub.f32 %v573, %v574
    %v576 = vand.u32 %v575, 4294901760
    %577 = vmatpush.msra.mxu0 %v576
    %v578 = vand.u32 %v480, 4294901760
    %v579 = vsub.f32 %v480, %v578
    %v580 = vand.u32 %v579, 4294901760
    %v581 = vsub.f32 %v579, %v580
    %v582 = vand.u32 %v581, 4294901760
    %583 = vmatpush.msra.mxu0 %v582
    %v584 = vand.u32 %v479, 4294901760
    %v585 = vsub.f32 %v479, %v584
    %v586 = vand.u32 %v585, 4294901760
    %v587 = vsub.f32 %v585, %v586
    %v588 = vand.u32 %v587, 4294901760
    %589 = vmatpush.msra.mxu0 %v588
    %v590 = vand.u32 %v478, 4294901760
    %v591 = vsub.f32 %v478, %v590
    %v592 = vand.u32 %v591, 4294901760
    %v593 = vsub.f32 %v591, %v592
    %v594 = vand.u32 %v593, 4294901760
    %595 = vmatpush.msra.mxu0 %v594
    %v596 = vand.u32 %v477, 4294901760
    %v597 = vsub.f32 %v477, %v596
    %v598 = vand.u32 %v597, 4294901760
    %v599 = vsub.f32 %v597, %v598
    %v600 = vand.u32 %v599, 4294901760
    %601 = vmatpush.msra.mxu0 %v600
    %v602 = vand.u32 %v476, 4294901760
    %v603 = vsub.f32 %v476, %v602
    %v604 = vand.u32 %v603, 4294901760
    %v605 = vsub.f32 %v603, %v604
    %v606 = vand.u32 %v605, 4294901760
    %607 = vmatpush.msra.mxu0 %v606
    %v608 = vand.u32 %v475, 4294901760
    %v609 = vsub.f32 %v475, %v608
    %v610 = vand.u32 %v609, 4294901760
    %v611 = vsub.f32 %v609, %v610
    %v612 = vand.u32 %v611, 4294901760
    %613 = vmatpush.msra.mxu0 %v612
    %v614 = vand.u32 %v474, 4294901760
    %v615 = vsub.f32 %v474, %v614
    %v616 = vand.u32 %v615, 4294901760
    %v617 = vsub.f32 %v615, %v616
    %v618 = vand.u32 %v617, 4294901760
    %619 = vmatpush.msra.mxu0 %v618
    %v620 = vand.u32 %v473, 4294901760
    %v621 = vsub.f32 %v473, %v620
    %v622 = vand.u32 %v621, 4294901760
    %v623 = vsub.f32 %v621, %v622
    %v624 = vand.u32 %v623, 4294901760
    %625 = vmatpush.msra.mxu0 %v624
    %v626 = vand.u32 %v472, 4294901760
    %v627 = vsub.f32 %v472, %v626
    %v628 = vand.u32 %v627, 4294901760
    %v629 = vsub.f32 %v627, %v628
    %v630 = vand.u32 %v629, 4294901760
    %631 = vmatpush.msra.mxu0 %v630
    %v632 = vand.u32 %v471, 4294901760
    %v633 = vsub.f32 %v471, %v632
    %v634 = vand.u32 %v633, 4294901760
    %v635 = vsub.f32 %v633, %v634
    %v636 = vand.u32 %v635, 4294901760
    %637 = vmatpush.msra.mxu0 %v636
    %v638 = vand.u32 %v470, 4294901760
    %v639 = vsub.f32 %v470, %v638
    %v640 = vand.u32 %v639, 4294901760
    %v641 = vsub.f32 %v639, %v640
    %v642 = vand.u32 %v641, 4294901760
    %643 = vmatpush.msra.mxu0 %v642
    %v644 = vand.u32 %v469, 4294901760
    %v645 = vsub.f32 %v469, %v644
    %v646 = vand.u32 %v645, 4294901760
    %v647 = vsub.f32 %v645, %v646
    %v648 = vand.u32 %v647, 4294901760
    %649 = vmatpush.msra.mxu0 %v648
    %v650 = vand.u32 %v468, 4294901760
    %v651 = vsub.f32 %v468, %v650
    %v652 = vand.u32 %v651, 4294901760
    %v653 = vsub.f32 %v651, %v652
    %v654 = vand.u32 %v653, 4294901760
    %655 = vmatpush.msra.mxu0 %v654
    %v656 = vand.u32 %v467, 4294901760
    %v657 = vsub.f32 %v467, %v656
    %v658 = vand.u32 %v657, 4294901760
    %v659 = vsub.f32 %v657, %v658
    %v660 = vand.u32 %v659, 4294901760
    %661 = vmatpush.msra.mxu0 %v660
    %v662 = vand.u32 %v360, 4294901760
    %663 = vmatmul.f32.gmra.mxu0 %v662
    %v664 = vpop.f32.mrf.mxu0
    %v665 = vadd.f32 %v564, %v664
    %666 = vdwg.mxu0
    %v667 = vand.u32 %v482, 4294901760
    %v668 = vsub.f32 %v482, %v667
    %669 = vmatpush.msra.mxu0 %v668
    %v670 = vand.u32 %v481, 4294901760
    %v671 = vsub.f32 %v481, %v670
    %672 = vmatpush.msra.mxu0 %v671
    %v673 = vand.u32 %v480, 4294901760
    %v674 = vsub.f32 %v480, %v673
    %675 = vmatpush.msra.mxu0 %v674
    %v676 = vand.u32 %v479, 4294901760
    %v677 = vsub.f32 %v479, %v676
    %678 = vmatpush.msra.mxu0 %v677
    %v679 = vand.u32 %v478, 4294901760
    %v680 = vsub.f32 %v478, %v679
    %681 = vmatpush.msra.mxu0 %v680
    %v682 = vand.u32 %v477, 4294901760
    %v683 = vsub.f32 %v477, %v682
    %684 = vmatpush.msra.mxu0 %v683
    %v685 = vand.u32 %v476, 4294901760
    %v686 = vsub.f32 %v476, %v685
    %687 = vmatpush.msra.mxu0 %v686
    %v688 = vand.u32 %v475, 4294901760
    %v689 = vsub.f32 %v475, %v688
    %690 = vmatpush.msra.mxu0 %v689
    %v691 = vand.u32 %v474, 4294901760
    %v692 = vsub.f32 %v474, %v691
    %693 = vmatpush.msra.mxu0 %v692
    %v694 = vand.u32 %v473, 4294901760
    %v695 = vsub.f32 %v473, %v694
    %696 = vmatpush.msra.mxu0 %v695
    %v697 = vand.u32 %v472, 4294901760
    %v698 = vsub.f32 %v472, %v697
    %699 = vmatpush.msra.mxu0 %v698
    %v700 = vand.u32 %v471, 4294901760
    %v701 = vsub.f32 %v471, %v700
    %702 = vmatpush.msra.mxu0 %v701
    %v703 = vand.u32 %v470, 4294901760
    %v704 = vsub.f32 %v470, %v703
    %705 = vmatpush.msra.mxu0 %v704
    %v706 = vand.u32 %v469, 4294901760
    %v707 = vsub.f32 %v469, %v706
    %708 = vmatpush.msra.mxu0 %v707
    %v709 = vand.u32 %v468, 4294901760
    %v710 = vsub.f32 %v468, %v709
    %711 = vmatpush.msra.mxu0 %v710
    %v712 = vand.u32 %v467, 4294901760
    %v713 = vsub.f32 %v467, %v712
    %714 = vmatpush.msra.mxu0 %v713
    %v715 = vand.u32 %v360, 4294901760
    %v716 = vsub.f32 %v360, %v715
    %717 = vmatmul.f32.gmra.mxu0 %v716
    %v718 = vpop.f32.mrf.mxu0
    %v719 = vadd.f32 %v665, %v718
    %720 = vdwg.mxu0
    %v721 = vand.u32 %v482, 4294901760
    %722 = vmatpush.msra.mxu0 %v721
    %v723 = vand.u32 %v481, 4294901760
    %724 = vmatpush.msra.mxu0 %v723
    %v725 = vand.u32 %v480, 4294901760
    %726 = vmatpush.msra.mxu0 %v725
    %v727 = vand.u32 %v479, 4294901760
    %728 = vmatpush.msra.mxu0 %v727
    %v729 = vand.u32 %v478, 4294901760
    %730 = vmatpush.msra.mxu0 %v729
    %v731 = vand.u32 %v477, 4294901760
    %732 = vmatpush.msra.mxu0 %v731
    %v733 = vand.u32 %v476, 4294901760
    %734 = vmatpush.msra.mxu0 %v733
    %v735 = vand.u32 %v475, 4294901760
    %736 = vmatpush.msra.mxu0 %v735
    %v737 = vand.u32 %v474, 4294901760
    %738 = vmatpush.msra.mxu0 %v737
    %v739 = vand.u32 %v473, 4294901760
    %740 = vmatpush.msra.mxu0 %v739
    %v741 = vand.u32 %v472, 4294901760
    %742 = vmatpush.msra.mxu0 %v741
    %v743 = vand.u32 %v471, 4294901760
    %744 = vmatpush.msra.mxu0 %v743
    %v745 = vand.u32 %v470, 4294901760
    %746 = vmatpush.msra.mxu0 %v745
    %v747 = vand.u32 %v469, 4294901760
    %748 = vmatpush.msra.mxu0 %v747
    %v749 = vand.u32 %v468, 4294901760
    %750 = vmatpush.msra.mxu0 %v749
    %v751 = vand.u32 %v467, 4294901760
    %752 = vmatpush.msra.mxu0 %v751
    %v753 = vand.u32 %v360, 4294901760
    %v754 = vsub.f32 %v360, %v753
    %v755 = vand.u32 %v754, 4294901760
    %756 = vmatmul.f32.gmra.mxu0 %v755
    %v757 = vpop.f32.mrf.mxu0
    %v758 = vadd.f32 %v719, %v757
    %759 = vdwg.mxu0
    %v760 = vand.u32 %v482, 4294901760
    %v761 = vsub.f32 %v482, %v760
    %v762 = vand.u32 %v761, 4294901760
    %763 = vmatpush.msra.mxu0 %v762
    %v764 = vand.u32 %v481, 4294901760
    %v765 = vsub.f32 %v481, %v764
    %v766 = vand.u32 %v765, 4294901760
    %767 = vmatpush.msra.mxu0 %v766
    %v768 = vand.u32 %v480, 4294901760
    %v769 = vsub.f32 %v480, %v768
    %v770 = vand.u32 %v769, 4294901760
    %771 = vmatpush.msra.mxu0 %v770
    %v772 = vand.u32 %v479, 4294901760
    %v773 = vsub.f32 %v479, %v772
    %v774 = vand.u32 %v773, 4294901760
    %775 = vmatpush.msra.mxu0 %v774
    %v776 = vand.u32 %v478, 4294901760
    %v777 = vsub.f32 %v478, %v776
    %v778 = vand.u32 %v777, 4294901760
    %779 = vmatpush.msra.mxu0 %v778
    %v780 = vand.u32 %v477, 4294901760
    %v781 = vsub.f32 %v477, %v780
    %v782 = vand.u32 %v781, 4294901760
    %783 = vmatpush.msra.mxu0 %v782
    %v784 = vand.u32 %v476, 4294901760
    %v785 = vsub.f32 %v476, %v784
    %v786 = vand.u32 %v785, 4294901760
    %787 = vmatpush.msra.mxu0 %v786
    %v788 = vand.u32 %v475, 4294901760
    %v789 = vsub.f32 %v475, %v788
    %v790 = vand.u32 %v789, 4294901760
    %791 = vmatpush.msra.mxu0 %v790
    %v792 = vand.u32 %v474, 4294901760
    %v793 = vsub.f32 %v474, %v792
    %v794 = vand.u32 %v793, 4294901760
    %795 = vmatpush.msra.mxu0 %v794
    %v796 = vand.u32 %v473, 4294901760
    %v797 = vsub.f32 %v473, %v796
    %v798 = vand.u32 %v797, 4294901760
    %799 = vmatpush.msra.mxu0 %v798
    %v800 = vand.u32 %v472, 4294901760
    %v801 = vsub.f32 %v472, %v800
    %v802 = vand.u32 %v801, 4294901760
    %803 = vmatpush.msra.mxu0 %v802
    %v804 = vand.u32 %v471, 4294901760
    %v805 = vsub.f32 %v471, %v804
    %v806 = vand.u32 %v805, 4294901760
    %807 = vmatpush.msra.mxu0 %v806
    %v808 = vand.u32 %v470, 4294901760
    %v809 = vsub.f32 %v470, %v808
    %v810 = vand.u32 %v809, 4294901760
    %811 = vmatpush.msra.mxu0 %v810
    %v812 = vand.u32 %v469, 4294901760
    %v813 = vsub.f32 %v469, %v812
    %v814 = vand.u32 %v813, 4294901760
    %815 = vmatpush.msra.mxu0 %v814
    %v816 = vand.u32 %v468, 4294901760
    %v817 = vsub.f32 %v468, %v816
    %v818 = vand.u32 %v817, 4294901760
    %819 = vmatpush.msra.mxu0 %v818
    %v820 = vand.u32 %v467, 4294901760
    %v821 = vsub.f32 %v467, %v820
    %v822 = vand.u32 %v821, 4294901760
    %823 = vmatpush.msra.mxu0 %v822
    %v824 = vand.u32 %v360, 4294901760
    %825 = vmatmul.f32.gmra.mxu0 %v824
    %v826 = vpop.f32.mrf.mxu0
    %v827 = vadd.f32 %v758, %v826
    %828 = vdwg.mxu0
    %v829 = vand.u32 %v482, 4294901760
    %830 = vmatpush.msra.mxu0 %v829
    %v831 = vand.u32 %v481, 4294901760
    %832 = vmatpush.msra.mxu0 %v831
    %v833 = vand.u32 %v480, 4294901760
    %834 = vmatpush.msra.mxu0 %v833
    %v835 = vand.u32 %v479, 4294901760
    %836 = vmatpush.msra.mxu0 %v835
    %v837 = vand.u32 %v478, 4294901760
    %838 = vmatpush.msra.mxu0 %v837
    %v839 = vand.u32 %v477, 4294901760
    %840 = vmatpush.msra.mxu0 %v839
    %v841 = vand.u32 %v476, 4294901760
    %842 = vmatpush.msra.mxu0 %v841
    %v843 = vand.u32 %v475, 4294901760
    %844 = vmatpush.msra.mxu0 %v843
    %v845 = vand.u32 %v474, 4294901760
    %846 = vmatpush.msra.mxu0 %v845
    %v847 = vand.u32 %v473, 4294901760
    %848 = vmatpush.msra.mxu0 %v847
    %v849 = vand.u32 %v472, 4294901760
    %850 = vmatpush.msra.mxu0 %v849
    %v851 = vand.u32 %v471, 4294901760
    %852 = vmatpush.msra.mxu0 %v851
    %v853 = vand.u32 %v470, 4294901760
    %854 = vmatpush.msra.mxu0 %v853
    %v855 = vand.u32 %v469, 4294901760
    %856 = vmatpush.msra.mxu0 %v855
    %v857 = vand.u32 %v468, 4294901760
    %858 = vmatpush.msra.mxu0 %v857
    %v859 = vand.u32 %v467, 4294901760
    %860 = vmatpush.msra.mxu0 %v859
    %v861 = vand.u32 %v360, 4294901760
    %862 = vmatmul.f32.gmra.mxu0 %v861
    %v863 = vpop.f32.mrf.mxu0
    %v864 = vadd.f32 %v827, %v863
    %865 = vdwg.mxu0
    %v866 = vand.u32 %v498, 4294901760
    %867 = vmatpush.msra.mxu0 %v866
    %v868 = vand.u32 %v497, 4294901760
    %869 = vmatpush.msra.mxu0 %v868
    %v870 = vand.u32 %v496, 4294901760
    %871 = vmatpush.msra.mxu0 %v870
    %v872 = vand.u32 %v495, 4294901760
    %873 = vmatpush.msra.mxu0 %v872
    %v874 = vand.u32 %v494, 4294901760
    %875 = vmatpush.msra.mxu0 %v874
    %v876 = vand.u32 %v493, 4294901760
    %877 = vmatpush.msra.mxu0 %v876
    %v878 = vand.u32 %v492, 4294901760
    %879 = vmatpush.msra.mxu0 %v878
    %v880 = vand.u32 %v491, 4294901760
    %881 = vmatpush.msra.mxu0 %v880
    %v882 = vand.u32 %v490, 4294901760
    %883 = vmatpush.msra.mxu0 %v882
    %v884 = vand.u32 %v489, 4294901760
    %885 = vmatpush.msra.mxu0 %v884
    %v886 = vand.u32 %v488, 4294901760
    %887 = vmatpush.msra.mxu0 %v886
    %v888 = vand.u32 %v487, 4294901760
    %889 = vmatpush.msra.mxu0 %v888
    %v890 = vand.u32 %v486, 4294901760
    %891 = vmatpush.msra.mxu0 %v890
    %v892 = vand.u32 %v485, 4294901760
    %893 = vmatpush.msra.mxu0 %v892
    %v894 = vand.u32 %v484, 4294901760
    %895 = vmatpush.msra.mxu0 %v894
    %v896 = vand.u32 %v483, 4294901760
    %897 = vmatpush.msra.mxu0 %v896
    %v898 = vand.u32 %v361, 4294901760
    %v899 = vsub.f32 %v361, %v898
    %v900 = vand.u32 %v899, 4294901760
    %v901 = vsub.f32 %v899, %v900
    %v902 = vand.u32 %v901, 4294901760
    %903 = vmatmul.f32.gmra.mxu0 %v902
    %v904 = vpop.f32.mrf.mxu0
    %v905 = vadd.f32 %v864, %v904
    %906 = vdwg.mxu0
    %v907 = vand.u32 %v498, 4294901760
    %v908 = vsub.f32 %v498, %v907
    %v909 = vand.u32 %v908, 4294901760
    %v910 = vsub.f32 %v908, %v909
    %v911 = vand.u32 %v910, 4294901760
    %912 = vmatpush.msra.mxu0 %v911
    %v913 = vand.u32 %v497, 4294901760
    %v914 = vsub.f32 %v497, %v913
    %v915 = vand.u32 %v914, 4294901760
    %v916 = vsub.f32 %v914, %v915
    %v917 = vand.u32 %v916, 4294901760
    %918 = vmatpush.msra.mxu0 %v917
    %v919 = vand.u32 %v496, 4294901760
    %v920 = vsub.f32 %v496, %v919
    %v921 = vand.u32 %v920, 4294901760
    %v922 = vsub.f32 %v920, %v921
    %v923 = vand.u32 %v922, 4294901760
    %924 = vmatpush.msra.mxu0 %v923
    %v925 = vand.u32 %v495, 4294901760
    %v926 = vsub.f32 %v495, %v925
    %v927 = vand.u32 %v926, 4294901760
    %v928 = vsub.f32 %v926, %v927
    %v929 = vand.u32 %v928, 4294901760
    %930 = vmatpush.msra.mxu0 %v929
    %v931 = vand.u32 %v494, 4294901760
    %v932 = vsub.f32 %v494, %v931
    %v933 = vand.u32 %v932, 4294901760
    %v934 = vsub.f32 %v932, %v933
    %v935 = vand.u32 %v934, 4294901760
    %936 = vmatpush.msra.mxu0 %v935
    %v937 = vand.u32 %v493, 4294901760
    %v938 = vsub.f32 %v493, %v937
    %v939 = vand.u32 %v938, 4294901760
    %v940 = vsub.f32 %v938, %v939
    %v941 = vand.u32 %v940, 4294901760
    %942 = vmatpush.msra.mxu0 %v941
    %v943 = vand.u32 %v492, 4294901760
    %v944 = vsub.f32 %v492, %v943
    %v945 = vand.u32 %v944, 4294901760
    %v946 = vsub.f32 %v944, %v945
    %v947 = vand.u32 %v946, 4294901760
    %948 = vmatpush.msra.mxu0 %v947
    %v949 = vand.u32 %v491, 4294901760
    %v950 = vsub.f32 %v491, %v949
    %v951 = vand.u32 %v950, 4294901760
    %v952 = vsub.f32 %v950, %v951
    %v953 = vand.u32 %v952, 4294901760
    %954 = vmatpush.msra.mxu0 %v953
    %v955 = vand.u32 %v490, 4294901760
    %v956 = vsub.f32 %v490, %v955
    %v957 = vand.u32 %v956, 4294901760
    %v958 = vsub.f32 %v956, %v957
    %v959 = vand.u32 %v958, 4294901760
    %960 = vmatpush.msra.mxu0 %v959
    %v961 = vand.u32 %v489, 4294901760
    %v962 = vsub.f32 %v489, %v961
    %v963 = vand.u32 %v962, 4294901760
    %v964 = vsub.f32 %v962, %v963
    %v965 = vand.u32 %v964, 4294901760
    %966 = vmatpush.msra.mxu0 %v965
    %v967 = vand.u32 %v488, 4294901760
    %v968 = vsub.f32 %v488, %v967
    %v969 = vand.u32 %v968, 4294901760
    %v970 = vsub.f32 %v968, %v969
    %v971 = vand.u32 %v970, 4294901760
    %972 = vmatpush.msra.mxu0 %v971
    %v973 = vand.u32 %v487, 4294901760
    %v974 = vsub.f32 %v487, %v973
    %v975 = vand.u32 %v974, 4294901760
    %v976 = vsub.f32 %v974, %v975
    %v977 = vand.u32 %v976, 4294901760
    %978 = vmatpush.msra.mxu0 %v977
    %v979 = vand.u32 %v486, 4294901760
    %v980 = vsub.f32 %v486, %v979
    %v981 = vand.u32 %v980, 4294901760
    %v982 = vsub.f32 %v980, %v981
    %v983 = vand.u32 %v982, 4294901760
    %984 = vmatpush.msra.mxu0 %v983
    %v985 = vand.u32 %v485, 4294901760
    %v986 = vsub.f32 %v485, %v985
    %v987 = vand.u32 %v986, 4294901760
    %v988 = vsub.f32 %v986, %v987
    %v989 = vand.u32 %v988, 4294901760
    %990 = vmatpush.msra.mxu0 %v989
    %v991 = vand.u32 %v484, 4294901760
    %v992 = vsub.f32 %v484, %v991
    %v993 = vand.u32 %v992, 4294901760
    %v994 = vsub.f32 %v992, %v993
    %v995 = vand.u32 %v994, 4294901760
    %996 = vmatpush.msra.mxu0 %v995
    %v997 = vand.u32 %v483, 4294901760
    %v998 = vsub.f32 %v483, %v997
    %v999 = vand.u32 %v998, 4294901760
    %v1000 = vsub.f32 %v998, %v999
    %v1001 = vand.u32 %v1000, 4294901760
    %1002 = vmatpush.msra.mxu0 %v1001
    %v1003 = vand.u32 %v361, 4294901760
    %1004 = vmatmul.f32.gmra.mxu0 %v1003
    %v1005 = vpop.f32.mrf.mxu0
    %v1006 = vadd.f32 %v905, %v1005
    %1007 = vdwg.mxu0
    %v1008 = vand.u32 %v498, 4294901760
    %v1009 = vsub.f32 %v498, %v1008
    %1010 = vmatpush.msra.mxu0 %v1009
    %v1011 = vand.u32 %v497, 4294901760
    %v1012 = vsub.f32 %v497, %v1011
    %1013 = vmatpush.msra.mxu0 %v1012
    %v1014 = vand.u32 %v496, 4294901760
    %v1015 = vsub.f32 %v496, %v1014
    %1016 = vmatpush.msra.mxu0 %v1015
    %v1017 = vand.u32 %v495, 4294901760
    %v1018 = vsub.f32 %v495, %v1017
    %1019 = vmatpush.msra.mxu0 %v1018
    %v1020 = vand.u32 %v494, 4294901760
    %v1021 = vsub.f32 %v494, %v1020
    %1022 = vmatpush.msra.mxu0 %v1021
    %v1023 = vand.u32 %v493, 4294901760
    %v1024 = vsub.f32 %v493, %v1023
    %1025 = vmatpush.msra.mxu0 %v1024
    %v1026 = vand.u32 %v492, 4294901760
    %v1027 = vsub.f32 %v492, %v1026
    %1028 = vmatpush.msra.mxu0 %v1027
    %v1029 = vand.u32 %v491, 4294901760
    %v1030 = vsub.f32 %v491, %v1029
    %1031 = vmatpush.msra.mxu0 %v1030
    %v1032 = vand.u32 %v490, 4294901760
    %v1033 = vsub.f32 %v490, %v1032
    %1034 = vmatpush.msra.mxu0 %v1033
    %v1035 = vand.u32 %v489, 4294901760
    %v1036 = vsub.f32 %v489, %v1035
    %1037 = vmatpush.msra.mxu0 %v1036
    %v1038 = vand.u32 %v488, 4294901760
    %v1039 = vsub.f32 %v488, %v1038
    %1040 = vmatpush.msra.mxu0 %v1039
    %v1041 = vand.u32 %v487, 4294901760
    %v1042 = vsub.f32 %v487, %v1041
    %1043 = vmatpush.msra.mxu0 %v1042
    %v1044 = vand.u32 %v486, 4294901760
    %v1045 = vsub.f32 %v486, %v1044
    %1046 = vmatpush.msra.mxu0 %v1045
    %v1047 = vand.u32 %v485, 4294901760
    %v1048 = vsub.f32 %v485, %v1047
    %1049 = vmatpush.msra.mxu0 %v1048
    %v1050 = vand.u32 %v484, 4294901760
    %v1051 = vsub.f32 %v484, %v1050
    %1052 = vmatpush.msra.mxu0 %v1051
    %v1053 = vand.u32 %v483, 4294901760
    %v1054 = vsub.f32 %v483, %v1053
    %1055 = vmatpush.msra.mxu0 %v1054
    %v1056 = vand.u32 %v361, 4294901760
    %v1057 = vsub.f32 %v361, %v1056
    %1058 = vmatmul.f32.gmra.mxu0 %v1057
    %v1059 = vpop.f32.mrf.mxu0
    %v1060 = vadd.f32 %v1006, %v1059
    %1061 = vdwg.mxu0
    %v1062 = vand.u32 %v498, 4294901760
    %1063 = vmatpush.msra.mxu0 %v1062
    %v1064 = vand.u32 %v497, 4294901760
    %1065 = vmatpush.msra.mxu0 %v1064
    %v1066 = vand.u32 %v496, 4294901760
    %1067 = vmatpush.msra.mxu0 %v1066
    %v1068 = vand.u32 %v495, 4294901760
    %1069 = vmatpush.msra.mxu0 %v1068
    %v1070 = vand.u32 %v494, 4294901760
    %1071 = vmatpush.msra.mxu0 %v1070
    %v1072 = vand.u32 %v493, 4294901760
    %1073 = vmatpush.msra.mxu0 %v1072
    %v1074 = vand.u32 %v492, 4294901760
    %1075 = vmatpush.msra.mxu0 %v1074
    %v1076 = vand.u32 %v491, 4294901760
    %1077 = vmatpush.msra.mxu0 %v1076
    %v1078 = vand.u32 %v490, 4294901760
    %1079 = vmatpush.msra.mxu0 %v1078
    %v1080 = vand.u32 %v489, 4294901760
    %1081 = vmatpush.msra.mxu0 %v1080
    %v1082 = vand.u32 %v488, 4294901760
    %1083 = vmatpush.msra.mxu0 %v1082
    %v1084 = vand.u32 %v487, 4294901760
    %1085 = vmatpush.msra.mxu0 %v1084
    %v1086 = vand.u32 %v486, 4294901760
    %1087 = vmatpush.msra.mxu0 %v1086
    %v1088 = vand.u32 %v485, 4294901760
    %1089 = vmatpush.msra.mxu0 %v1088
    %v1090 = vand.u32 %v484, 4294901760
    %1091 = vmatpush.msra.mxu0 %v1090
    %v1092 = vand.u32 %v483, 4294901760
    %1093 = vmatpush.msra.mxu0 %v1092
    %v1094 = vand.u32 %v361, 4294901760
    %v1095 = vsub.f32 %v361, %v1094
    %v1096 = vand.u32 %v1095, 4294901760
    %1097 = vmatmul.f32.gmra.mxu0 %v1096
    %v1098 = vpop.f32.mrf.mxu0
    %v1099 = vadd.f32 %v1060, %v1098
    %1100 = vdwg.mxu0
    %v1101 = vand.u32 %v498, 4294901760
    %v1102 = vsub.f32 %v498, %v1101
    %v1103 = vand.u32 %v1102, 4294901760
    %1104 = vmatpush.msra.mxu0 %v1103
    %v1105 = vand.u32 %v497, 4294901760
    %v1106 = vsub.f32 %v497, %v1105
    %v1107 = vand.u32 %v1106, 4294901760
    %1108 = vmatpush.msra.mxu0 %v1107
    %v1109 = vand.u32 %v496, 4294901760
    %v1110 = vsub.f32 %v496, %v1109
    %v1111 = vand.u32 %v1110, 4294901760
    %1112 = vmatpush.msra.mxu0 %v1111
    %v1113 = vand.u32 %v495, 4294901760
    %v1114 = vsub.f32 %v495, %v1113
    %v1115 = vand.u32 %v1114, 4294901760
    %1116 = vmatpush.msra.mxu0 %v1115
    %v1117 = vand.u32 %v494, 4294901760
    %v1118 = vsub.f32 %v494, %v1117
    %v1119 = vand.u32 %v1118, 4294901760
    %1120 = vmatpush.msra.mxu0 %v1119
    %v1121 = vand.u32 %v493, 4294901760
    %v1122 = vsub.f32 %v493, %v1121
    %v1123 = vand.u32 %v1122, 4294901760
    %1124 = vmatpush.msra.mxu0 %v1123
    %v1125 = vand.u32 %v492, 4294901760
    %v1126 = vsub.f32 %v492, %v1125
    %v1127 = vand.u32 %v1126, 4294901760
    %1128 = vmatpush.msra.mxu0 %v1127
    %v1129 = vand.u32 %v491, 4294901760
    %v1130 = vsub.f32 %v491, %v1129
    %v1131 = vand.u32 %v1130, 4294901760
    %1132 = vmatpush.msra.mxu0 %v1131
    %v1133 = vand.u32 %v490, 4294901760
    %v1134 = vsub.f32 %v490, %v1133
    %v1135 = vand.u32 %v1134, 4294901760
    %1136 = vmatpush.msra.mxu0 %v1135
    %v1137 = vand.u32 %v489, 4294901760
    %v1138 = vsub.f32 %v489, %v1137
    %v1139 = vand.u32 %v1138, 4294901760
    %1140 = vmatpush.msra.mxu0 %v1139
    %v1141 = vand.u32 %v488, 4294901760
    %v1142 = vsub.f32 %v488, %v1141
    %v1143 = vand.u32 %v1142, 4294901760
    %1144 = vmatpush.msra.mxu0 %v1143
    %v1145 = vand.u32 %v487, 4294901760
    %v1146 = vsub.f32 %v487, %v1145
    %v1147 = vand.u32 %v1146, 4294901760
    %1148 = vmatpush.msra.mxu0 %v1147
    %v1149 = vand.u32 %v486, 4294901760
    %v1150 = vsub.f32 %v486, %v1149
    %v1151 = vand.u32 %v1150, 4294901760
    %1152 = vmatpush.msra.mxu0 %v1151
    %v1153 = vand.u32 %v485, 4294901760
    %v1154 = vsub.f32 %v485, %v1153
    %v1155 = vand.u32 %v1154, 4294901760
    %1156 = vmatpush.msra.mxu0 %v1155
    %v1157 = vand.u32 %v484, 4294901760
    %v1158 = vsub.f32 %v484, %v1157
    %v1159 = vand.u32 %v1158, 4294901760
    %1160 = vmatpush.msra.mxu0 %v1159
    %v1161 = vand.u32 %v483, 4294901760
    %v1162 = vsub.f32 %v483, %v1161
    %v1163 = vand.u32 %v1162, 4294901760
    %1164 = vmatpush.msra.mxu0 %v1163
    %v1165 = vand.u32 %v361, 4294901760
    %1166 = vmatmul.f32.gmra.mxu0 %v1165
    %v1167 = vpop.f32.mrf.mxu0
    %v1168 = vadd.f32 %v1099, %v1167
    %1169 = vdwg.mxu0
    %v1170 = vand.u32 %v498, 4294901760
    %1171 = vmatpush.msra.mxu0 %v1170
    %v1172 = vand.u32 %v497, 4294901760
    %1173 = vmatpush.msra.mxu0 %v1172
    %v1174 = vand.u32 %v496, 4294901760
    %1175 = vmatpush.msra.mxu0 %v1174
    %v1176 = vand.u32 %v495, 4294901760
    %1177 = vmatpush.msra.mxu0 %v1176
    %v1178 = vand.u32 %v494, 4294901760
    %1179 = vmatpush.msra.mxu0 %v1178
    %v1180 = vand.u32 %v493, 4294901760
    %1181 = vmatpush.msra.mxu0 %v1180
    %v1182 = vand.u32 %v492, 4294901760
    %1183 = vmatpush.msra.mxu0 %v1182
    %v1184 = vand.u32 %v491, 4294901760
    %1185 = vmatpush.msra.mxu0 %v1184
    %v1186 = vand.u32 %v490, 4294901760
    %1187 = vmatpush.msra.mxu0 %v1186
    %v1188 = vand.u32 %v489, 4294901760
    %1189 = vmatpush.msra.mxu0 %v1188
    %v1190 = vand.u32 %v488, 4294901760
    %1191 = vmatpush.msra.mxu0 %v1190
    %v1192 = vand.u32 %v487, 4294901760
    %1193 = vmatpush.msra.mxu0 %v1192
    %v1194 = vand.u32 %v486, 4294901760
    %1195 = vmatpush.msra.mxu0 %v1194
    %v1196 = vand.u32 %v485, 4294901760
    %1197 = vmatpush.msra.mxu0 %v1196
    %v1198 = vand.u32 %v484, 4294901760
    %1199 = vmatpush.msra.mxu0 %v1198
    %v1200 = vand.u32 %v483, 4294901760
    %1201 = vmatpush.msra.mxu0 %v1200
    %v1202 = vand.u32 %v361, 4294901760
    %1203 = vmatmul.f32.gmra.mxu0 %v1202
    %v1204 = vpop.f32.mrf.mxu0
    %v1205 = vadd.f32 %v1168, %v1204
    %1206 = vdwg.mxu0
    %v1207 = vand.u32 %v514, 4294901760
    %1208 = vmatpush.msra.mxu0 %v1207
    %v1209 = vand.u32 %v513, 4294901760
    %1210 = vmatpush.msra.mxu0 %v1209
    %v1211 = vand.u32 %v512, 4294901760
    %1212 = vmatpush.msra.mxu0 %v1211
    %v1213 = vand.u32 %v511, 4294901760
    %1214 = vmatpush.msra.mxu0 %v1213
    %v1215 = vand.u32 %v510, 4294901760
    %1216 = vmatpush.msra.mxu0 %v1215
    %v1217 = vand.u32 %v509, 4294901760
    %1218 = vmatpush.msra.mxu0 %v1217
    %v1219 = vand.u32 %v508, 4294901760
    %1220 = vmatpush.msra.mxu0 %v1219
    %v1221 = vand.u32 %v507, 4294901760
    %1222 = vmatpush.msra.mxu0 %v1221
    %v1223 = vand.u32 %v506, 4294901760
    %1224 = vmatpush.msra.mxu0 %v1223
    %v1225 = vand.u32 %v505, 4294901760
    %1226 = vmatpush.msra.mxu0 %v1225
    %v1227 = vand.u32 %v504, 4294901760
    %1228 = vmatpush.msra.mxu0 %v1227
    %v1229 = vand.u32 %v503, 4294901760
    %1230 = vmatpush.msra.mxu0 %v1229
    %v1231 = vand.u32 %v502, 4294901760
    %1232 = vmatpush.msra.mxu0 %v1231
    %v1233 = vand.u32 %v501, 4294901760
    %1234 = vmatpush.msra.mxu0 %v1233
    %v1235 = vand.u32 %v500, 4294901760
    %1236 = vmatpush.msra.mxu0 %v1235
    %v1237 = vand.u32 %v499, 4294901760
    %1238 = vmatpush.msra.mxu0 %v1237
    %v1239 = vand.u32 %v362, 4294901760
    %v1240 = vsub.f32 %v362, %v1239
    %v1241 = vand.u32 %v1240, 4294901760
    %v1242 = vsub.f32 %v1240, %v1241
    %v1243 = vand.u32 %v1242, 4294901760
    %1244 = vmatmul.f32.gmra.mxu0 %v1243
    %v1245 = vpop.f32.mrf.mxu0
    %v1246 = vadd.f32 %v1205, %v1245
    %1247 = vdwg.mxu0
    %v1248 = vand.u32 %v514, 4294901760
    %v1249 = vsub.f32 %v514, %v1248
    %v1250 = vand.u32 %v1249, 4294901760
    %v1251 = vsub.f32 %v1249, %v1250
    %v1252 = vand.u32 %v1251, 4294901760
    %1253 = vmatpush.msra.mxu0 %v1252
    %v1254 = vand.u32 %v513, 4294901760
    %v1255 = vsub.f32 %v513, %v1254
    %v1256 = vand.u32 %v1255, 4294901760
    %v1257 = vsub.f32 %v1255, %v1256
    %v1258 = vand.u32 %v1257, 4294901760
    %1259 = vmatpush.msra.mxu0 %v1258
    %v1260 = vand.u32 %v512, 4294901760
    %v1261 = vsub.f32 %v512, %v1260
    %v1262 = vand.u32 %v1261, 4294901760
    %v1263 = vsub.f32 %v1261, %v1262
    %v1264 = vand.u32 %v1263, 4294901760
    %1265 = vmatpush.msra.mxu0 %v1264
    %v1266 = vand.u32 %v511, 4294901760
    %v1267 = vsub.f32 %v511, %v1266
    %v1268 = vand.u32 %v1267, 4294901760
    %v1269 = vsub.f32 %v1267, %v1268
    %v1270 = vand.u32 %v1269, 4294901760
    %1271 = vmatpush.msra.mxu0 %v1270
    %v1272 = vand.u32 %v510, 4294901760
    %v1273 = vsub.f32 %v510, %v1272
    %v1274 = vand.u32 %v1273, 4294901760
    %v1275 = vsub.f32 %v1273, %v1274
    %v1276 = vand.u32 %v1275, 4294901760
    %1277 = vmatpush.msra.mxu0 %v1276
    %v1278 = vand.u32 %v509, 4294901760
    %v1279 = vsub.f32 %v509, %v1278
    %v1280 = vand.u32 %v1279, 4294901760
    %v1281 = vsub.f32 %v1279, %v1280
    %v1282 = vand.u32 %v1281, 4294901760
    %1283 = vmatpush.msra.mxu0 %v1282
    %v1284 = vand.u32 %v508, 4294901760
    %v1285 = vsub.f32 %v508, %v1284
    %v1286 = vand.u32 %v1285, 4294901760
    %v1287 = vsub.f32 %v1285, %v1286
    %v1288 = vand.u32 %v1287, 4294901760
    %1289 = vmatpush.msra.mxu0 %v1288
    %v1290 = vand.u32 %v507, 4294901760
    %v1291 = vsub.f32 %v507, %v1290
    %v1292 = vand.u32 %v1291, 4294901760
    %v1293 = vsub.f32 %v1291, %v1292
    %v1294 = vand.u32 %v1293, 4294901760
    %1295 = vmatpush.msra.mxu0 %v1294
    %v1296 = vand.u32 %v506, 4294901760
    %v1297 = vsub.f32 %v506, %v1296
    %v1298 = vand.u32 %v1297, 4294901760
    %v1299 = vsub.f32 %v1297, %v1298
    %v1300 = vand.u32 %v1299, 4294901760
    %1301 = vmatpush.msra.mxu0 %v1300
    %v1302 = vand.u32 %v505, 4294901760
    %v1303 = vsub.f32 %v505, %v1302
    %v1304 = vand.u32 %v1303, 4294901760
    %v1305 = vsub.f32 %v1303, %v1304
    %v1306 = vand.u32 %v1305, 4294901760
    %1307 = vmatpush.msra.mxu0 %v1306
    %v1308 = vand.u32 %v504, 4294901760
    %v1309 = vsub.f32 %v504, %v1308
    %v1310 = vand.u32 %v1309, 4294901760
    %v1311 = vsub.f32 %v1309, %v1310
    %v1312 = vand.u32 %v1311, 4294901760
    %1313 = vmatpush.msra.mxu0 %v1312
    %v1314 = vand.u32 %v503, 4294901760
    %v1315 = vsub.f32 %v503, %v1314
    %v1316 = vand.u32 %v1315, 4294901760
    %v1317 = vsub.f32 %v1315, %v1316
    %v1318 = vand.u32 %v1317, 4294901760
    %1319 = vmatpush.msra.mxu0 %v1318
    %v1320 = vand.u32 %v502, 4294901760
    %v1321 = vsub.f32 %v502, %v1320
    %v1322 = vand.u32 %v1321, 4294901760
    %v1323 = vsub.f32 %v1321, %v1322
    %v1324 = vand.u32 %v1323, 4294901760
    %1325 = vmatpush.msra.mxu0 %v1324
    %v1326 = vand.u32 %v501, 4294901760
    %v1327 = vsub.f32 %v501, %v1326
    %v1328 = vand.u32 %v1327, 4294901760
    %v1329 = vsub.f32 %v1327, %v1328
    %v1330 = vand.u32 %v1329, 4294901760
    %1331 = vmatpush.msra.mxu0 %v1330
    %v1332 = vand.u32 %v500, 4294901760
    %v1333 = vsub.f32 %v500, %v1332
    %v1334 = vand.u32 %v1333, 4294901760
    %v1335 = vsub.f32 %v1333, %v1334
    %v1336 = vand.u32 %v1335, 4294901760
    %1337 = vmatpush.msra.mxu0 %v1336
    %v1338 = vand.u32 %v499, 4294901760
    %v1339 = vsub.f32 %v499, %v1338
    %v1340 = vand.u32 %v1339, 4294901760
    %v1341 = vsub.f32 %v1339, %v1340
    %v1342 = vand.u32 %v1341, 4294901760
    %1343 = vmatpush.msra.mxu0 %v1342
    %v1344 = vand.u32 %v362, 4294901760
    %1345 = vmatmul.f32.gmra.mxu0 %v1344
    %v1346 = vpop.f32.mrf.mxu0
    %v1347 = vadd.f32 %v1246, %v1346
    %1348 = vdwg.mxu0
    %v1349 = vand.u32 %v514, 4294901760
    %v1350 = vsub.f32 %v514, %v1349
    %1351 = vmatpush.msra.mxu0 %v1350
    %v1352 = vand.u32 %v513, 4294901760
    %v1353 = vsub.f32 %v513, %v1352
    %1354 = vmatpush.msra.mxu0 %v1353
    %v1355 = vand.u32 %v512, 4294901760
    %v1356 = vsub.f32 %v512, %v1355
    %1357 = vmatpush.msra.mxu0 %v1356
    %v1358 = vand.u32 %v511, 4294901760
    %v1359 = vsub.f32 %v511, %v1358
    %1360 = vmatpush.msra.mxu0 %v1359
    %v1361 = vand.u32 %v510, 4294901760
    %v1362 = vsub.f32 %v510, %v1361
    %1363 = vmatpush.msra.mxu0 %v1362
    %v1364 = vand.u32 %v509, 4294901760
    %v1365 = vsub.f32 %v509, %v1364
    %1366 = vmatpush.msra.mxu0 %v1365
    %v1367 = vand.u32 %v508, 4294901760
    %v1368 = vsub.f32 %v508, %v1367
    %1369 = vmatpush.msra.mxu0 %v1368
    %v1370 = vand.u32 %v507, 4294901760
    %v1371 = vsub.f32 %v507, %v1370
    %1372 = vmatpush.msra.mxu0 %v1371
    %v1373 = vand.u32 %v506, 4294901760
    %v1374 = vsub.f32 %v506, %v1373
    %1375 = vmatpush.msra.mxu0 %v1374
    %v1376 = vand.u32 %v505, 4294901760
    %v1377 = vsub.f32 %v505, %v1376
    %1378 = vmatpush.msra.mxu0 %v1377
    %v1379 = vand.u32 %v504, 4294901760
    %v1380 = vsub.f32 %v504, %v1379
    %1381 = vmatpush.msra.mxu0 %v1380
    %v1382 = vand.u32 %v503, 4294901760
    %v1383 = vsub.f32 %v503, %v1382
    %1384 = vmatpush.msra.mxu0 %v1383
    %v1385 = vand.u32 %v502, 4294901760
    %v1386 = vsub.f32 %v502, %v1385
    %1387 = vmatpush.msra.mxu0 %v1386
    %v1388 = vand.u32 %v501, 4294901760
    %v1389 = vsub.f32 %v501, %v1388
    %1390 = vmatpush.msra.mxu0 %v1389
    %v1391 = vand.u32 %v500, 4294901760
    %v1392 = vsub.f32 %v500, %v1391
    %1393 = vmatpush.msra.mxu0 %v1392
    %v1394 = vand.u32 %v499, 4294901760
    %v1395 = vsub.f32 %v499, %v1394
    %1396 = vmatpush.msra.mxu0 %v1395
    %v1397 = vand.u32 %v362, 4294901760
    %v1398 = vsub.f32 %v362, %v1397
    %1399 = vmatmul.f32.gmra.mxu0 %v1398
    %v1400 = vpop.f32.mrf.mxu0
    %v1401 = vadd.f32 %v1347, %v1400
    %1402 = vdwg.mxu0
    %v1403 = vand.u32 %v514, 4294901760
    %1404 = vmatpush.msra.mxu0 %v1403
    %v1405 = vand.u32 %v513, 4294901760
    %1406 = vmatpush.msra.mxu0 %v1405
    %v1407 = vand.u32 %v512, 4294901760
    %1408 = vmatpush.msra.mxu0 %v1407
    %v1409 = vand.u32 %v511, 4294901760
    %1410 = vmatpush.msra.mxu0 %v1409
    %v1411 = vand.u32 %v510, 4294901760
    %1412 = vmatpush.msra.mxu0 %v1411
    %v1413 = vand.u32 %v509, 4294901760
    %1414 = vmatpush.msra.mxu0 %v1413
    %v1415 = vand.u32 %v508, 4294901760
    %1416 = vmatpush.msra.mxu0 %v1415
    %v1417 = vand.u32 %v507, 4294901760
    %1418 = vmatpush.msra.mxu0 %v1417
    %v1419 = vand.u32 %v506, 4294901760
    %1420 = vmatpush.msra.mxu0 %v1419
    %v1421 = vand.u32 %v505, 4294901760
    %1422 = vmatpush.msra.mxu0 %v1421
    %v1423 = vand.u32 %v504, 4294901760
    %1424 = vmatpush.msra.mxu0 %v1423
    %v1425 = vand.u32 %v503, 4294901760
    %1426 = vmatpush.msra.mxu0 %v1425
    %v1427 = vand.u32 %v502, 4294901760
    %1428 = vmatpush.msra.mxu0 %v1427
    %v1429 = vand.u32 %v501, 4294901760
    %1430 = vmatpush.msra.mxu0 %v1429
    %v1431 = vand.u32 %v500, 4294901760
    %1432 = vmatpush.msra.mxu0 %v1431
    %v1433 = vand.u32 %v499, 4294901760
    %1434 = vmatpush.msra.mxu0 %v1433
    %v1435 = vand.u32 %v362, 4294901760
    %v1436 = vsub.f32 %v362, %v1435
    %v1437 = vand.u32 %v1436, 4294901760
    %1438 = vmatmul.f32.gmra.mxu0 %v1437
    %v1439 = vpop.f32.mrf.mxu0
    %v1440 = vadd.f32 %v1401, %v1439
    %1441 = vdwg.mxu0
    %v1442 = vand.u32 %v514, 4294901760
    %v1443 = vsub.f32 %v514, %v1442
    %v1444 = vand.u32 %v1443, 4294901760
    %1445 = vmatpush.msra.mxu0 %v1444
    %v1446 = vand.u32 %v513, 4294901760
    %v1447 = vsub.f32 %v513, %v1446
    %v1448 = vand.u32 %v1447, 4294901760
    %1449 = vmatpush.msra.mxu0 %v1448
    %v1450 = vand.u32 %v512, 4294901760
    %v1451 = vsub.f32 %v512, %v1450
    %v1452 = vand.u32 %v1451, 4294901760
    %1453 = vmatpush.msra.mxu0 %v1452
    %v1454 = vand.u32 %v511, 4294901760
    %v1455 = vsub.f32 %v511, %v1454
    %v1456 = vand.u32 %v1455, 4294901760
    %1457 = vmatpush.msra.mxu0 %v1456
    %v1458 = vand.u32 %v510, 4294901760
    %v1459 = vsub.f32 %v510, %v1458
    %v1460 = vand.u32 %v1459, 4294901760
    %1461 = vmatpush.msra.mxu0 %v1460
    %v1462 = vand.u32 %v509, 4294901760
    %v1463 = vsub.f32 %v509, %v1462
    %v1464 = vand.u32 %v1463, 4294901760
    %1465 = vmatpush.msra.mxu0 %v1464
    %v1466 = vand.u32 %v508, 4294901760
    %v1467 = vsub.f32 %v508, %v1466
    %v1468 = vand.u32 %v1467, 4294901760
    %1469 = vmatpush.msra.mxu0 %v1468
    %v1470 = vand.u32 %v507, 4294901760
    %v1471 = vsub.f32 %v507, %v1470
    %v1472 = vand.u32 %v1471, 4294901760
    %1473 = vmatpush.msra.mxu0 %v1472
    %v1474 = vand.u32 %v506, 4294901760
    %v1475 = vsub.f32 %v506, %v1474
    %v1476 = vand.u32 %v1475, 4294901760
    %1477 = vmatpush.msra.mxu0 %v1476
    %v1478 = vand.u32 %v505, 4294901760
    %v1479 = vsub.f32 %v505, %v1478
    %v1480 = vand.u32 %v1479, 4294901760
    %1481 = vmatpush.msra.mxu0 %v1480
    %v1482 = vand.u32 %v504, 4294901760
    %v1483 = vsub.f32 %v504, %v1482
    %v1484 = vand.u32 %v1483, 4294901760
    %1485 = vmatpush.msra.mxu0 %v1484
    %v1486 = vand.u32 %v503, 4294901760
    %v1487 = vsub.f32 %v503, %v1486
    %v1488 = vand.u32 %v1487, 4294901760
    %1489 = vmatpush.msra.mxu0 %v1488
    %v1490 = vand.u32 %v502, 4294901760
    %v1491 = vsub.f32 %v502, %v1490
    %v1492 = vand.u32 %v1491, 4294901760
    %1493 = vmatpush.msra.mxu0 %v1492
    %v1494 = vand.u32 %v501, 4294901760
    %v1495 = vsub.f32 %v501, %v1494
    %v1496 = vand.u32 %v1495, 4294901760
    %1497 = vmatpush.msra.mxu0 %v1496
    %v1498 = vand.u32 %v500, 4294901760
    %v1499 = vsub.f32 %v500, %v1498
    %v1500 = vand.u32 %v1499, 4294901760
    %1501 = vmatpush.msra.mxu0 %v1500
    %v1502 = vand.u32 %v499, 4294901760
    %v1503 = vsub.f32 %v499, %v1502
    %v1504 = vand.u32 %v1503, 4294901760
    %1505 = vmatpush.msra.mxu0 %v1504
    %v1506 = vand.u32 %v362, 4294901760
    %1507 = vmatmul.f32.gmra.mxu0 %v1506
    %v1508 = vpop.f32.mrf.mxu0
    %v1509 = vadd.f32 %v1440, %v1508
    %1510 = vdwg.mxu0
    %v1511 = vand.u32 %v514, 4294901760
    %1512 = vmatpush.msra.mxu0 %v1511
    %v1513 = vand.u32 %v513, 4294901760
    %1514 = vmatpush.msra.mxu0 %v1513
    %v1515 = vand.u32 %v512, 4294901760
    %1516 = vmatpush.msra.mxu0 %v1515
    %v1517 = vand.u32 %v511, 4294901760
    %1518 = vmatpush.msra.mxu0 %v1517
    %v1519 = vand.u32 %v510, 4294901760
    %1520 = vmatpush.msra.mxu0 %v1519
    %v1521 = vand.u32 %v509, 4294901760
    %1522 = vmatpush.msra.mxu0 %v1521
    %v1523 = vand.u32 %v508, 4294901760
    %1524 = vmatpush.msra.mxu0 %v1523
    %v1525 = vand.u32 %v507, 4294901760
    %1526 = vmatpush.msra.mxu0 %v1525
    %v1527 = vand.u32 %v506, 4294901760
    %1528 = vmatpush.msra.mxu0 %v1527
    %v1529 = vand.u32 %v505, 4294901760
    %1530 = vmatpush.msra.mxu0 %v1529
    %v1531 = vand.u32 %v504, 4294901760
    %1532 = vmatpush.msra.mxu0 %v1531
    %v1533 = vand.u32 %v503, 4294901760
    %1534 = vmatpush.msra.mxu0 %v1533
    %v1535 = vand.u32 %v502, 4294901760
    %1536 = vmatpush.msra.mxu0 %v1535
    %v1537 = vand.u32 %v501, 4294901760
    %1538 = vmatpush.msra.mxu0 %v1537
    %v1539 = vand.u32 %v500, 4294901760
    %1540 = vmatpush.msra.mxu0 %v1539
    %v1541 = vand.u32 %v499, 4294901760
    %1542 = vmatpush.msra.mxu0 %v1541
    %v1543 = vand.u32 %v362, 4294901760
    %1544 = vmatmul.f32.gmra.mxu0 %v1543
    %v1545 = vpop.f32.mrf.mxu0
    %v1546 = vadd.f32 %v1509, %v1545
    %1547 = vdwg.mxu0
    %1548 = vmatpush.msra.mxu0 0.0
    %1549 = vmatpush.msra.mxu0 0.0
    %1550 = vmatpush.msra.mxu0 0.0
    %1551 = vmatpush.msra.mxu0 0.0
    %1552 = vmatpush.msra.mxu0 0.0
    %1553 = vmatpush.msra.mxu0 0.0
    %1554 = vmatpush.msra.mxu0 0.0
    %1555 = vmatpush.msra.mxu0 0.0
    %1556 = vmatpush.msra.mxu0 0.0
    %1557 = vmatpush.msra.mxu0 0.0
    %1558 = vmatpush.msra.mxu0 0.0
    %1559 = vmatpush.msra.mxu0 0.0
    %1560 = vmatpush.msra.mxu0 0.0
    %1561 = vmatpush.msra.mxu0 0.0
    %v1562 = vand.u32 %v523, 4294901760
    %1563 = vmatpush.msra.mxu0 %v1562
    %v1564 = vand.u32 %v515, 4294901760
    %1565 = vmatpush.msra.mxu0 %v1564
    %v1566 = vand.u32 %v519, 4294901760
    %v1567 = vsub.f32 %v519, %v1566
    %v1568 = vand.u32 %v1567, 4294901760
    %v1569 = vsub.f32 %v1567, %v1568
    %v1570 = vand.u32 %v1569, 4294901760
    %1571 = vmatmul.f32.gmra.mxu0 %v1570
    %v1572 = vpop.f32.mrf.mxu0
    %v1573 = vadd.f32 %v1546, %v1572
    %1574 = vdwg.mxu0
    %1575 = vmatpush.msra.mxu0 0.0
    %1576 = vmatpush.msra.mxu0 0.0
    %1577 = vmatpush.msra.mxu0 0.0
    %1578 = vmatpush.msra.mxu0 0.0
    %1579 = vmatpush.msra.mxu0 0.0
    %1580 = vmatpush.msra.mxu0 0.0
    %1581 = vmatpush.msra.mxu0 0.0
    %1582 = vmatpush.msra.mxu0 0.0
    %1583 = vmatpush.msra.mxu0 0.0
    %1584 = vmatpush.msra.mxu0 0.0
    %1585 = vmatpush.msra.mxu0 0.0
    %1586 = vmatpush.msra.mxu0 0.0
    %1587 = vmatpush.msra.mxu0 0.0
    %1588 = vmatpush.msra.mxu0 0.0
    %v1589 = vand.u32 %v523, 4294901760
    %v1590 = vsub.f32 %v523, %v1589
    %v1591 = vand.u32 %v1590, 4294901760
    %v1592 = vsub.f32 %v1590, %v1591
    %v1593 = vand.u32 %v1592, 4294901760
    %1594 = vmatpush.msra.mxu0 %v1593
    %v1595 = vand.u32 %v515, 4294901760
    %v1596 = vsub.f32 %v515, %v1595
    %v1597 = vand.u32 %v1596, 4294901760
    %v1598 = vsub.f32 %v1596, %v1597
    %v1599 = vand.u32 %v1598, 4294901760
    %1600 = vmatpush.msra.mxu0 %v1599
    %v1601 = vand.u32 %v519, 4294901760
    %1602 = vmatmul.f32.gmra.mxu0 %v1601
    %v1603 = vpop.f32.mrf.mxu0
    %v1604 = vadd.f32 %v1573, %v1603
    %1605 = vdwg.mxu0
    %1606 = vmatpush.msra.mxu0 0.0
    %1607 = vmatpush.msra.mxu0 0.0
    %1608 = vmatpush.msra.mxu0 0.0
    %1609 = vmatpush.msra.mxu0 0.0
    %1610 = vmatpush.msra.mxu0 0.0
    %1611 = vmatpush.msra.mxu0 0.0
    %1612 = vmatpush.msra.mxu0 0.0
    %1613 = vmatpush.msra.mxu0 0.0
    %1614 = vmatpush.msra.mxu0 0.0
    %1615 = vmatpush.msra.mxu0 0.0
    %1616 = vmatpush.msra.mxu0 0.0
    %1617 = vmatpush.msra.mxu0 0.0
    %1618 = vmatpush.msra.mxu0 0.0
    %1619 = vmatpush.msra.mxu0 0.0
    %v1620 = vand.u32 %v523, 4294901760
    %v1621 = vsub.f32 %v523, %v1620
    %1622 = vmatpush.msra.mxu0 %v1621
    %v1623 = vand.u32 %v515, 4294901760
    %v1624 = vsub.f32 %v515, %v1623
    %1625 = vmatpush.msra.mxu0 %v1624
    %v1626 = vand.u32 %v519, 4294901760
    %v1627 = vsub.f32 %v519, %v1626
    %1628 = vmatmul.f32.gmra.mxu0 %v1627
    %v1629 = vpop.f32.mrf.mxu0
    %v1630 = vadd.f32 %v1604, %v1629
    %1631 = vdwg.mxu0
    %1632 = vmatpush.msra.mxu0 0.0
    %1633 = vmatpush.msra.mxu0 0.0
    %1634 = vmatpush.msra.mxu0 0.0
    %1635 = vmatpush.msra.mxu0 0.0
    %1636 = vmatpush.msra.mxu0 0.0
    %1637 = vmatpush.msra.mxu0 0.0
    %1638 = vmatpush.msra.mxu0 0.0
    %1639 = vmatpush.msra.mxu0 0.0
    %1640 = vmatpush.msra.mxu0 0.0
    %1641 = vmatpush.msra.mxu0 0.0
    %1642 = vmatpush.msra.mxu0 0.0
    %1643 = vmatpush.msra.mxu0 0.0
    %1644 = vmatpush.msra.mxu0 0.0
    %1645 = vmatpush.msra.mxu0 0.0
    %v1646 = vand.u32 %v523, 4294901760
    %1647 = vmatpush.msra.mxu0 %v1646
    %v1648 = vand.u32 %v515, 4294901760
    %1649 = vmatpush.msra.mxu0 %v1648
    %v1650 = vand.u32 %v519, 4294901760
    %v1651 = vsub.f32 %v519, %v1650
    %v1652 = vand.u32 %v1651, 4294901760
    %1653 = vmatmul.f32.gmra.mxu0 %v1652
    %v1654 = vpop.f32.mrf.mxu0
    %v1655 = vadd.f32 %v1630, %v1654
    %1656 = vdwg.mxu0
    %1657 = vmatpush.msra.mxu0 0.0
    %1658 = vmatpush.msra.mxu0 0.0
    %1659 = vmatpush.msra.mxu0 0.0
    %1660 = vmatpush.msra.mxu0 0.0
    %1661 = vmatpush.msra.mxu0 0.0
    %1662 = vmatpush.msra.mxu0 0.0
    %1663 = vmatpush.msra.mxu0 0.0
    %1664 = vmatpush.msra.mxu0 0.0
    %1665 = vmatpush.msra.mxu0 0.0
    %1666 = vmatpush.msra.mxu0 0.0
    %1667 = vmatpush.msra.mxu0 0.0
    %1668 = vmatpush.msra.mxu0 0.0
    %1669 = vmatpush.msra.mxu0 0.0
    %1670 = vmatpush.msra.mxu0 0.0
    %v1671 = vand.u32 %v523, 4294901760
    %v1672 = vsub.f32 %v523, %v1671
    %v1673 = vand.u32 %v1672, 4294901760
    %1674 = vmatpush.msra.mxu0 %v1673
    %v1675 = vand.u32 %v515, 4294901760
    %v1676 = vsub.f32 %v515, %v1675
    %v1677 = vand.u32 %v1676, 4294901760
    %1678 = vmatpush.msra.mxu0 %v1677
    %v1679 = vand.u32 %v519, 4294901760
    %1680 = vmatmul.f32.gmra.mxu0 %v1679
    %v1681 = vpop.f32.mrf.mxu0
    %v1682 = vadd.f32 %v1655, %v1681
    %1683 = vdwg.mxu0
    %1684 = vmatpush.msra.mxu0 0.0
    %1685 = vmatpush.msra.mxu0 0.0
    %1686 = vmatpush.msra.mxu0 0.0
    %1687 = vmatpush.msra.mxu0 0.0
    %1688 = vmatpush.msra.mxu0 0.0
    %1689 = vmatpush.msra.mxu0 0.0
    %1690 = vmatpush.msra.mxu0 0.0
    %1691 = vmatpush.msra.mxu0 0.0
    %1692 = vmatpush.msra.mxu0 0.0
    %1693 = vmatpush.msra.mxu0 0.0
    %1694 = vmatpush.msra.mxu0 0.0
    %1695 = vmatpush.msra.mxu0 0.0
    %1696 = vmatpush.msra.mxu0 0.0
    %1697 = vmatpush.msra.mxu0 0.0
    %v1698 = vand.u32 %v523, 4294901760
    %1699 = vmatpush.msra.mxu0 %v1698
    %v1700 = vand.u32 %v515, 4294901760
    %1701 = vmatpush.msra.mxu0 %v1700
    %v1702 = vand.u32 %v519, 4294901760
    %1703 = vmatmul.f32.gmra.mxu0 %v1702
    %v1704 = vpop.f32.mrf.mxu0
    %v1705 = vadd.f32 %v1682, %v1704
    %1706 = vdwg.mxu0
    %v1708 = vsel %vm517, %v337, 0
    %v1711 = vsel %vm521, %v465, 0
    %v1713 = vand.u32 %v431, 4294901760
    %1714 = vmatpush.msra.mxu0 %v1713
    %v1715 = vand.u32 %v430, 4294901760
    %1716 = vmatpush.msra.mxu0 %v1715
    %v1717 = vand.u32 %v429, 4294901760
    %1718 = vmatpush.msra.mxu0 %v1717
    %v1719 = vand.u32 %v428, 4294901760
    %1720 = vmatpush.msra.mxu0 %v1719
    %v1721 = vand.u32 %v427, 4294901760
    %1722 = vmatpush.msra.mxu0 %v1721
    %v1723 = vand.u32 %v426, 4294901760
    %1724 = vmatpush.msra.mxu0 %v1723
    %v1725 = vand.u32 %v425, 4294901760
    %1726 = vmatpush.msra.mxu0 %v1725
    %v1727 = vand.u32 %v424, 4294901760
    %1728 = vmatpush.msra.mxu0 %v1727
    %v1729 = vand.u32 %v423, 4294901760
    %1730 = vmatpush.msra.mxu0 %v1729
    %v1731 = vand.u32 %v422, 4294901760
    %1732 = vmatpush.msra.mxu0 %v1731
    %v1733 = vand.u32 %v421, 4294901760
    %1734 = vmatpush.msra.mxu0 %v1733
    %v1735 = vand.u32 %v420, 4294901760
    %1736 = vmatpush.msra.mxu0 %v1735
    %v1737 = vand.u32 %v419, 4294901760
    %1738 = vmatpush.msra.mxu0 %v1737
    %v1739 = vand.u32 %v418, 4294901760
    %1740 = vmatpush.msra.mxu0 %v1739
    %v1741 = vand.u32 %v417, 4294901760
    %1742 = vmatpush.msra.mxu0 %v1741
    %v1743 = vand.u32 %v416, 4294901760
    %1744 = vmatpush.msra.mxu0 %v1743
    %v1745 = vand.u32 %v334, 4294901760
    %v1746 = vsub.f32 %v334, %v1745
    %v1747 = vand.u32 %v1746, 4294901760
    %v1748 = vsub.f32 %v1746, %v1747
    %v1749 = vand.u32 %v1748, 4294901760
    %1750 = vmatmul.f32.gmra.mxu0 %v1749
    %v1751 = vpop.f32.mrf.mxu0
    %v1752 = vadd.f32 %v1705, %v1751
    %1753 = vdwg.mxu0
    %v1754 = vand.u32 %v431, 4294901760
    %v1755 = vsub.f32 %v431, %v1754
    %v1756 = vand.u32 %v1755, 4294901760
    %v1757 = vsub.f32 %v1755, %v1756
    %v1758 = vand.u32 %v1757, 4294901760
    %1759 = vmatpush.msra.mxu0 %v1758
    %v1760 = vand.u32 %v430, 4294901760
    %v1761 = vsub.f32 %v430, %v1760
    %v1762 = vand.u32 %v1761, 4294901760
    %v1763 = vsub.f32 %v1761, %v1762
    %v1764 = vand.u32 %v1763, 4294901760
    %1765 = vmatpush.msra.mxu0 %v1764
    %v1766 = vand.u32 %v429, 4294901760
    %v1767 = vsub.f32 %v429, %v1766
    %v1768 = vand.u32 %v1767, 4294901760
    %v1769 = vsub.f32 %v1767, %v1768
    %v1770 = vand.u32 %v1769, 4294901760
    %1771 = vmatpush.msra.mxu0 %v1770
    %v1772 = vand.u32 %v428, 4294901760
    %v1773 = vsub.f32 %v428, %v1772
    %v1774 = vand.u32 %v1773, 4294901760
    %v1775 = vsub.f32 %v1773, %v1774
    %v1776 = vand.u32 %v1775, 4294901760
    %1777 = vmatpush.msra.mxu0 %v1776
    %v1778 = vand.u32 %v427, 4294901760
    %v1779 = vsub.f32 %v427, %v1778
    %v1780 = vand.u32 %v1779, 4294901760
    %v1781 = vsub.f32 %v1779, %v1780
    %v1782 = vand.u32 %v1781, 4294901760
    %1783 = vmatpush.msra.mxu0 %v1782
    %v1784 = vand.u32 %v426, 4294901760
    %v1785 = vsub.f32 %v426, %v1784
    %v1786 = vand.u32 %v1785, 4294901760
    %v1787 = vsub.f32 %v1785, %v1786
    %v1788 = vand.u32 %v1787, 4294901760
    %1789 = vmatpush.msra.mxu0 %v1788
    %v1790 = vand.u32 %v425, 4294901760
    %v1791 = vsub.f32 %v425, %v1790
    %v1792 = vand.u32 %v1791, 4294901760
    %v1793 = vsub.f32 %v1791, %v1792
    %v1794 = vand.u32 %v1793, 4294901760
    %1795 = vmatpush.msra.mxu0 %v1794
    %v1796 = vand.u32 %v424, 4294901760
    %v1797 = vsub.f32 %v424, %v1796
    %v1798 = vand.u32 %v1797, 4294901760
    %v1799 = vsub.f32 %v1797, %v1798
    %v1800 = vand.u32 %v1799, 4294901760
    %1801 = vmatpush.msra.mxu0 %v1800
    %v1802 = vand.u32 %v423, 4294901760
    %v1803 = vsub.f32 %v423, %v1802
    %v1804 = vand.u32 %v1803, 4294901760
    %v1805 = vsub.f32 %v1803, %v1804
    %v1806 = vand.u32 %v1805, 4294901760
    %1807 = vmatpush.msra.mxu0 %v1806
    %v1808 = vand.u32 %v422, 4294901760
    %v1809 = vsub.f32 %v422, %v1808
    %v1810 = vand.u32 %v1809, 4294901760
    %v1811 = vsub.f32 %v1809, %v1810
    %v1812 = vand.u32 %v1811, 4294901760
    %1813 = vmatpush.msra.mxu0 %v1812
    %v1814 = vand.u32 %v421, 4294901760
    %v1815 = vsub.f32 %v421, %v1814
    %v1816 = vand.u32 %v1815, 4294901760
    %v1817 = vsub.f32 %v1815, %v1816
    %v1818 = vand.u32 %v1817, 4294901760
    %1819 = vmatpush.msra.mxu0 %v1818
    %v1820 = vand.u32 %v420, 4294901760
    %v1821 = vsub.f32 %v420, %v1820
    %v1822 = vand.u32 %v1821, 4294901760
    %v1823 = vsub.f32 %v1821, %v1822
    %v1824 = vand.u32 %v1823, 4294901760
    %1825 = vmatpush.msra.mxu0 %v1824
    %v1826 = vand.u32 %v419, 4294901760
    %v1827 = vsub.f32 %v419, %v1826
    %v1828 = vand.u32 %v1827, 4294901760
    %v1829 = vsub.f32 %v1827, %v1828
    %v1830 = vand.u32 %v1829, 4294901760
    %1831 = vmatpush.msra.mxu0 %v1830
    %v1832 = vand.u32 %v418, 4294901760
    %v1833 = vsub.f32 %v418, %v1832
    %v1834 = vand.u32 %v1833, 4294901760
    %v1835 = vsub.f32 %v1833, %v1834
    %v1836 = vand.u32 %v1835, 4294901760
    %1837 = vmatpush.msra.mxu0 %v1836
    %v1838 = vand.u32 %v417, 4294901760
    %v1839 = vsub.f32 %v417, %v1838
    %v1840 = vand.u32 %v1839, 4294901760
    %v1841 = vsub.f32 %v1839, %v1840
    %v1842 = vand.u32 %v1841, 4294901760
    %1843 = vmatpush.msra.mxu0 %v1842
    %v1844 = vand.u32 %v416, 4294901760
    %v1845 = vsub.f32 %v416, %v1844
    %v1846 = vand.u32 %v1845, 4294901760
    %v1847 = vsub.f32 %v1845, %v1846
    %v1848 = vand.u32 %v1847, 4294901760
    %1849 = vmatpush.msra.mxu0 %v1848
    %v1850 = vand.u32 %v334, 4294901760
    %1851 = vmatmul.f32.gmra.mxu0 %v1850
    %v1852 = vpop.f32.mrf.mxu0
    %v1853 = vadd.f32 %v1752, %v1852
    %1854 = vdwg.mxu0
    %v1855 = vand.u32 %v431, 4294901760
    %v1856 = vsub.f32 %v431, %v1855
    %1857 = vmatpush.msra.mxu0 %v1856
    %v1858 = vand.u32 %v430, 4294901760
    %v1859 = vsub.f32 %v430, %v1858
    %1860 = vmatpush.msra.mxu0 %v1859
    %v1861 = vand.u32 %v429, 4294901760
    %v1862 = vsub.f32 %v429, %v1861
    %1863 = vmatpush.msra.mxu0 %v1862
    %v1864 = vand.u32 %v428, 4294901760
    %v1865 = vsub.f32 %v428, %v1864
    %1866 = vmatpush.msra.mxu0 %v1865
    %v1867 = vand.u32 %v427, 4294901760
    %v1868 = vsub.f32 %v427, %v1867
    %1869 = vmatpush.msra.mxu0 %v1868
    %v1870 = vand.u32 %v426, 4294901760
    %v1871 = vsub.f32 %v426, %v1870
    %1872 = vmatpush.msra.mxu0 %v1871
    %v1873 = vand.u32 %v425, 4294901760
    %v1874 = vsub.f32 %v425, %v1873
    %1875 = vmatpush.msra.mxu0 %v1874
    %v1876 = vand.u32 %v424, 4294901760
    %v1877 = vsub.f32 %v424, %v1876
    %1878 = vmatpush.msra.mxu0 %v1877
    %v1879 = vand.u32 %v423, 4294901760
    %v1880 = vsub.f32 %v423, %v1879
    %1881 = vmatpush.msra.mxu0 %v1880
    %v1882 = vand.u32 %v422, 4294901760
    %v1883 = vsub.f32 %v422, %v1882
    %1884 = vmatpush.msra.mxu0 %v1883
    %v1885 = vand.u32 %v421, 4294901760
    %v1886 = vsub.f32 %v421, %v1885
    %1887 = vmatpush.msra.mxu0 %v1886
    %v1888 = vand.u32 %v420, 4294901760
    %v1889 = vsub.f32 %v420, %v1888
    %1890 = vmatpush.msra.mxu0 %v1889
    %v1891 = vand.u32 %v419, 4294901760
    %v1892 = vsub.f32 %v419, %v1891
    %1893 = vmatpush.msra.mxu0 %v1892
    %v1894 = vand.u32 %v418, 4294901760
    %v1895 = vsub.f32 %v418, %v1894
    %1896 = vmatpush.msra.mxu0 %v1895
    %v1897 = vand.u32 %v417, 4294901760
    %v1898 = vsub.f32 %v417, %v1897
    %1899 = vmatpush.msra.mxu0 %v1898
    %v1900 = vand.u32 %v416, 4294901760
    %v1901 = vsub.f32 %v416, %v1900
    %1902 = vmatpush.msra.mxu0 %v1901
    %v1903 = vand.u32 %v334, 4294901760
    %v1904 = vsub.f32 %v334, %v1903
    %1905 = vmatmul.f32.gmra.mxu0 %v1904
    %v1906 = vpop.f32.mrf.mxu0
    %v1907 = vadd.f32 %v1853, %v1906
    %1908 = vdwg.mxu0
    %v1909 = vand.u32 %v431, 4294901760
    %1910 = vmatpush.msra.mxu0 %v1909
    %v1911 = vand.u32 %v430, 4294901760
    %1912 = vmatpush.msra.mxu0 %v1911
    %v1913 = vand.u32 %v429, 4294901760
    %1914 = vmatpush.msra.mxu0 %v1913
    %v1915 = vand.u32 %v428, 4294901760
    %1916 = vmatpush.msra.mxu0 %v1915
    %v1917 = vand.u32 %v427, 4294901760
    %1918 = vmatpush.msra.mxu0 %v1917
    %v1919 = vand.u32 %v426, 4294901760
    %1920 = vmatpush.msra.mxu0 %v1919
    %v1921 = vand.u32 %v425, 4294901760
    %1922 = vmatpush.msra.mxu0 %v1921
    %v1923 = vand.u32 %v424, 4294901760
    %1924 = vmatpush.msra.mxu0 %v1923
    %v1925 = vand.u32 %v423, 4294901760
    %1926 = vmatpush.msra.mxu0 %v1925
    %v1927 = vand.u32 %v422, 4294901760
    %1928 = vmatpush.msra.mxu0 %v1927
    %v1929 = vand.u32 %v421, 4294901760
    %1930 = vmatpush.msra.mxu0 %v1929
    %v1931 = vand.u32 %v420, 4294901760
    %1932 = vmatpush.msra.mxu0 %v1931
    %v1933 = vand.u32 %v419, 4294901760
    %1934 = vmatpush.msra.mxu0 %v1933
    %v1935 = vand.u32 %v418, 4294901760
    %1936 = vmatpush.msra.mxu0 %v1935
    %v1937 = vand.u32 %v417, 4294901760
    %1938 = vmatpush.msra.mxu0 %v1937
    %v1939 = vand.u32 %v416, 4294901760
    %1940 = vmatpush.msra.mxu0 %v1939
    %v1941 = vand.u32 %v334, 4294901760
    %v1942 = vsub.f32 %v334, %v1941
    %v1943 = vand.u32 %v1942, 4294901760
    %1944 = vmatmul.f32.gmra.mxu0 %v1943
    %v1945 = vpop.f32.mrf.mxu0
    %v1946 = vadd.f32 %v1907, %v1945
    %1947 = vdwg.mxu0
    %v1948 = vand.u32 %v431, 4294901760
    %v1949 = vsub.f32 %v431, %v1948
    %v1950 = vand.u32 %v1949, 4294901760
    %1951 = vmatpush.msra.mxu0 %v1950
    %v1952 = vand.u32 %v430, 4294901760
    %v1953 = vsub.f32 %v430, %v1952
    %v1954 = vand.u32 %v1953, 4294901760
    %1955 = vmatpush.msra.mxu0 %v1954
    %v1956 = vand.u32 %v429, 4294901760
    %v1957 = vsub.f32 %v429, %v1956
    %v1958 = vand.u32 %v1957, 4294901760
    %1959 = vmatpush.msra.mxu0 %v1958
    %v1960 = vand.u32 %v428, 4294901760
    %v1961 = vsub.f32 %v428, %v1960
    %v1962 = vand.u32 %v1961, 4294901760
    %1963 = vmatpush.msra.mxu0 %v1962
    %v1964 = vand.u32 %v427, 4294901760
    %v1965 = vsub.f32 %v427, %v1964
    %v1966 = vand.u32 %v1965, 4294901760
    %1967 = vmatpush.msra.mxu0 %v1966
    %v1968 = vand.u32 %v426, 4294901760
    %v1969 = vsub.f32 %v426, %v1968
    %v1970 = vand.u32 %v1969, 4294901760
    %1971 = vmatpush.msra.mxu0 %v1970
    %v1972 = vand.u32 %v425, 4294901760
    %v1973 = vsub.f32 %v425, %v1972
    %v1974 = vand.u32 %v1973, 4294901760
    %1975 = vmatpush.msra.mxu0 %v1974
    %v1976 = vand.u32 %v424, 4294901760
    %v1977 = vsub.f32 %v424, %v1976
    %v1978 = vand.u32 %v1977, 4294901760
    %1979 = vmatpush.msra.mxu0 %v1978
    %v1980 = vand.u32 %v423, 4294901760
    %v1981 = vsub.f32 %v423, %v1980
    %v1982 = vand.u32 %v1981, 4294901760
    %1983 = vmatpush.msra.mxu0 %v1982
    %v1984 = vand.u32 %v422, 4294901760
    %v1985 = vsub.f32 %v422, %v1984
    %v1986 = vand.u32 %v1985, 4294901760
    %1987 = vmatpush.msra.mxu0 %v1986
    %v1988 = vand.u32 %v421, 4294901760
    %v1989 = vsub.f32 %v421, %v1988
    %v1990 = vand.u32 %v1989, 4294901760
    %1991 = vmatpush.msra.mxu0 %v1990
    %v1992 = vand.u32 %v420, 4294901760
    %v1993 = vsub.f32 %v420, %v1992
    %v1994 = vand.u32 %v1993, 4294901760
    %1995 = vmatpush.msra.mxu0 %v1994
    %v1996 = vand.u32 %v419, 4294901760
    %v1997 = vsub.f32 %v419, %v1996
    %v1998 = vand.u32 %v1997, 4294901760
    %1999 = vmatpush.msra.mxu0 %v1998
    %v2000 = vand.u32 %v418, 4294901760
    %v2001 = vsub.f32 %v418, %v2000
    %v2002 = vand.u32 %v2001, 4294901760
    %2003 = vmatpush.msra.mxu0 %v2002
    %v2004 = vand.u32 %v417, 4294901760
    %v2005 = vsub.f32 %v417, %v2004
    %v2006 = vand.u32 %v2005, 4294901760
    %2007 = vmatpush.msra.mxu0 %v2006
    %v2008 = vand.u32 %v416, 4294901760
    %v2009 = vsub.f32 %v416, %v2008
    %v2010 = vand.u32 %v2009, 4294901760
    %2011 = vmatpush.msra.mxu0 %v2010
    %v2012 = vand.u32 %v334, 4294901760
    %2013 = vmatmul.f32.gmra.mxu0 %v2012
    %v2014 = vpop.f32.mrf.mxu0
    %v2015 = vadd.f32 %v1946, %v2014
    %2016 = vdwg.mxu0
    %v2017 = vand.u32 %v431, 4294901760
    %2018 = vmatpush.msra.mxu0 %v2017
    %v2019 = vand.u32 %v430, 4294901760
    %2020 = vmatpush.msra.mxu0 %v2019
    %v2021 = vand.u32 %v429, 4294901760
    %2022 = vmatpush.msra.mxu0 %v2021
    %v2023 = vand.u32 %v428, 4294901760
    %2024 = vmatpush.msra.mxu0 %v2023
    %v2025 = vand.u32 %v427, 4294901760
    %2026 = vmatpush.msra.mxu0 %v2025
    %v2027 = vand.u32 %v426, 4294901760
    %2028 = vmatpush.msra.mxu0 %v2027
    %v2029 = vand.u32 %v425, 4294901760
    %2030 = vmatpush.msra.mxu0 %v2029
    %v2031 = vand.u32 %v424, 4294901760
    %2032 = vmatpush.msra.mxu0 %v2031
    %v2033 = vand.u32 %v423, 4294901760
    %2034 = vmatpush.msra.mxu0 %v2033
    %v2035 = vand.u32 %v422, 4294901760
    %2036 = vmatpush.msra.mxu0 %v2035
    %v2037 = vand.u32 %v421, 4294901760
    %2038 = vmatpush.msra.mxu0 %v2037
    %v2039 = vand.u32 %v420, 4294901760
    %2040 = vmatpush.msra.mxu0 %v2039
    %v2041 = vand.u32 %v419, 4294901760
    %2042 = vmatpush.msra.mxu0 %v2041
    %v2043 = vand.u32 %v418, 4294901760
    %2044 = vmatpush.msra.mxu0 %v2043
    %v2045 = vand.u32 %v417, 4294901760
    %2046 = vmatpush.msra.mxu0 %v2045
    %v2047 = vand.u32 %v416, 4294901760
    %2048 = vmatpush.msra.mxu0 %v2047
    %v2049 = vand.u32 %v334, 4294901760
    %2050 = vmatmul.f32.gmra.mxu0 %v2049
    %v2051 = vpop.f32.mrf.mxu0
    %v2052 = vadd.f32 %v2015, %v2051
    %2053 = vdwg.mxu0
    %v2054 = vand.u32 %v447, 4294901760
    %2055 = vmatpush.msra.mxu0 %v2054
    %v2056 = vand.u32 %v446, 4294901760
    %2057 = vmatpush.msra.mxu0 %v2056
    %v2058 = vand.u32 %v445, 4294901760
    %2059 = vmatpush.msra.mxu0 %v2058
    %v2060 = vand.u32 %v444, 4294901760
    %2061 = vmatpush.msra.mxu0 %v2060
    %v2062 = vand.u32 %v443, 4294901760
    %2063 = vmatpush.msra.mxu0 %v2062
    %v2064 = vand.u32 %v442, 4294901760
    %2065 = vmatpush.msra.mxu0 %v2064
    %v2066 = vand.u32 %v441, 4294901760
    %2067 = vmatpush.msra.mxu0 %v2066
    %v2068 = vand.u32 %v440, 4294901760
    %2069 = vmatpush.msra.mxu0 %v2068
    %v2070 = vand.u32 %v439, 4294901760
    %2071 = vmatpush.msra.mxu0 %v2070
    %v2072 = vand.u32 %v438, 4294901760
    %2073 = vmatpush.msra.mxu0 %v2072
    %v2074 = vand.u32 %v437, 4294901760
    %2075 = vmatpush.msra.mxu0 %v2074
    %v2076 = vand.u32 %v436, 4294901760
    %2077 = vmatpush.msra.mxu0 %v2076
    %v2078 = vand.u32 %v435, 4294901760
    %2079 = vmatpush.msra.mxu0 %v2078
    %v2080 = vand.u32 %v434, 4294901760
    %2081 = vmatpush.msra.mxu0 %v2080
    %v2082 = vand.u32 %v433, 4294901760
    %2083 = vmatpush.msra.mxu0 %v2082
    %v2084 = vand.u32 %v432, 4294901760
    %2085 = vmatpush.msra.mxu0 %v2084
    %v2086 = vand.u32 %v335, 4294901760
    %v2087 = vsub.f32 %v335, %v2086
    %v2088 = vand.u32 %v2087, 4294901760
    %v2089 = vsub.f32 %v2087, %v2088
    %v2090 = vand.u32 %v2089, 4294901760
    %2091 = vmatmul.f32.gmra.mxu0 %v2090
    %v2092 = vpop.f32.mrf.mxu0
    %v2093 = vadd.f32 %v2052, %v2092
    %2094 = vdwg.mxu0
    %v2095 = vand.u32 %v447, 4294901760
    %v2096 = vsub.f32 %v447, %v2095
    %v2097 = vand.u32 %v2096, 4294901760
    %v2098 = vsub.f32 %v2096, %v2097
    %v2099 = vand.u32 %v2098, 4294901760
    %2100 = vmatpush.msra.mxu0 %v2099
    %v2101 = vand.u32 %v446, 4294901760
    %v2102 = vsub.f32 %v446, %v2101
    %v2103 = vand.u32 %v2102, 4294901760
    %v2104 = vsub.f32 %v2102, %v2103
    %v2105 = vand.u32 %v2104, 4294901760
    %2106 = vmatpush.msra.mxu0 %v2105
    %v2107 = vand.u32 %v445, 4294901760
    %v2108 = vsub.f32 %v445, %v2107
    %v2109 = vand.u32 %v2108, 4294901760
    %v2110 = vsub.f32 %v2108, %v2109
    %v2111 = vand.u32 %v2110, 4294901760
    %2112 = vmatpush.msra.mxu0 %v2111
    %v2113 = vand.u32 %v444, 4294901760
    %v2114 = vsub.f32 %v444, %v2113
    %v2115 = vand.u32 %v2114, 4294901760
    %v2116 = vsub.f32 %v2114, %v2115
    %v2117 = vand.u32 %v2116, 4294901760
    %2118 = vmatpush.msra.mxu0 %v2117
    %v2119 = vand.u32 %v443, 4294901760
    %v2120 = vsub.f32 %v443, %v2119
    %v2121 = vand.u32 %v2120, 4294901760
    %v2122 = vsub.f32 %v2120, %v2121
    %v2123 = vand.u32 %v2122, 4294901760
    %2124 = vmatpush.msra.mxu0 %v2123
    %v2125 = vand.u32 %v442, 4294901760
    %v2126 = vsub.f32 %v442, %v2125
    %v2127 = vand.u32 %v2126, 4294901760
    %v2128 = vsub.f32 %v2126, %v2127
    %v2129 = vand.u32 %v2128, 4294901760
    %2130 = vmatpush.msra.mxu0 %v2129
    %v2131 = vand.u32 %v441, 4294901760
    %v2132 = vsub.f32 %v441, %v2131
    %v2133 = vand.u32 %v2132, 4294901760
    %v2134 = vsub.f32 %v2132, %v2133
    %v2135 = vand.u32 %v2134, 4294901760
    %2136 = vmatpush.msra.mxu0 %v2135
    %v2137 = vand.u32 %v440, 4294901760
    %v2138 = vsub.f32 %v440, %v2137
    %v2139 = vand.u32 %v2138, 4294901760
    %v2140 = vsub.f32 %v2138, %v2139
    %v2141 = vand.u32 %v2140, 4294901760
    %2142 = vmatpush.msra.mxu0 %v2141
    %v2143 = vand.u32 %v439, 4294901760
    %v2144 = vsub.f32 %v439, %v2143
    %v2145 = vand.u32 %v2144, 4294901760
    %v2146 = vsub.f32 %v2144, %v2145
    %v2147 = vand.u32 %v2146, 4294901760
    %2148 = vmatpush.msra.mxu0 %v2147
    %v2149 = vand.u32 %v438, 4294901760
    %v2150 = vsub.f32 %v438, %v2149
    %v2151 = vand.u32 %v2150, 4294901760
    %v2152 = vsub.f32 %v2150, %v2151
    %v2153 = vand.u32 %v2152, 4294901760
    %2154 = vmatpush.msra.mxu0 %v2153
    %v2155 = vand.u32 %v437, 4294901760
    %v2156 = vsub.f32 %v437, %v2155
    %v2157 = vand.u32 %v2156, 4294901760
    %v2158 = vsub.f32 %v2156, %v2157
    %v2159 = vand.u32 %v2158, 4294901760
    %2160 = vmatpush.msra.mxu0 %v2159
    %v2161 = vand.u32 %v436, 4294901760
    %v2162 = vsub.f32 %v436, %v2161
    %v2163 = vand.u32 %v2162, 4294901760
    %v2164 = vsub.f32 %v2162, %v2163
    %v2165 = vand.u32 %v2164, 4294901760
    %2166 = vmatpush.msra.mxu0 %v2165
    %v2167 = vand.u32 %v435, 4294901760
    %v2168 = vsub.f32 %v435, %v2167
    %v2169 = vand.u32 %v2168, 4294901760
    %v2170 = vsub.f32 %v2168, %v2169
    %v2171 = vand.u32 %v2170, 4294901760
    %2172 = vmatpush.msra.mxu0 %v2171
    %v2173 = vand.u32 %v434, 4294901760
    %v2174 = vsub.f32 %v434, %v2173
    %v2175 = vand.u32 %v2174, 4294901760
    %v2176 = vsub.f32 %v2174, %v2175
    %v2177 = vand.u32 %v2176, 4294901760
    %2178 = vmatpush.msra.mxu0 %v2177
    %v2179 = vand.u32 %v433, 4294901760
    %v2180 = vsub.f32 %v433, %v2179
    %v2181 = vand.u32 %v2180, 4294901760
    %v2182 = vsub.f32 %v2180, %v2181
    %v2183 = vand.u32 %v2182, 4294901760
    %2184 = vmatpush.msra.mxu0 %v2183
    %v2185 = vand.u32 %v432, 4294901760
    %v2186 = vsub.f32 %v432, %v2185
    %v2187 = vand.u32 %v2186, 4294901760
    %v2188 = vsub.f32 %v2186, %v2187
    %v2189 = vand.u32 %v2188, 4294901760
    %2190 = vmatpush.msra.mxu0 %v2189
    %v2191 = vand.u32 %v335, 4294901760
    %2192 = vmatmul.f32.gmra.mxu0 %v2191
    %v2193 = vpop.f32.mrf.mxu0
    %v2194 = vadd.f32 %v2093, %v2193
    %2195 = vdwg.mxu0
    %v2196 = vand.u32 %v447, 4294901760
    %v2197 = vsub.f32 %v447, %v2196
    %2198 = vmatpush.msra.mxu0 %v2197
    %v2199 = vand.u32 %v446, 4294901760
    %v2200 = vsub.f32 %v446, %v2199
    %2201 = vmatpush.msra.mxu0 %v2200
    %v2202 = vand.u32 %v445, 4294901760
    %v2203 = vsub.f32 %v445, %v2202
    %2204 = vmatpush.msra.mxu0 %v2203
    %v2205 = vand.u32 %v444, 4294901760
    %v2206 = vsub.f32 %v444, %v2205
    %2207 = vmatpush.msra.mxu0 %v2206
    %v2208 = vand.u32 %v443, 4294901760
    %v2209 = vsub.f32 %v443, %v2208
    %2210 = vmatpush.msra.mxu0 %v2209
    %v2211 = vand.u32 %v442, 4294901760
    %v2212 = vsub.f32 %v442, %v2211
    %2213 = vmatpush.msra.mxu0 %v2212
    %v2214 = vand.u32 %v441, 4294901760
    %v2215 = vsub.f32 %v441, %v2214
    %2216 = vmatpush.msra.mxu0 %v2215
    %v2217 = vand.u32 %v440, 4294901760
    %v2218 = vsub.f32 %v440, %v2217
    %2219 = vmatpush.msra.mxu0 %v2218
    %v2220 = vand.u32 %v439, 4294901760
    %v2221 = vsub.f32 %v439, %v2220
    %2222 = vmatpush.msra.mxu0 %v2221
    %v2223 = vand.u32 %v438, 4294901760
    %v2224 = vsub.f32 %v438, %v2223
    %2225 = vmatpush.msra.mxu0 %v2224
    %v2226 = vand.u32 %v437, 4294901760
    %v2227 = vsub.f32 %v437, %v2226
    %2228 = vmatpush.msra.mxu0 %v2227
    %v2229 = vand.u32 %v436, 4294901760
    %v2230 = vsub.f32 %v436, %v2229
    %2231 = vmatpush.msra.mxu0 %v2230
    %v2232 = vand.u32 %v435, 4294901760
    %v2233 = vsub.f32 %v435, %v2232
    %2234 = vmatpush.msra.mxu0 %v2233
    %v2235 = vand.u32 %v434, 4294901760
    %v2236 = vsub.f32 %v434, %v2235
    %2237 = vmatpush.msra.mxu0 %v2236
    %v2238 = vand.u32 %v433, 4294901760
    %v2239 = vsub.f32 %v433, %v2238
    %2240 = vmatpush.msra.mxu0 %v2239
    %v2241 = vand.u32 %v432, 4294901760
    %v2242 = vsub.f32 %v432, %v2241
    %2243 = vmatpush.msra.mxu0 %v2242
    %v2244 = vand.u32 %v335, 4294901760
    %v2245 = vsub.f32 %v335, %v2244
    %2246 = vmatmul.f32.gmra.mxu0 %v2245
    %v2247 = vpop.f32.mrf.mxu0
    %v2248 = vadd.f32 %v2194, %v2247
    %2249 = vdwg.mxu0
    %v2250 = vand.u32 %v447, 4294901760
    %2251 = vmatpush.msra.mxu0 %v2250
    %v2252 = vand.u32 %v446, 4294901760
    %2253 = vmatpush.msra.mxu0 %v2252
    %v2254 = vand.u32 %v445, 4294901760
    %2255 = vmatpush.msra.mxu0 %v2254
    %v2256 = vand.u32 %v444, 4294901760
    %2257 = vmatpush.msra.mxu0 %v2256
    %v2258 = vand.u32 %v443, 4294901760
    %2259 = vmatpush.msra.mxu0 %v2258
    %v2260 = vand.u32 %v442, 4294901760
    %2261 = vmatpush.msra.mxu0 %v2260
    %v2262 = vand.u32 %v441, 4294901760
    %2263 = vmatpush.msra.mxu0 %v2262
    %v2264 = vand.u32 %v440, 4294901760
    %2265 = vmatpush.msra.mxu0 %v2264
    %v2266 = vand.u32 %v439, 4294901760
    %2267 = vmatpush.msra.mxu0 %v2266
    %v2268 = vand.u32 %v438, 4294901760
    %2269 = vmatpush.msra.mxu0 %v2268
    %v2270 = vand.u32 %v437, 4294901760
    %2271 = vmatpush.msra.mxu0 %v2270
    %v2272 = vand.u32 %v436, 4294901760
    %2273 = vmatpush.msra.mxu0 %v2272
    %v2274 = vand.u32 %v435, 4294901760
    %2275 = vmatpush.msra.mxu0 %v2274
    %v2276 = vand.u32 %v434, 4294901760
    %2277 = vmatpush.msra.mxu0 %v2276
    %v2278 = vand.u32 %v433, 4294901760
    %2279 = vmatpush.msra.mxu0 %v2278
    %v2280 = vand.u32 %v432, 4294901760
    %2281 = vmatpush.msra.mxu0 %v2280
    %v2282 = vand.u32 %v335, 4294901760
    %v2283 = vsub.f32 %v335, %v2282
    %v2284 = vand.u32 %v2283, 4294901760
    %2285 = vmatmul.f32.gmra.mxu0 %v2284
    %v2286 = vpop.f32.mrf.mxu0
    %v2287 = vadd.f32 %v2248, %v2286
    %2288 = vdwg.mxu0
    %v2289 = vand.u32 %v447, 4294901760
    %v2290 = vsub.f32 %v447, %v2289
    %v2291 = vand.u32 %v2290, 4294901760
    %2292 = vmatpush.msra.mxu0 %v2291
    %v2293 = vand.u32 %v446, 4294901760
    %v2294 = vsub.f32 %v446, %v2293
    %v2295 = vand.u32 %v2294, 4294901760
    %2296 = vmatpush.msra.mxu0 %v2295
    %v2297 = vand.u32 %v445, 4294901760
    %v2298 = vsub.f32 %v445, %v2297
    %v2299 = vand.u32 %v2298, 4294901760
    %2300 = vmatpush.msra.mxu0 %v2299
    %v2301 = vand.u32 %v444, 4294901760
    %v2302 = vsub.f32 %v444, %v2301
    %v2303 = vand.u32 %v2302, 4294901760
    %2304 = vmatpush.msra.mxu0 %v2303
    %v2305 = vand.u32 %v443, 4294901760
    %v2306 = vsub.f32 %v443, %v2305
    %v2307 = vand.u32 %v2306, 4294901760
    %2308 = vmatpush.msra.mxu0 %v2307
    %v2309 = vand.u32 %v442, 4294901760
    %v2310 = vsub.f32 %v442, %v2309
    %v2311 = vand.u32 %v2310, 4294901760
    %2312 = vmatpush.msra.mxu0 %v2311
    %v2313 = vand.u32 %v441, 4294901760
    %v2314 = vsub.f32 %v441, %v2313
    %v2315 = vand.u32 %v2314, 4294901760
    %2316 = vmatpush.msra.mxu0 %v2315
    %v2317 = vand.u32 %v440, 4294901760
    %v2318 = vsub.f32 %v440, %v2317
    %v2319 = vand.u32 %v2318, 4294901760
    %2320 = vmatpush.msra.mxu0 %v2319
    %v2321 = vand.u32 %v439, 4294901760
    %v2322 = vsub.f32 %v439, %v2321
    %v2323 = vand.u32 %v2322, 4294901760
    %2324 = vmatpush.msra.mxu0 %v2323
    %v2325 = vand.u32 %v438, 4294901760
    %v2326 = vsub.f32 %v438, %v2325
    %v2327 = vand.u32 %v2326, 4294901760
    %2328 = vmatpush.msra.mxu0 %v2327
    %v2329 = vand.u32 %v437, 4294901760
    %v2330 = vsub.f32 %v437, %v2329
    %v2331 = vand.u32 %v2330, 4294901760
    %2332 = vmatpush.msra.mxu0 %v2331
    %v2333 = vand.u32 %v436, 4294901760
    %v2334 = vsub.f32 %v436, %v2333
    %v2335 = vand.u32 %v2334, 4294901760
    %2336 = vmatpush.msra.mxu0 %v2335
    %v2337 = vand.u32 %v435, 4294901760
    %v2338 = vsub.f32 %v435, %v2337
    %v2339 = vand.u32 %v2338, 4294901760
    %2340 = vmatpush.msra.mxu0 %v2339
    %v2341 = vand.u32 %v434, 4294901760
    %v2342 = vsub.f32 %v434, %v2341
    %v2343 = vand.u32 %v2342, 4294901760
    %2344 = vmatpush.msra.mxu0 %v2343
    %v2345 = vand.u32 %v433, 4294901760
    %v2346 = vsub.f32 %v433, %v2345
    %v2347 = vand.u32 %v2346, 4294901760
    %2348 = vmatpush.msra.mxu0 %v2347
    %v2349 = vand.u32 %v432, 4294901760
    %v2350 = vsub.f32 %v432, %v2349
    %v2351 = vand.u32 %v2350, 4294901760
    %2352 = vmatpush.msra.mxu0 %v2351
    %v2353 = vand.u32 %v335, 4294901760
    %2354 = vmatmul.f32.gmra.mxu0 %v2353
    %v2355 = vpop.f32.mrf.mxu0
    %v2356 = vadd.f32 %v2287, %v2355
    %2357 = vdwg.mxu0
    %v2358 = vand.u32 %v447, 4294901760
    %2359 = vmatpush.msra.mxu0 %v2358
    %v2360 = vand.u32 %v446, 4294901760
    %2361 = vmatpush.msra.mxu0 %v2360
    %v2362 = vand.u32 %v445, 4294901760
    %2363 = vmatpush.msra.mxu0 %v2362
    %v2364 = vand.u32 %v444, 4294901760
    %2365 = vmatpush.msra.mxu0 %v2364
    %v2366 = vand.u32 %v443, 4294901760
    %2367 = vmatpush.msra.mxu0 %v2366
    %v2368 = vand.u32 %v442, 4294901760
    %2369 = vmatpush.msra.mxu0 %v2368
    %v2370 = vand.u32 %v441, 4294901760
    %2371 = vmatpush.msra.mxu0 %v2370
    %v2372 = vand.u32 %v440, 4294901760
    %2373 = vmatpush.msra.mxu0 %v2372
    %v2374 = vand.u32 %v439, 4294901760
    %2375 = vmatpush.msra.mxu0 %v2374
    %v2376 = vand.u32 %v438, 4294901760
    %2377 = vmatpush.msra.mxu0 %v2376
    %v2378 = vand.u32 %v437, 4294901760
    %2379 = vmatpush.msra.mxu0 %v2378
    %v2380 = vand.u32 %v436, 4294901760
    %2381 = vmatpush.msra.mxu0 %v2380
    %v2382 = vand.u32 %v435, 4294901760
    %2383 = vmatpush.msra.mxu0 %v2382
    %v2384 = vand.u32 %v434, 4294901760
    %2385 = vmatpush.msra.mxu0 %v2384
    %v2386 = vand.u32 %v433, 4294901760
    %2387 = vmatpush.msra.mxu0 %v2386
    %v2388 = vand.u32 %v432, 4294901760
    %2389 = vmatpush.msra.mxu0 %v2388
    %v2390 = vand.u32 %v335, 4294901760
    %2391 = vmatmul.f32.gmra.mxu0 %v2390
    %v2392 = vpop.f32.mrf.mxu0
    %v2393 = vadd.f32 %v2356, %v2392
    %2394 = vdwg.mxu0
    %v2395 = vand.u32 %v463, 4294901760
    %2396 = vmatpush.msra.mxu0 %v2395
    %v2397 = vand.u32 %v462, 4294901760
    %2398 = vmatpush.msra.mxu0 %v2397
    %v2399 = vand.u32 %v461, 4294901760
    %2400 = vmatpush.msra.mxu0 %v2399
    %v2401 = vand.u32 %v460, 4294901760
    %2402 = vmatpush.msra.mxu0 %v2401
    %v2403 = vand.u32 %v459, 4294901760
    %2404 = vmatpush.msra.mxu0 %v2403
    %v2405 = vand.u32 %v458, 4294901760
    %2406 = vmatpush.msra.mxu0 %v2405
    %v2407 = vand.u32 %v457, 4294901760
    %2408 = vmatpush.msra.mxu0 %v2407
    %v2409 = vand.u32 %v456, 4294901760
    %2410 = vmatpush.msra.mxu0 %v2409
    %v2411 = vand.u32 %v455, 4294901760
    %2412 = vmatpush.msra.mxu0 %v2411
    %v2413 = vand.u32 %v454, 4294901760
    %2414 = vmatpush.msra.mxu0 %v2413
    %v2415 = vand.u32 %v453, 4294901760
    %2416 = vmatpush.msra.mxu0 %v2415
    %v2417 = vand.u32 %v452, 4294901760
    %2418 = vmatpush.msra.mxu0 %v2417
    %v2419 = vand.u32 %v451, 4294901760
    %2420 = vmatpush.msra.mxu0 %v2419
    %v2421 = vand.u32 %v450, 4294901760
    %2422 = vmatpush.msra.mxu0 %v2421
    %v2423 = vand.u32 %v449, 4294901760
    %2424 = vmatpush.msra.mxu0 %v2423
    %v2425 = vand.u32 %v448, 4294901760
    %2426 = vmatpush.msra.mxu0 %v2425
    %v2427 = vand.u32 %v336, 4294901760
    %v2428 = vsub.f32 %v336, %v2427
    %v2429 = vand.u32 %v2428, 4294901760
    %v2430 = vsub.f32 %v2428, %v2429
    %v2431 = vand.u32 %v2430, 4294901760
    %2432 = vmatmul.f32.gmra.mxu0 %v2431
    %v2433 = vpop.f32.mrf.mxu0
    %v2434 = vadd.f32 %v2393, %v2433
    %2435 = vdwg.mxu0
    %v2436 = vand.u32 %v463, 4294901760
    %v2437 = vsub.f32 %v463, %v2436
    %v2438 = vand.u32 %v2437, 4294901760
    %v2439 = vsub.f32 %v2437, %v2438
    %v2440 = vand.u32 %v2439, 4294901760
    %2441 = vmatpush.msra.mxu0 %v2440
    %v2442 = vand.u32 %v462, 4294901760
    %v2443 = vsub.f32 %v462, %v2442
    %v2444 = vand.u32 %v2443, 4294901760
    %v2445 = vsub.f32 %v2443, %v2444
    %v2446 = vand.u32 %v2445, 4294901760
    %2447 = vmatpush.msra.mxu0 %v2446
    %v2448 = vand.u32 %v461, 4294901760
    %v2449 = vsub.f32 %v461, %v2448
    %v2450 = vand.u32 %v2449, 4294901760
    %v2451 = vsub.f32 %v2449, %v2450
    %v2452 = vand.u32 %v2451, 4294901760
    %2453 = vmatpush.msra.mxu0 %v2452
    %v2454 = vand.u32 %v460, 4294901760
    %v2455 = vsub.f32 %v460, %v2454
    %v2456 = vand.u32 %v2455, 4294901760
    %v2457 = vsub.f32 %v2455, %v2456
    %v2458 = vand.u32 %v2457, 4294901760
    %2459 = vmatpush.msra.mxu0 %v2458
    %v2460 = vand.u32 %v459, 4294901760
    %v2461 = vsub.f32 %v459, %v2460
    %v2462 = vand.u32 %v2461, 4294901760
    %v2463 = vsub.f32 %v2461, %v2462
    %v2464 = vand.u32 %v2463, 4294901760
    %2465 = vmatpush.msra.mxu0 %v2464
    %v2466 = vand.u32 %v458, 4294901760
    %v2467 = vsub.f32 %v458, %v2466
    %v2468 = vand.u32 %v2467, 4294901760
    %v2469 = vsub.f32 %v2467, %v2468
    %v2470 = vand.u32 %v2469, 4294901760
    %2471 = vmatpush.msra.mxu0 %v2470
    %v2472 = vand.u32 %v457, 4294901760
    %v2473 = vsub.f32 %v457, %v2472
    %v2474 = vand.u32 %v2473, 4294901760
    %v2475 = vsub.f32 %v2473, %v2474
    %v2476 = vand.u32 %v2475, 4294901760
    %2477 = vmatpush.msra.mxu0 %v2476
    %v2478 = vand.u32 %v456, 4294901760
    %v2479 = vsub.f32 %v456, %v2478
    %v2480 = vand.u32 %v2479, 4294901760
    %v2481 = vsub.f32 %v2479, %v2480
    %v2482 = vand.u32 %v2481, 4294901760
    %2483 = vmatpush.msra.mxu0 %v2482
    %v2484 = vand.u32 %v455, 4294901760
    %v2485 = vsub.f32 %v455, %v2484
    %v2486 = vand.u32 %v2485, 4294901760
    %v2487 = vsub.f32 %v2485, %v2486
    %v2488 = vand.u32 %v2487, 4294901760
    %2489 = vmatpush.msra.mxu0 %v2488
    %v2490 = vand.u32 %v454, 4294901760
    %v2491 = vsub.f32 %v454, %v2490
    %v2492 = vand.u32 %v2491, 4294901760
    %v2493 = vsub.f32 %v2491, %v2492
    %v2494 = vand.u32 %v2493, 4294901760
    %2495 = vmatpush.msra.mxu0 %v2494
    %v2496 = vand.u32 %v453, 4294901760
    %v2497 = vsub.f32 %v453, %v2496
    %v2498 = vand.u32 %v2497, 4294901760
    %v2499 = vsub.f32 %v2497, %v2498
    %v2500 = vand.u32 %v2499, 4294901760
    %2501 = vmatpush.msra.mxu0 %v2500
    %v2502 = vand.u32 %v452, 4294901760
    %v2503 = vsub.f32 %v452, %v2502
    %v2504 = vand.u32 %v2503, 4294901760
    %v2505 = vsub.f32 %v2503, %v2504
    %v2506 = vand.u32 %v2505, 4294901760
    %2507 = vmatpush.msra.mxu0 %v2506
    %v2508 = vand.u32 %v451, 4294901760
    %v2509 = vsub.f32 %v451, %v2508
    %v2510 = vand.u32 %v2509, 4294901760
    %v2511 = vsub.f32 %v2509, %v2510
    %v2512 = vand.u32 %v2511, 4294901760
    %2513 = vmatpush.msra.mxu0 %v2512
    %v2514 = vand.u32 %v450, 4294901760
    %v2515 = vsub.f32 %v450, %v2514
    %v2516 = vand.u32 %v2515, 4294901760
    %v2517 = vsub.f32 %v2515, %v2516
    %v2518 = vand.u32 %v2517, 4294901760
    %2519 = vmatpush.msra.mxu0 %v2518
    %v2520 = vand.u32 %v449, 4294901760
    %v2521 = vsub.f32 %v449, %v2520
    %v2522 = vand.u32 %v2521, 4294901760
    %v2523 = vsub.f32 %v2521, %v2522
    %v2524 = vand.u32 %v2523, 4294901760
    %2525 = vmatpush.msra.mxu0 %v2524
    %v2526 = vand.u32 %v448, 4294901760
    %v2527 = vsub.f32 %v448, %v2526
    %v2528 = vand.u32 %v2527, 4294901760
    %v2529 = vsub.f32 %v2527, %v2528
    %v2530 = vand.u32 %v2529, 4294901760
    %2531 = vmatpush.msra.mxu0 %v2530
    %v2532 = vand.u32 %v336, 4294901760
    %2533 = vmatmul.f32.gmra.mxu0 %v2532
    %v2534 = vpop.f32.mrf.mxu0
    %v2535 = vadd.f32 %v2434, %v2534
    %2536 = vdwg.mxu0
    %v2537 = vand.u32 %v463, 4294901760
    %v2538 = vsub.f32 %v463, %v2537
    %2539 = vmatpush.msra.mxu0 %v2538
    %v2540 = vand.u32 %v462, 4294901760
    %v2541 = vsub.f32 %v462, %v2540
    %2542 = vmatpush.msra.mxu0 %v2541
    %v2543 = vand.u32 %v461, 4294901760
    %v2544 = vsub.f32 %v461, %v2543
    %2545 = vmatpush.msra.mxu0 %v2544
    %v2546 = vand.u32 %v460, 4294901760
    %v2547 = vsub.f32 %v460, %v2546
    %2548 = vmatpush.msra.mxu0 %v2547
    %v2549 = vand.u32 %v459, 4294901760
    %v2550 = vsub.f32 %v459, %v2549
    %2551 = vmatpush.msra.mxu0 %v2550
    %v2552 = vand.u32 %v458, 4294901760
    %v2553 = vsub.f32 %v458, %v2552
    %2554 = vmatpush.msra.mxu0 %v2553
    %v2555 = vand.u32 %v457, 4294901760
    %v2556 = vsub.f32 %v457, %v2555
    %2557 = vmatpush.msra.mxu0 %v2556
    %v2558 = vand.u32 %v456, 4294901760
    %v2559 = vsub.f32 %v456, %v2558
    %2560 = vmatpush.msra.mxu0 %v2559
    %v2561 = vand.u32 %v455, 4294901760
    %v2562 = vsub.f32 %v455, %v2561
    %2563 = vmatpush.msra.mxu0 %v2562
    %v2564 = vand.u32 %v454, 4294901760
    %v2565 = vsub.f32 %v454, %v2564
    %2566 = vmatpush.msra.mxu0 %v2565
    %v2567 = vand.u32 %v453, 4294901760
    %v2568 = vsub.f32 %v453, %v2567
    %2569 = vmatpush.msra.mxu0 %v2568
    %v2570 = vand.u32 %v452, 4294901760
    %v2571 = vsub.f32 %v452, %v2570
    %2572 = vmatpush.msra.mxu0 %v2571
    %v2573 = vand.u32 %v451, 4294901760
    %v2574 = vsub.f32 %v451, %v2573
    %2575 = vmatpush.msra.mxu0 %v2574
    %v2576 = vand.u32 %v450, 4294901760
    %v2577 = vsub.f32 %v450, %v2576
    %2578 = vmatpush.msra.mxu0 %v2577
    %v2579 = vand.u32 %v449, 4294901760
    %v2580 = vsub.f32 %v449, %v2579
    %2581 = vmatpush.msra.mxu0 %v2580
    %v2582 = vand.u32 %v448, 4294901760
    %v2583 = vsub.f32 %v448, %v2582
    %2584 = vmatpush.msra.mxu0 %v2583
    %v2585 = vand.u32 %v336, 4294901760
    %v2586 = vsub.f32 %v336, %v2585
    %2587 = vmatmul.f32.gmra.mxu0 %v2586
    %v2588 = vpop.f32.mrf.mxu0
    %v2589 = vadd.f32 %v2535, %v2588
    %2590 = vdwg.mxu0
    %v2591 = vand.u32 %v463, 4294901760
    %2592 = vmatpush.msra.mxu0 %v2591
    %v2593 = vand.u32 %v462, 4294901760
    %2594 = vmatpush.msra.mxu0 %v2593
    %v2595 = vand.u32 %v461, 4294901760
    %2596 = vmatpush.msra.mxu0 %v2595
    %v2597 = vand.u32 %v460, 4294901760
    %2598 = vmatpush.msra.mxu0 %v2597
    %v2599 = vand.u32 %v459, 4294901760
    %2600 = vmatpush.msra.mxu0 %v2599
    %v2601 = vand.u32 %v458, 4294901760
    %2602 = vmatpush.msra.mxu0 %v2601
    %v2603 = vand.u32 %v457, 4294901760
    %2604 = vmatpush.msra.mxu0 %v2603
    %v2605 = vand.u32 %v456, 4294901760
    %2606 = vmatpush.msra.mxu0 %v2605
    %v2607 = vand.u32 %v455, 4294901760
    %2608 = vmatpush.msra.mxu0 %v2607
    %v2609 = vand.u32 %v454, 4294901760
    %2610 = vmatpush.msra.mxu0 %v2609
    %v2611 = vand.u32 %v453, 4294901760
    %2612 = vmatpush.msra.mxu0 %v2611
    %v2613 = vand.u32 %v452, 4294901760
    %2614 = vmatpush.msra.mxu0 %v2613
    %v2615 = vand.u32 %v451, 4294901760
    %2616 = vmatpush.msra.mxu0 %v2615
    %v2617 = vand.u32 %v450, 4294901760
    %2618 = vmatpush.msra.mxu0 %v2617
    %v2619 = vand.u32 %v449, 4294901760
    %2620 = vmatpush.msra.mxu0 %v2619
    %v2621 = vand.u32 %v448, 4294901760
    %2622 = vmatpush.msra.mxu0 %v2621
    %v2623 = vand.u32 %v336, 4294901760
    %v2624 = vsub.f32 %v336, %v2623
    %v2625 = vand.u32 %v2624, 4294901760
    %2626 = vmatmul.f32.gmra.mxu0 %v2625
    %v2627 = vpop.f32.mrf.mxu0
    %v2628 = vadd.f32 %v2589, %v2627
    %2629 = vdwg.mxu0
    %v2630 = vand.u32 %v463, 4294901760
    %v2631 = vsub.f32 %v463, %v2630
    %v2632 = vand.u32 %v2631, 4294901760
    %2633 = vmatpush.msra.mxu0 %v2632
    %v2634 = vand.u32 %v462, 4294901760
    %v2635 = vsub.f32 %v462, %v2634
    %v2636 = vand.u32 %v2635, 4294901760
    %2637 = vmatpush.msra.mxu0 %v2636
    %v2638 = vand.u32 %v461, 4294901760
    %v2639 = vsub.f32 %v461, %v2638
    %v2640 = vand.u32 %v2639, 4294901760
    %2641 = vmatpush.msra.mxu0 %v2640
    %v2642 = vand.u32 %v460, 4294901760
    %v2643 = vsub.f32 %v460, %v2642
    %v2644 = vand.u32 %v2643, 4294901760
    %2645 = vmatpush.msra.mxu0 %v2644
    %v2646 = vand.u32 %v459, 4294901760
    %v2647 = vsub.f32 %v459, %v2646
    %v2648 = vand.u32 %v2647, 4294901760
    %2649 = vmatpush.msra.mxu0 %v2648
    %v2650 = vand.u32 %v458, 4294901760
    %v2651 = vsub.f32 %v458, %v2650
    %v2652 = vand.u32 %v2651, 4294901760
    %2653 = vmatpush.msra.mxu0 %v2652
    %v2654 = vand.u32 %v457, 4294901760
    %v2655 = vsub.f32 %v457, %v2654
    %v2656 = vand.u32 %v2655, 4294901760
    %2657 = vmatpush.msra.mxu0 %v2656
    %v2658 = vand.u32 %v456, 4294901760
    %v2659 = vsub.f32 %v456, %v2658
    %v2660 = vand.u32 %v2659, 4294901760
    %2661 = vmatpush.msra.mxu0 %v2660
    %v2662 = vand.u32 %v455, 4294901760
    %v2663 = vsub.f32 %v455, %v2662
    %v2664 = vand.u32 %v2663, 4294901760
    %2665 = vmatpush.msra.mxu0 %v2664
    %v2666 = vand.u32 %v454, 4294901760
    %v2667 = vsub.f32 %v454, %v2666
    %v2668 = vand.u32 %v2667, 4294901760
    %2669 = vmatpush.msra.mxu0 %v2668
    %v2670 = vand.u32 %v453, 4294901760
    %v2671 = vsub.f32 %v453, %v2670
    %v2672 = vand.u32 %v2671, 4294901760
    %2673 = vmatpush.msra.mxu0 %v2672
    %v2674 = vand.u32 %v452, 4294901760
    %v2675 = vsub.f32 %v452, %v2674
    %v2676 = vand.u32 %v2675, 4294901760
    %2677 = vmatpush.msra.mxu0 %v2676
    %v2678 = vand.u32 %v451, 4294901760
    %v2679 = vsub.f32 %v451, %v2678
    %v2680 = vand.u32 %v2679, 4294901760
    %2681 = vmatpush.msra.mxu0 %v2680
    %v2682 = vand.u32 %v450, 4294901760
    %v2683 = vsub.f32 %v450, %v2682
    %v2684 = vand.u32 %v2683, 4294901760
    %2685 = vmatpush.msra.mxu0 %v2684
    %v2686 = vand.u32 %v449, 4294901760
    %v2687 = vsub.f32 %v449, %v2686
    %v2688 = vand.u32 %v2687, 4294901760
    %2689 = vmatpush.msra.mxu0 %v2688
    %v2690 = vand.u32 %v448, 4294901760
    %v2691 = vsub.f32 %v448, %v2690
    %v2692 = vand.u32 %v2691, 4294901760
    %2693 = vmatpush.msra.mxu0 %v2692
    %v2694 = vand.u32 %v336, 4294901760
    %2695 = vmatmul.f32.gmra.mxu0 %v2694
    %v2696 = vpop.f32.mrf.mxu0
    %v2697 = vadd.f32 %v2628, %v2696
    %2698 = vdwg.mxu0
    %v2699 = vand.u32 %v463, 4294901760
    %2700 = vmatpush.msra.mxu0 %v2699
    %v2701 = vand.u32 %v462, 4294901760
    %2702 = vmatpush.msra.mxu0 %v2701
    %v2703 = vand.u32 %v461, 4294901760
    %2704 = vmatpush.msra.mxu0 %v2703
    %v2705 = vand.u32 %v460, 4294901760
    %2706 = vmatpush.msra.mxu0 %v2705
    %v2707 = vand.u32 %v459, 4294901760
    %2708 = vmatpush.msra.mxu0 %v2707
    %v2709 = vand.u32 %v458, 4294901760
    %2710 = vmatpush.msra.mxu0 %v2709
    %v2711 = vand.u32 %v457, 4294901760
    %2712 = vmatpush.msra.mxu0 %v2711
    %v2713 = vand.u32 %v456, 4294901760
    %2714 = vmatpush.msra.mxu0 %v2713
    %v2715 = vand.u32 %v455, 4294901760
    %2716 = vmatpush.msra.mxu0 %v2715
    %v2717 = vand.u32 %v454, 4294901760
    %2718 = vmatpush.msra.mxu0 %v2717
    %v2719 = vand.u32 %v453, 4294901760
    %2720 = vmatpush.msra.mxu0 %v2719
    %v2721 = vand.u32 %v452, 4294901760
    %2722 = vmatpush.msra.mxu0 %v2721
    %v2723 = vand.u32 %v451, 4294901760
    %2724 = vmatpush.msra.mxu0 %v2723
    %v2725 = vand.u32 %v450, 4294901760
    %2726 = vmatpush.msra.mxu0 %v2725
    %v2727 = vand.u32 %v449, 4294901760
    %2728 = vmatpush.msra.mxu0 %v2727
    %v2729 = vand.u32 %v448, 4294901760
    %2730 = vmatpush.msra.mxu0 %v2729
    %v2731 = vand.u32 %v336, 4294901760
    %2732 = vmatmul.f32.gmra.mxu0 %v2731
    %v2733 = vpop.f32.mrf.mxu0
    %v2734 = vadd.f32 %v2697, %v2733
    %2735 = vdwg.mxu0
    %2736 = vmatpush.msra.mxu0 0.0
    %2737 = vmatpush.msra.mxu0 0.0
    %2738 = vmatpush.msra.mxu0 0.0
    %2739 = vmatpush.msra.mxu0 0.0
    %2740 = vmatpush.msra.mxu0 0.0
    %2741 = vmatpush.msra.mxu0 0.0
    %2742 = vmatpush.msra.mxu0 0.0
    %2743 = vmatpush.msra.mxu0 0.0
    %2744 = vmatpush.msra.mxu0 0.0
    %2745 = vmatpush.msra.mxu0 0.0
    %2746 = vmatpush.msra.mxu0 0.0
    %2747 = vmatpush.msra.mxu0 0.0
    %2748 = vmatpush.msra.mxu0 0.0
    %2749 = vmatpush.msra.mxu0 0.0
    %v2750 = vand.u32 %v1711, 4294901760
    %2751 = vmatpush.msra.mxu0 %v2750
    %v2752 = vand.u32 %v464, 4294901760
    %2753 = vmatpush.msra.mxu0 %v2752
    %v2754 = vand.u32 %v1708, 4294901760
    %v2755 = vsub.f32 %v1708, %v2754
    %v2756 = vand.u32 %v2755, 4294901760
    %v2757 = vsub.f32 %v2755, %v2756
    %v2758 = vand.u32 %v2757, 4294901760
    %2759 = vmatmul.f32.gmra.mxu0 %v2758
    %v2760 = vpop.f32.mrf.mxu0
    %v2761 = vadd.f32 %v2734, %v2760
    %2762 = vdwg.mxu0
    %2763 = vmatpush.msra.mxu0 0.0
    %2764 = vmatpush.msra.mxu0 0.0
    %2765 = vmatpush.msra.mxu0 0.0
    %2766 = vmatpush.msra.mxu0 0.0
    %2767 = vmatpush.msra.mxu0 0.0
    %2768 = vmatpush.msra.mxu0 0.0
    %2769 = vmatpush.msra.mxu0 0.0
    %2770 = vmatpush.msra.mxu0 0.0
    %2771 = vmatpush.msra.mxu0 0.0
    %2772 = vmatpush.msra.mxu0 0.0
    %2773 = vmatpush.msra.mxu0 0.0
    %2774 = vmatpush.msra.mxu0 0.0
    %2775 = vmatpush.msra.mxu0 0.0
    %2776 = vmatpush.msra.mxu0 0.0
    %v2777 = vand.u32 %v1711, 4294901760
    %v2778 = vsub.f32 %v1711, %v2777
    %v2779 = vand.u32 %v2778, 4294901760
    %v2780 = vsub.f32 %v2778, %v2779
    %v2781 = vand.u32 %v2780, 4294901760
    %2782 = vmatpush.msra.mxu0 %v2781
    %v2783 = vand.u32 %v464, 4294901760
    %v2784 = vsub.f32 %v464, %v2783
    %v2785 = vand.u32 %v2784, 4294901760
    %v2786 = vsub.f32 %v2784, %v2785
    %v2787 = vand.u32 %v2786, 4294901760
    %2788 = vmatpush.msra.mxu0 %v2787
    %v2789 = vand.u32 %v1708, 4294901760
    %2790 = vmatmul.f32.gmra.mxu0 %v2789
    %v2791 = vpop.f32.mrf.mxu0
    %v2792 = vadd.f32 %v2761, %v2791
    %2793 = vdwg.mxu0
    %2794 = vmatpush.msra.mxu0 0.0
    %2795 = vmatpush.msra.mxu0 0.0
    %2796 = vmatpush.msra.mxu0 0.0
    %2797 = vmatpush.msra.mxu0 0.0
    %2798 = vmatpush.msra.mxu0 0.0
    %2799 = vmatpush.msra.mxu0 0.0
    %2800 = vmatpush.msra.mxu0 0.0
    %2801 = vmatpush.msra.mxu0 0.0
    %2802 = vmatpush.msra.mxu0 0.0
    %2803 = vmatpush.msra.mxu0 0.0
    %2804 = vmatpush.msra.mxu0 0.0
    %2805 = vmatpush.msra.mxu0 0.0
    %2806 = vmatpush.msra.mxu0 0.0
    %2807 = vmatpush.msra.mxu0 0.0
    %v2808 = vand.u32 %v1711, 4294901760
    %v2809 = vsub.f32 %v1711, %v2808
    %2810 = vmatpush.msra.mxu0 %v2809
    %v2811 = vand.u32 %v464, 4294901760
    %v2812 = vsub.f32 %v464, %v2811
    %2813 = vmatpush.msra.mxu0 %v2812
    %v2814 = vand.u32 %v1708, 4294901760
    %v2815 = vsub.f32 %v1708, %v2814
    %2816 = vmatmul.f32.gmra.mxu0 %v2815
    %v2817 = vpop.f32.mrf.mxu0
    %v2818 = vadd.f32 %v2792, %v2817
    %2819 = vdwg.mxu0
    %2820 = vmatpush.msra.mxu0 0.0
    %2821 = vmatpush.msra.mxu0 0.0
    %2822 = vmatpush.msra.mxu0 0.0
    %2823 = vmatpush.msra.mxu0 0.0
    %2824 = vmatpush.msra.mxu0 0.0
    %2825 = vmatpush.msra.mxu0 0.0
    %2826 = vmatpush.msra.mxu0 0.0
    %2827 = vmatpush.msra.mxu0 0.0
    %2828 = vmatpush.msra.mxu0 0.0
    %2829 = vmatpush.msra.mxu0 0.0
    %2830 = vmatpush.msra.mxu0 0.0
    %2831 = vmatpush.msra.mxu0 0.0
    %2832 = vmatpush.msra.mxu0 0.0
    %2833 = vmatpush.msra.mxu0 0.0
    %v2834 = vand.u32 %v1711, 4294901760
    %2835 = vmatpush.msra.mxu0 %v2834
    %v2836 = vand.u32 %v464, 4294901760
    %2837 = vmatpush.msra.mxu0 %v2836
    %v2838 = vand.u32 %v1708, 4294901760
    %v2839 = vsub.f32 %v1708, %v2838
    %v2840 = vand.u32 %v2839, 4294901760
    %2841 = vmatmul.f32.gmra.mxu0 %v2840
    %v2842 = vpop.f32.mrf.mxu0
    %v2843 = vadd.f32 %v2818, %v2842
    %2844 = vdwg.mxu0
    %2845 = vmatpush.msra.mxu0 0.0
    %2846 = vmatpush.msra.mxu0 0.0
    %2847 = vmatpush.msra.mxu0 0.0
    %2848 = vmatpush.msra.mxu0 0.0
    %2849 = vmatpush.msra.mxu0 0.0
    %2850 = vmatpush.msra.mxu0 0.0
    %2851 = vmatpush.msra.mxu0 0.0
    %2852 = vmatpush.msra.mxu0 0.0
    %2853 = vmatpush.msra.mxu0 0.0
    %2854 = vmatpush.msra.mxu0 0.0
    %2855 = vmatpush.msra.mxu0 0.0
    %2856 = vmatpush.msra.mxu0 0.0
    %2857 = vmatpush.msra.mxu0 0.0
    %2858 = vmatpush.msra.mxu0 0.0
    %v2859 = vand.u32 %v1711, 4294901760
    %v2860 = vsub.f32 %v1711, %v2859
    %v2861 = vand.u32 %v2860, 4294901760
    %2862 = vmatpush.msra.mxu0 %v2861
    %v2863 = vand.u32 %v464, 4294901760
    %v2864 = vsub.f32 %v464, %v2863
    %v2865 = vand.u32 %v2864, 4294901760
    %2866 = vmatpush.msra.mxu0 %v2865
    %v2867 = vand.u32 %v1708, 4294901760
    %2868 = vmatmul.f32.gmra.mxu0 %v2867
    %v2869 = vpop.f32.mrf.mxu0
    %v2870 = vadd.f32 %v2843, %v2869
    %2871 = vdwg.mxu0
    %2872 = vmatpush.msra.mxu0 0.0
    %2873 = vmatpush.msra.mxu0 0.0
    %2874 = vmatpush.msra.mxu0 0.0
    %2875 = vmatpush.msra.mxu0 0.0
    %2876 = vmatpush.msra.mxu0 0.0
    %2877 = vmatpush.msra.mxu0 0.0
    %2878 = vmatpush.msra.mxu0 0.0
    %2879 = vmatpush.msra.mxu0 0.0
    %2880 = vmatpush.msra.mxu0 0.0
    %2881 = vmatpush.msra.mxu0 0.0
    %2882 = vmatpush.msra.mxu0 0.0
    %2883 = vmatpush.msra.mxu0 0.0
    %2884 = vmatpush.msra.mxu0 0.0
    %2885 = vmatpush.msra.mxu0 0.0
    %v2886 = vand.u32 %v1711, 4294901760
    %2887 = vmatpush.msra.mxu0 %v2886
    %v2888 = vand.u32 %v464, 4294901760
    %2889 = vmatpush.msra.mxu0 %v2888
    %v2890 = vand.u32 %v1708, 4294901760
    %2891 = vmatmul.f32.gmra.mxu0 %v2890
    %v2892 = vpop.f32.mrf.mxu0
    %v2893 = vadd.f32 %v2870, %v2892
    %2894 = vdwg.mxu0
    %s2895 = scalar_lea.vmem %s5, 800
    %v2896 = vld [vmem:[%s2895] sm:$0xff]
    %v2897 = vld [vmem:[%s2895 + $0x8] sm:$0xff]
    %v2898 = vld [vmem:[%s2895 + $0x10] sm:$0xff]
    %v2899 = vld [vmem:[%s2895 + $0x18] sm:$0xff]
    %v2900 = vld [vmem:[%s2895 + $0x20] sm:$0xff]
    %v2901 = vld [vmem:[%s2895 + $0x28] sm:$0xff]
    %v2902 = vld [vmem:[%s2895 + $0x30] sm:$0xff]
    %v2903 = vld [vmem:[%s2895 + $0x38] sm:$0xff]
    %v2904 = vld [vmem:[%s2895 + $0x40] sm:$0xff]
    %v2905 = vld [vmem:[%s2895 + $0x48] sm:$0xff]
    %v2906 = vld [vmem:[%s2895 + $0x50] sm:$0xff]
    %v2907 = vld [vmem:[%s2895 + $0x58] sm:$0xff]
    %v2908 = vld [vmem:[%s2895 + $0x60] sm:$0xff]
    %v2909 = vld [vmem:[%s2895 + $0x68] sm:$0xff]
    %v2910 = vld [vmem:[%s2895 + $0x70] sm:$0xff]
    %v2911 = vld [vmem:[%s2895 + $0x78] sm:$0xff]
    %v2912 = vld [vmem:[%s2895 + $0x80] sm:$0xff]
    %v2913 = vld [vmem:[%s2895 + $0x88] sm:$0xff]
    %v2914 = vld [vmem:[%s2895 + $0x90] sm:$0xff]
    %v2915 = vld [vmem:[%s2895 + $0x98] sm:$0xff]
    %v2916 = vld [vmem:[%s2895 + $0xa0] sm:$0xff]
    %v2917 = vld [vmem:[%s2895 + $0xa8] sm:$0xff]
    %v2918 = vld [vmem:[%s2895 + $0xb0] sm:$0xff]
    %v2919 = vld [vmem:[%s2895 + $0xb8] sm:$0xff]
    %v2920 = vld [vmem:[%s2895 + $0xc0] sm:$0xff]
    %v2921 = vld [vmem:[%s2895 + $0xc8] sm:$0xff]
    %v2922 = vld [vmem:[%s2895 + $0xd0] sm:$0xff]
    %v2923 = vld [vmem:[%s2895 + $0xd8] sm:$0xff]
    %v2924 = vld [vmem:[%s2895 + $0xe0] sm:$0xff]
    %v2925 = vld [vmem:[%s2895 + $0xe8] sm:$0xff]
    %v2926 = vld [vmem:[%s2895 + $0xf0] sm:$0xff]
    %v2927 = vld [vmem:[%s2895 + $0xf8] sm:$0xff]
    %v2928 = vld [vmem:[%s2895 + $0x100] sm:$0xff]
    %v2929 = vld [vmem:[%s2895 + $0x108] sm:$0xff]
    %v2930 = vld [vmem:[%s2895 + $0x110] sm:$0xff]
    %v2931 = vld [vmem:[%s2895 + $0x118] sm:$0xff]
    %v2932 = vld [vmem:[%s2895 + $0x120] sm:$0xff]
    %v2933 = vld [vmem:[%s2895 + $0x128] sm:$0xff]
    %v2934 = vld [vmem:[%s2895 + $0x130] sm:$0xff]
    %v2935 = vld [vmem:[%s2895 + $0x138] sm:$0xff]
    %v2936 = vld [vmem:[%s2895 + $0x140] sm:$0xff]
    %v2937 = vld [vmem:[%s2895 + $0x148] sm:$0xff]
    %v2938 = vld [vmem:[%s2895 + $0x150] sm:$0xff]
    %v2939 = vld [vmem:[%s2895 + $0x158] sm:$0xff]
    %v2940 = vld [vmem:[%s2895 + $0x160] sm:$0xff]
    %v2941 = vld [vmem:[%s2895 + $0x168] sm:$0xff]
    %v2942 = vld [vmem:[%s2895 + $0x170] sm:$0xff]
    %v2943 = vld [vmem:[%s2895 + $0x178] sm:$0xff]
    %v2944 = vld [vmem:[%s2895 + $0x180] sm:$0xff]
    %v2945 = vld [vmem:[%s2895 + $0x188] sm:$0xf]
    %v2947 = vsel %vm517, %v389, 0
    %v2950 = vsel %vm521, %v2945, 0
    %v2952 = vand.u32 %v2911, 4294901760
    %2953 = vmatpush.msra.mxu0 %v2952
    %v2954 = vand.u32 %v2910, 4294901760
    %2955 = vmatpush.msra.mxu0 %v2954
    %v2956 = vand.u32 %v2909, 4294901760
    %2957 = vmatpush.msra.mxu0 %v2956
    %v2958 = vand.u32 %v2908, 4294901760
    %2959 = vmatpush.msra.mxu0 %v2958
    %v2960 = vand.u32 %v2907, 4294901760
    %2961 = vmatpush.msra.mxu0 %v2960
    %v2962 = vand.u32 %v2906, 4294901760
    %2963 = vmatpush.msra.mxu0 %v2962
    %v2964 = vand.u32 %v2905, 4294901760
    %2965 = vmatpush.msra.mxu0 %v2964
    %v2966 = vand.u32 %v2904, 4294901760
    %2967 = vmatpush.msra.mxu0 %v2966
    %v2968 = vand.u32 %v2903, 4294901760
    %2969 = vmatpush.msra.mxu0 %v2968
    %v2970 = vand.u32 %v2902, 4294901760
    %2971 = vmatpush.msra.mxu0 %v2970
    %v2972 = vand.u32 %v2901, 4294901760
    %2973 = vmatpush.msra.mxu0 %v2972
    %v2974 = vand.u32 %v2900, 4294901760
    %2975 = vmatpush.msra.mxu0 %v2974
    %v2976 = vand.u32 %v2899, 4294901760
    %2977 = vmatpush.msra.mxu0 %v2976
    %v2978 = vand.u32 %v2898, 4294901760
    %2979 = vmatpush.msra.mxu0 %v2978
    %v2980 = vand.u32 %v2897, 4294901760
    %2981 = vmatpush.msra.mxu0 %v2980
    %v2982 = vand.u32 %v2896, 4294901760
    %2983 = vmatpush.msra.mxu0 %v2982
    %v2984 = vand.u32 %v386, 4294901760
    %v2985 = vsub.f32 %v386, %v2984
    %v2986 = vand.u32 %v2985, 4294901760
    %v2987 = vsub.f32 %v2985, %v2986
    %v2988 = vand.u32 %v2987, 4294901760
    %2989 = vmatmul.f32.gmra.mxu0 %v2988
    %v2990 = vpop.f32.mrf.mxu0
    %v2991 = vadd.f32 0.0, %v2990
    %2992 = vdwg.mxu0
    %v2993 = vand.u32 %v2911, 4294901760
    %v2994 = vsub.f32 %v2911, %v2993
    %v2995 = vand.u32 %v2994, 4294901760
    %v2996 = vsub.f32 %v2994, %v2995
    %v2997 = vand.u32 %v2996, 4294901760
    %2998 = vmatpush.msra.mxu0 %v2997
    %v2999 = vand.u32 %v2910, 4294901760
    %v3000 = vsub.f32 %v2910, %v2999
    %v3001 = vand.u32 %v3000, 4294901760
    %v3002 = vsub.f32 %v3000, %v3001
    %v3003 = vand.u32 %v3002, 4294901760
    %3004 = vmatpush.msra.mxu0 %v3003
    %v3005 = vand.u32 %v2909, 4294901760
    %v3006 = vsub.f32 %v2909, %v3005
    %v3007 = vand.u32 %v3006, 4294901760
    %v3008 = vsub.f32 %v3006, %v3007
    %v3009 = vand.u32 %v3008, 4294901760
    %3010 = vmatpush.msra.mxu0 %v3009
    %v3011 = vand.u32 %v2908, 4294901760
    %v3012 = vsub.f32 %v2908, %v3011
    %v3013 = vand.u32 %v3012, 4294901760
    %v3014 = vsub.f32 %v3012, %v3013
    %v3015 = vand.u32 %v3014, 4294901760
    %3016 = vmatpush.msra.mxu0 %v3015
    %v3017 = vand.u32 %v2907, 4294901760
    %v3018 = vsub.f32 %v2907, %v3017
    %v3019 = vand.u32 %v3018, 4294901760
    %v3020 = vsub.f32 %v3018, %v3019
    %v3021 = vand.u32 %v3020, 4294901760
    %3022 = vmatpush.msra.mxu0 %v3021
    %v3023 = vand.u32 %v2906, 4294901760
    %v3024 = vsub.f32 %v2906, %v3023
    %v3025 = vand.u32 %v3024, 4294901760
    %v3026 = vsub.f32 %v3024, %v3025
    %v3027 = vand.u32 %v3026, 4294901760
    %3028 = vmatpush.msra.mxu0 %v3027
    %v3029 = vand.u32 %v2905, 4294901760
    %v3030 = vsub.f32 %v2905, %v3029
    %v3031 = vand.u32 %v3030, 4294901760
    %v3032 = vsub.f32 %v3030, %v3031
    %v3033 = vand.u32 %v3032, 4294901760
    %3034 = vmatpush.msra.mxu0 %v3033
    %v3035 = vand.u32 %v2904, 4294901760
    %v3036 = vsub.f32 %v2904, %v3035
    %v3037 = vand.u32 %v3036, 4294901760
    %v3038 = vsub.f32 %v3036, %v3037
    %v3039 = vand.u32 %v3038, 4294901760
    %3040 = vmatpush.msra.mxu0 %v3039
    %v3041 = vand.u32 %v2903, 4294901760
    %v3042 = vsub.f32 %v2903, %v3041
    %v3043 = vand.u32 %v3042, 4294901760
    %v3044 = vsub.f32 %v3042, %v3043
    %v3045 = vand.u32 %v3044, 4294901760
    %3046 = vmatpush.msra.mxu0 %v3045
    %v3047 = vand.u32 %v2902, 4294901760
    %v3048 = vsub.f32 %v2902, %v3047
    %v3049 = vand.u32 %v3048, 4294901760
    %v3050 = vsub.f32 %v3048, %v3049
    %v3051 = vand.u32 %v3050, 4294901760
    %3052 = vmatpush.msra.mxu0 %v3051
    %v3053 = vand.u32 %v2901, 4294901760
    %v3054 = vsub.f32 %v2901, %v3053
    %v3055 = vand.u32 %v3054, 4294901760
    %v3056 = vsub.f32 %v3054, %v3055
    %v3057 = vand.u32 %v3056, 4294901760
    %3058 = vmatpush.msra.mxu0 %v3057
    %v3059 = vand.u32 %v2900, 4294901760
    %v3060 = vsub.f32 %v2900, %v3059
    %v3061 = vand.u32 %v3060, 4294901760
    %v3062 = vsub.f32 %v3060, %v3061
    %v3063 = vand.u32 %v3062, 4294901760
    %3064 = vmatpush.msra.mxu0 %v3063
    %v3065 = vand.u32 %v2899, 4294901760
    %v3066 = vsub.f32 %v2899, %v3065
    %v3067 = vand.u32 %v3066, 4294901760
    %v3068 = vsub.f32 %v3066, %v3067
    %v3069 = vand.u32 %v3068, 4294901760
    %3070 = vmatpush.msra.mxu0 %v3069
    %v3071 = vand.u32 %v2898, 4294901760
    %v3072 = vsub.f32 %v2898, %v3071
    %v3073 = vand.u32 %v3072, 4294901760
    %v3074 = vsub.f32 %v3072, %v3073
    %v3075 = vand.u32 %v3074, 4294901760
    %3076 = vmatpush.msra.mxu0 %v3075
    %v3077 = vand.u32 %v2897, 4294901760
    %v3078 = vsub.f32 %v2897, %v3077
    %v3079 = vand.u32 %v3078, 4294901760
    %v3080 = vsub.f32 %v3078, %v3079
    %v3081 = vand.u32 %v3080, 4294901760
    %3082 = vmatpush.msra.mxu0 %v3081
    %v3083 = vand.u32 %v2896, 4294901760
    %v3084 = vsub.f32 %v2896, %v3083
    %v3085 = vand.u32 %v3084, 4294901760
    %v3086 = vsub.f32 %v3084, %v3085
    %v3087 = vand.u32 %v3086, 4294901760
    %3088 = vmatpush.msra.mxu0 %v3087
    %v3089 = vand.u32 %v386, 4294901760
    %3090 = vmatmul.f32.gmra.mxu0 %v3089
    %v3091 = vpop.f32.mrf.mxu0
    %v3092 = vadd.f32 %v2991, %v3091
    %3093 = vdwg.mxu0
    %v3094 = vand.u32 %v2911, 4294901760
    %v3095 = vsub.f32 %v2911, %v3094
    %3096 = vmatpush.msra.mxu0 %v3095
    %v3097 = vand.u32 %v2910, 4294901760
    %v3098 = vsub.f32 %v2910, %v3097
    %3099 = vmatpush.msra.mxu0 %v3098
    %v3100 = vand.u32 %v2909, 4294901760
    %v3101 = vsub.f32 %v2909, %v3100
    %3102 = vmatpush.msra.mxu0 %v3101
    %v3103 = vand.u32 %v2908, 4294901760
    %v3104 = vsub.f32 %v2908, %v3103
    %3105 = vmatpush.msra.mxu0 %v3104
    %v3106 = vand.u32 %v2907, 4294901760
    %v3107 = vsub.f32 %v2907, %v3106
    %3108 = vmatpush.msra.mxu0 %v3107
    %v3109 = vand.u32 %v2906, 4294901760
    %v3110 = vsub.f32 %v2906, %v3109
    %3111 = vmatpush.msra.mxu0 %v3110
    %v3112 = vand.u32 %v2905, 4294901760
    %v3113 = vsub.f32 %v2905, %v3112
    %3114 = vmatpush.msra.mxu0 %v3113
    %v3115 = vand.u32 %v2904, 4294901760
    %v3116 = vsub.f32 %v2904, %v3115
    %3117 = vmatpush.msra.mxu0 %v3116
    %v3118 = vand.u32 %v2903, 4294901760
    %v3119 = vsub.f32 %v2903, %v3118
    %3120 = vmatpush.msra.mxu0 %v3119
    %v3121 = vand.u32 %v2902, 4294901760
    %v3122 = vsub.f32 %v2902, %v3121
    %3123 = vmatpush.msra.mxu0 %v3122
    %v3124 = vand.u32 %v2901, 4294901760
    %v3125 = vsub.f32 %v2901, %v3124
    %3126 = vmatpush.msra.mxu0 %v3125
    %v3127 = vand.u32 %v2900, 4294901760
    %v3128 = vsub.f32 %v2900, %v3127
    %3129 = vmatpush.msra.mxu0 %v3128
    %v3130 = vand.u32 %v2899, 4294901760
    %v3131 = vsub.f32 %v2899, %v3130
    %3132 = vmatpush.msra.mxu0 %v3131
    %v3133 = vand.u32 %v2898, 4294901760
    %v3134 = vsub.f32 %v2898, %v3133
    %3135 = vmatpush.msra.mxu0 %v3134
    %v3136 = vand.u32 %v2897, 4294901760
    %v3137 = vsub.f32 %v2897, %v3136
    %3138 = vmatpush.msra.mxu0 %v3137
    %v3139 = vand.u32 %v2896, 4294901760
    %v3140 = vsub.f32 %v2896, %v3139
    %3141 = vmatpush.msra.mxu0 %v3140
    %v3142 = vand.u32 %v386, 4294901760
    %v3143 = vsub.f32 %v386, %v3142
    %3144 = vmatmul.f32.gmra.mxu0 %v3143
    %v3145 = vpop.f32.mrf.mxu0
    %v3146 = vadd.f32 %v3092, %v3145
    %3147 = vdwg.mxu0
    %v3148 = vand.u32 %v2911, 4294901760
    %3149 = vmatpush.msra.mxu0 %v3148
    %v3150 = vand.u32 %v2910, 4294901760
    %3151 = vmatpush.msra.mxu0 %v3150
    %v3152 = vand.u32 %v2909, 4294901760
    %3153 = vmatpush.msra.mxu0 %v3152
    %v3154 = vand.u32 %v2908, 4294901760
    %3155 = vmatpush.msra.mxu0 %v3154
    %v3156 = vand.u32 %v2907, 4294901760
    %3157 = vmatpush.msra.mxu0 %v3156
    %v3158 = vand.u32 %v2906, 4294901760
    %3159 = vmatpush.msra.mxu0 %v3158
    %v3160 = vand.u32 %v2905, 4294901760
    %3161 = vmatpush.msra.mxu0 %v3160
    %v3162 = vand.u32 %v2904, 4294901760
    %3163 = vmatpush.msra.mxu0 %v3162
    %v3164 = vand.u32 %v2903, 4294901760
    %3165 = vmatpush.msra.mxu0 %v3164
    %v3166 = vand.u32 %v2902, 4294901760
    %3167 = vmatpush.msra.mxu0 %v3166
    %v3168 = vand.u32 %v2901, 4294901760
    %3169 = vmatpush.msra.mxu0 %v3168
    %v3170 = vand.u32 %v2900, 4294901760
    %3171 = vmatpush.msra.mxu0 %v3170
    %v3172 = vand.u32 %v2899, 4294901760
    %3173 = vmatpush.msra.mxu0 %v3172
    %v3174 = vand.u32 %v2898, 4294901760
    %3175 = vmatpush.msra.mxu0 %v3174
    %v3176 = vand.u32 %v2897, 4294901760
    %3177 = vmatpush.msra.mxu0 %v3176
    %v3178 = vand.u32 %v2896, 4294901760
    %3179 = vmatpush.msra.mxu0 %v3178
    %v3180 = vand.u32 %v386, 4294901760
    %v3181 = vsub.f32 %v386, %v3180
    %v3182 = vand.u32 %v3181, 4294901760
    %3183 = vmatmul.f32.gmra.mxu0 %v3182
    %v3184 = vpop.f32.mrf.mxu0
    %v3185 = vadd.f32 %v3146, %v3184
    %3186 = vdwg.mxu0
    %v3187 = vand.u32 %v2911, 4294901760
    %v3188 = vsub.f32 %v2911, %v3187
    %v3189 = vand.u32 %v3188, 4294901760
    %3190 = vmatpush.msra.mxu0 %v3189
    %v3191 = vand.u32 %v2910, 4294901760
    %v3192 = vsub.f32 %v2910, %v3191
    %v3193 = vand.u32 %v3192, 4294901760
    %3194 = vmatpush.msra.mxu0 %v3193
    %v3195 = vand.u32 %v2909, 4294901760
    %v3196 = vsub.f32 %v2909, %v3195
    %v3197 = vand.u32 %v3196, 4294901760
    %3198 = vmatpush.msra.mxu0 %v3197
    %v3199 = vand.u32 %v2908, 4294901760
    %v3200 = vsub.f32 %v2908, %v3199
    %v3201 = vand.u32 %v3200, 4294901760
    %3202 = vmatpush.msra.mxu0 %v3201
    %v3203 = vand.u32 %v2907, 4294901760
    %v3204 = vsub.f32 %v2907, %v3203
    %v3205 = vand.u32 %v3204, 4294901760
    %3206 = vmatpush.msra.mxu0 %v3205
    %v3207 = vand.u32 %v2906, 4294901760
    %v3208 = vsub.f32 %v2906, %v3207
    %v3209 = vand.u32 %v3208, 4294901760
    %3210 = vmatpush.msra.mxu0 %v3209
    %v3211 = vand.u32 %v2905, 4294901760
    %v3212 = vsub.f32 %v2905, %v3211
    %v3213 = vand.u32 %v3212, 4294901760
    %3214 = vmatpush.msra.mxu0 %v3213
    %v3215 = vand.u32 %v2904, 4294901760
    %v3216 = vsub.f32 %v2904, %v3215
    %v3217 = vand.u32 %v3216, 4294901760
    %3218 = vmatpush.msra.mxu0 %v3217
    %v3219 = vand.u32 %v2903, 4294901760
    %v3220 = vsub.f32 %v2903, %v3219
    %v3221 = vand.u32 %v3220, 4294901760
    %3222 = vmatpush.msra.mxu0 %v3221
    %v3223 = vand.u32 %v2902, 4294901760
    %v3224 = vsub.f32 %v2902, %v3223
    %v3225 = vand.u32 %v3224, 4294901760
    %3226 = vmatpush.msra.mxu0 %v3225
    %v3227 = vand.u32 %v2901, 4294901760
    %v3228 = vsub.f32 %v2901, %v3227
    %v3229 = vand.u32 %v3228, 4294901760
    %3230 = vmatpush.msra.mxu0 %v3229
    %v3231 = vand.u32 %v2900, 4294901760
    %v3232 = vsub.f32 %v2900, %v3231
    %v3233 = vand.u32 %v3232, 4294901760
    %3234 = vmatpush.msra.mxu0 %v3233
    %v3235 = vand.u32 %v2899, 4294901760
    %v3236 = vsub.f32 %v2899, %v3235
    %v3237 = vand.u32 %v3236, 4294901760
    %3238 = vmatpush.msra.mxu0 %v3237
    %v3239 = vand.u32 %v2898, 4294901760
    %v3240 = vsub.f32 %v2898, %v3239
    %v3241 = vand.u32 %v3240, 4294901760
    %3242 = vmatpush.msra.mxu0 %v3241
    %v3243 = vand.u32 %v2897, 4294901760
    %v3244 = vsub.f32 %v2897, %v3243
    %v3245 = vand.u32 %v3244, 4294901760
    %3246 = vmatpush.msra.mxu0 %v3245
    %v3247 = vand.u32 %v2896, 4294901760
    %v3248 = vsub.f32 %v2896, %v3247
    %v3249 = vand.u32 %v3248, 4294901760
    %3250 = vmatpush.msra.mxu0 %v3249
    %v3251 = vand.u32 %v386, 4294901760
    %3252 = vmatmul.f32.gmra.mxu0 %v3251
    %v3253 = vpop.f32.mrf.mxu0
    %v3254 = vadd.f32 %v3185, %v3253
    %3255 = vdwg.mxu0
    %v3256 = vand.u32 %v2911, 4294901760
    %3257 = vmatpush.msra.mxu0 %v3256
    %v3258 = vand.u32 %v2910, 4294901760
    %3259 = vmatpush.msra.mxu0 %v3258
    %v3260 = vand.u32 %v2909, 4294901760
    %3261 = vmatpush.msra.mxu0 %v3260
    %v3262 = vand.u32 %v2908, 4294901760
    %3263 = vmatpush.msra.mxu0 %v3262
    %v3264 = vand.u32 %v2907, 4294901760
    %3265 = vmatpush.msra.mxu0 %v3264
    %v3266 = vand.u32 %v2906, 4294901760
    %3267 = vmatpush.msra.mxu0 %v3266
    %v3268 = vand.u32 %v2905, 4294901760
    %3269 = vmatpush.msra.mxu0 %v3268
    %v3270 = vand.u32 %v2904, 4294901760
    %3271 = vmatpush.msra.mxu0 %v3270
    %v3272 = vand.u32 %v2903, 4294901760
    %3273 = vmatpush.msra.mxu0 %v3272
    %v3274 = vand.u32 %v2902, 4294901760
    %3275 = vmatpush.msra.mxu0 %v3274
    %v3276 = vand.u32 %v2901, 4294901760
    %3277 = vmatpush.msra.mxu0 %v3276
    %v3278 = vand.u32 %v2900, 4294901760
    %3279 = vmatpush.msra.mxu0 %v3278
    %v3280 = vand.u32 %v2899, 4294901760
    %3281 = vmatpush.msra.mxu0 %v3280
    %v3282 = vand.u32 %v2898, 4294901760
    %3283 = vmatpush.msra.mxu0 %v3282
    %v3284 = vand.u32 %v2897, 4294901760
    %3285 = vmatpush.msra.mxu0 %v3284
    %v3286 = vand.u32 %v2896, 4294901760
    %3287 = vmatpush.msra.mxu0 %v3286
    %v3288 = vand.u32 %v386, 4294901760
    %3289 = vmatmul.f32.gmra.mxu0 %v3288
    %v3290 = vpop.f32.mrf.mxu0
    %v3291 = vadd.f32 %v3254, %v3290
    %3292 = vdwg.mxu0
    %v3293 = vand.u32 %v2927, 4294901760
    %3294 = vmatpush.msra.mxu0 %v3293
    %v3295 = vand.u32 %v2926, 4294901760
    %3296 = vmatpush.msra.mxu0 %v3295
    %v3297 = vand.u32 %v2925, 4294901760
    %3298 = vmatpush.msra.mxu0 %v3297
    %v3299 = vand.u32 %v2924, 4294901760
    %3300 = vmatpush.msra.mxu0 %v3299
    %v3301 = vand.u32 %v2923, 4294901760
    %3302 = vmatpush.msra.mxu0 %v3301
    %v3303 = vand.u32 %v2922, 4294901760
    %3304 = vmatpush.msra.mxu0 %v3303
    %v3305 = vand.u32 %v2921, 4294901760
    %3306 = vmatpush.msra.mxu0 %v3305
    %v3307 = vand.u32 %v2920, 4294901760
    %3308 = vmatpush.msra.mxu0 %v3307
    %v3309 = vand.u32 %v2919, 4294901760
    %3310 = vmatpush.msra.mxu0 %v3309
    %v3311 = vand.u32 %v2918, 4294901760
    %3312 = vmatpush.msra.mxu0 %v3311
    %v3313 = vand.u32 %v2917, 4294901760
    %3314 = vmatpush.msra.mxu0 %v3313
    %v3315 = vand.u32 %v2916, 4294901760
    %3316 = vmatpush.msra.mxu0 %v3315
    %v3317 = vand.u32 %v2915, 4294901760
    %3318 = vmatpush.msra.mxu0 %v3317
    %v3319 = vand.u32 %v2914, 4294901760
    %3320 = vmatpush.msra.mxu0 %v3319
    %v3321 = vand.u32 %v2913, 4294901760
    %3322 = vmatpush.msra.mxu0 %v3321
    %v3323 = vand.u32 %v2912, 4294901760
    %3324 = vmatpush.msra.mxu0 %v3323
    %v3325 = vand.u32 %v387, 4294901760
    %v3326 = vsub.f32 %v387, %v3325
    %v3327 = vand.u32 %v3326, 4294901760
    %v3328 = vsub.f32 %v3326, %v3327
    %v3329 = vand.u32 %v3328, 4294901760
    %3330 = vmatmul.f32.gmra.mxu0 %v3329
    %v3331 = vpop.f32.mrf.mxu0
    %v3332 = vadd.f32 %v3291, %v3331
    %3333 = vdwg.mxu0
    %v3334 = vand.u32 %v2927, 4294901760
    %v3335 = vsub.f32 %v2927, %v3334
    %v3336 = vand.u32 %v3335, 4294901760
    %v3337 = vsub.f32 %v3335, %v3336
    %v3338 = vand.u32 %v3337, 4294901760
    %3339 = vmatpush.msra.mxu0 %v3338
    %v3340 = vand.u32 %v2926, 4294901760
    %v3341 = vsub.f32 %v2926, %v3340
    %v3342 = vand.u32 %v3341, 4294901760
    %v3343 = vsub.f32 %v3341, %v3342
    %v3344 = vand.u32 %v3343, 4294901760
    %3345 = vmatpush.msra.mxu0 %v3344
    %v3346 = vand.u32 %v2925, 4294901760
    %v3347 = vsub.f32 %v2925, %v3346
    %v3348 = vand.u32 %v3347, 4294901760
    %v3349 = vsub.f32 %v3347, %v3348
    %v3350 = vand.u32 %v3349, 4294901760
    %3351 = vmatpush.msra.mxu0 %v3350
    %v3352 = vand.u32 %v2924, 4294901760
    %v3353 = vsub.f32 %v2924, %v3352
    %v3354 = vand.u32 %v3353, 4294901760
    %v3355 = vsub.f32 %v3353, %v3354
    %v3356 = vand.u32 %v3355, 4294901760
    %3357 = vmatpush.msra.mxu0 %v3356
    %v3358 = vand.u32 %v2923, 4294901760
    %v3359 = vsub.f32 %v2923, %v3358
    %v3360 = vand.u32 %v3359, 4294901760
    %v3361 = vsub.f32 %v3359, %v3360
    %v3362 = vand.u32 %v3361, 4294901760
    %3363 = vmatpush.msra.mxu0 %v3362
    %v3364 = vand.u32 %v2922, 4294901760
    %v3365 = vsub.f32 %v2922, %v3364
    %v3366 = vand.u32 %v3365, 4294901760
    %v3367 = vsub.f32 %v3365, %v3366
    %v3368 = vand.u32 %v3367, 4294901760
    %3369 = vmatpush.msra.mxu0 %v3368
    %v3370 = vand.u32 %v2921, 4294901760
    %v3371 = vsub.f32 %v2921, %v3370
    %v3372 = vand.u32 %v3371, 4294901760
    %v3373 = vsub.f32 %v3371, %v3372
    %v3374 = vand.u32 %v3373, 4294901760
    %3375 = vmatpush.msra.mxu0 %v3374
    %v3376 = vand.u32 %v2920, 4294901760
    %v3377 = vsub.f32 %v2920, %v3376
    %v3378 = vand.u32 %v3377, 4294901760
    %v3379 = vsub.f32 %v3377, %v3378
    %v3380 = vand.u32 %v3379, 4294901760
    %3381 = vmatpush.msra.mxu0 %v3380
    %v3382 = vand.u32 %v2919, 4294901760
    %v3383 = vsub.f32 %v2919, %v3382
    %v3384 = vand.u32 %v3383, 4294901760
    %v3385 = vsub.f32 %v3383, %v3384
    %v3386 = vand.u32 %v3385, 4294901760
    %3387 = vmatpush.msra.mxu0 %v3386
    %v3388 = vand.u32 %v2918, 4294901760
    %v3389 = vsub.f32 %v2918, %v3388
    %v3390 = vand.u32 %v3389, 4294901760
    %v3391 = vsub.f32 %v3389, %v3390
    %v3392 = vand.u32 %v3391, 4294901760
    %3393 = vmatpush.msra.mxu0 %v3392
    %v3394 = vand.u32 %v2917, 4294901760
    %v3395 = vsub.f32 %v2917, %v3394
    %v3396 = vand.u32 %v3395, 4294901760
    %v3397 = vsub.f32 %v3395, %v3396
    %v3398 = vand.u32 %v3397, 4294901760
    %3399 = vmatpush.msra.mxu0 %v3398
    %v3400 = vand.u32 %v2916, 4294901760
    %v3401 = vsub.f32 %v2916, %v3400
    %v3402 = vand.u32 %v3401, 4294901760
    %v3403 = vsub.f32 %v3401, %v3402
    %v3404 = vand.u32 %v3403, 4294901760
    %3405 = vmatpush.msra.mxu0 %v3404
    %v3406 = vand.u32 %v2915, 4294901760
    %v3407 = vsub.f32 %v2915, %v3406
    %v3408 = vand.u32 %v3407, 4294901760
    %v3409 = vsub.f32 %v3407, %v3408
    %v3410 = vand.u32 %v3409, 4294901760
    %3411 = vmatpush.msra.mxu0 %v3410
    %v3412 = vand.u32 %v2914, 4294901760
    %v3413 = vsub.f32 %v2914, %v3412
    %v3414 = vand.u32 %v3413, 4294901760
    %v3415 = vsub.f32 %v3413, %v3414
    %v3416 = vand.u32 %v3415, 4294901760
    %3417 = vmatpush.msra.mxu0 %v3416
    %v3418 = vand.u32 %v2913, 4294901760
    %v3419 = vsub.f32 %v2913, %v3418
    %v3420 = vand.u32 %v3419, 4294901760
    %v3421 = vsub.f32 %v3419, %v3420
    %v3422 = vand.u32 %v3421, 4294901760
    %3423 = vmatpush.msra.mxu0 %v3422
    %v3424 = vand.u32 %v2912, 4294901760
    %v3425 = vsub.f32 %v2912, %v3424
    %v3426 = vand.u32 %v3425, 4294901760
    %v3427 = vsub.f32 %v3425, %v3426
    %v3428 = vand.u32 %v3427, 4294901760
    %3429 = vmatpush.msra.mxu0 %v3428
    %v3430 = vand.u32 %v387, 4294901760
    %3431 = vmatmul.f32.gmra.mxu0 %v3430
    %v3432 = vpop.f32.mrf.mxu0
    %v3433 = vadd.f32 %v3332, %v3432
    %3434 = vdwg.mxu0
    %v3435 = vand.u32 %v2927, 4294901760
    %v3436 = vsub.f32 %v2927, %v3435
    %3437 = vmatpush.msra.mxu0 %v3436
    %v3438 = vand.u32 %v2926, 4294901760
    %v3439 = vsub.f32 %v2926, %v3438
    %3440 = vmatpush.msra.mxu0 %v3439
    %v3441 = vand.u32 %v2925, 4294901760
    %v3442 = vsub.f32 %v2925, %v3441
    %3443 = vmatpush.msra.mxu0 %v3442
    %v3444 = vand.u32 %v2924, 4294901760
    %v3445 = vsub.f32 %v2924, %v3444
    %3446 = vmatpush.msra.mxu0 %v3445
    %v3447 = vand.u32 %v2923, 4294901760
    %v3448 = vsub.f32 %v2923, %v3447
    %3449 = vmatpush.msra.mxu0 %v3448
    %v3450 = vand.u32 %v2922, 4294901760
    %v3451 = vsub.f32 %v2922, %v3450
    %3452 = vmatpush.msra.mxu0 %v3451
    %v3453 = vand.u32 %v2921, 4294901760
    %v3454 = vsub.f32 %v2921, %v3453
    %3455 = vmatpush.msra.mxu0 %v3454
    %v3456 = vand.u32 %v2920, 4294901760
    %v3457 = vsub.f32 %v2920, %v3456
    %3458 = vmatpush.msra.mxu0 %v3457
    %v3459 = vand.u32 %v2919, 4294901760
    %v3460 = vsub.f32 %v2919, %v3459
    %3461 = vmatpush.msra.mxu0 %v3460
    %v3462 = vand.u32 %v2918, 4294901760
    %v3463 = vsub.f32 %v2918, %v3462
    %3464 = vmatpush.msra.mxu0 %v3463
    %v3465 = vand.u32 %v2917, 4294901760
    %v3466 = vsub.f32 %v2917, %v3465
    %3467 = vmatpush.msra.mxu0 %v3466
    %v3468 = vand.u32 %v2916, 4294901760
    %v3469 = vsub.f32 %v2916, %v3468
    %3470 = vmatpush.msra.mxu0 %v3469
    %v3471 = vand.u32 %v2915, 4294901760
    %v3472 = vsub.f32 %v2915, %v3471
    %3473 = vmatpush.msra.mxu0 %v3472
    %v3474 = vand.u32 %v2914, 4294901760
    %v3475 = vsub.f32 %v2914, %v3474
    %3476 = vmatpush.msra.mxu0 %v3475
    %v3477 = vand.u32 %v2913, 4294901760
    %v3478 = vsub.f32 %v2913, %v3477
    %3479 = vmatpush.msra.mxu0 %v3478
    %v3480 = vand.u32 %v2912, 4294901760
    %v3481 = vsub.f32 %v2912, %v3480
    %3482 = vmatpush.msra.mxu0 %v3481
    %v3483 = vand.u32 %v387, 4294901760
    %v3484 = vsub.f32 %v387, %v3483
    %3485 = vmatmul.f32.gmra.mxu0 %v3484
    %v3486 = vpop.f32.mrf.mxu0
    %v3487 = vadd.f32 %v3433, %v3486
    %3488 = vdwg.mxu0
    %v3489 = vand.u32 %v2927, 4294901760
    %3490 = vmatpush.msra.mxu0 %v3489
    %v3491 = vand.u32 %v2926, 4294901760
    %3492 = vmatpush.msra.mxu0 %v3491
    %v3493 = vand.u32 %v2925, 4294901760
    %3494 = vmatpush.msra.mxu0 %v3493
    %v3495 = vand.u32 %v2924, 4294901760
    %3496 = vmatpush.msra.mxu0 %v3495
    %v3497 = vand.u32 %v2923, 4294901760
    %3498 = vmatpush.msra.mxu0 %v3497
    %v3499 = vand.u32 %v2922, 4294901760
    %3500 = vmatpush.msra.mxu0 %v3499
    %v3501 = vand.u32 %v2921, 4294901760
    %3502 = vmatpush.msra.mxu0 %v3501
    %v3503 = vand.u32 %v2920, 4294901760
    %3504 = vmatpush.msra.mxu0 %v3503
    %v3505 = vand.u32 %v2919, 4294901760
    %3506 = vmatpush.msra.mxu0 %v3505
    %v3507 = vand.u32 %v2918, 4294901760
    %3508 = vmatpush.msra.mxu0 %v3507
    %v3509 = vand.u32 %v2917, 4294901760
    %3510 = vmatpush.msra.mxu0 %v3509
    %v3511 = vand.u32 %v2916, 4294901760
    %3512 = vmatpush.msra.mxu0 %v3511
    %v3513 = vand.u32 %v2915, 4294901760
    %3514 = vmatpush.msra.mxu0 %v3513
    %v3515 = vand.u32 %v2914, 4294901760
    %3516 = vmatpush.msra.mxu0 %v3515
    %v3517 = vand.u32 %v2913, 4294901760
    %3518 = vmatpush.msra.mxu0 %v3517
    %v3519 = vand.u32 %v2912, 4294901760
    %3520 = vmatpush.msra.mxu0 %v3519
    %v3521 = vand.u32 %v387, 4294901760
    %v3522 = vsub.f32 %v387, %v3521
    %v3523 = vand.u32 %v3522, 4294901760
    %3524 = vmatmul.f32.gmra.mxu0 %v3523
    %v3525 = vpop.f32.mrf.mxu0
    %v3526 = vadd.f32 %v3487, %v3525
    %3527 = vdwg.mxu0
    %v3528 = vand.u32 %v2927, 4294901760
    %v3529 = vsub.f32 %v2927, %v3528
    %v3530 = vand.u32 %v3529, 4294901760
    %3531 = vmatpush.msra.mxu0 %v3530
    %v3532 = vand.u32 %v2926, 4294901760
    %v3533 = vsub.f32 %v2926, %v3532
    %v3534 = vand.u32 %v3533, 4294901760
    %3535 = vmatpush.msra.mxu0 %v3534
    %v3536 = vand.u32 %v2925, 4294901760
    %v3537 = vsub.f32 %v2925, %v3536
    %v3538 = vand.u32 %v3537, 4294901760
    %3539 = vmatpush.msra.mxu0 %v3538
    %v3540 = vand.u32 %v2924, 4294901760
    %v3541 = vsub.f32 %v2924, %v3540
    %v3542 = vand.u32 %v3541, 4294901760
    %3543 = vmatpush.msra.mxu0 %v3542
    %v3544 = vand.u32 %v2923, 4294901760
    %v3545 = vsub.f32 %v2923, %v3544
    %v3546 = vand.u32 %v3545, 4294901760
    %3547 = vmatpush.msra.mxu0 %v3546
    %v3548 = vand.u32 %v2922, 4294901760
    %v3549 = vsub.f32 %v2922, %v3548
    %v3550 = vand.u32 %v3549, 4294901760
    %3551 = vmatpush.msra.mxu0 %v3550
    %v3552 = vand.u32 %v2921, 4294901760
    %v3553 = vsub.f32 %v2921, %v3552
    %v3554 = vand.u32 %v3553, 4294901760
    %3555 = vmatpush.msra.mxu0 %v3554
    %v3556 = vand.u32 %v2920, 4294901760
    %v3557 = vsub.f32 %v2920, %v3556
    %v3558 = vand.u32 %v3557, 4294901760
    %3559 = vmatpush.msra.mxu0 %v3558
    %v3560 = vand.u32 %v2919, 4294901760
    %v3561 = vsub.f32 %v2919, %v3560
    %v3562 = vand.u32 %v3561, 4294901760
    %3563 = vmatpush.msra.mxu0 %v3562
    %v3564 = vand.u32 %v2918, 4294901760
    %v3565 = vsub.f32 %v2918, %v3564
    %v3566 = vand.u32 %v3565, 4294901760
    %3567 = vmatpush.msra.mxu0 %v3566
    %v3568 = vand.u32 %v2917, 4294901760
    %v3569 = vsub.f32 %v2917, %v3568
    %v3570 = vand.u32 %v3569, 4294901760
    %3571 = vmatpush.msra.mxu0 %v3570
    %v3572 = vand.u32 %v2916, 4294901760
    %v3573 = vsub.f32 %v2916, %v3572
    %v3574 = vand.u32 %v3573, 4294901760
    %3575 = vmatpush.msra.mxu0 %v3574
    %v3576 = vand.u32 %v2915, 4294901760
    %v3577 = vsub.f32 %v2915, %v3576
    %v3578 = vand.u32 %v3577, 4294901760
    %3579 = vmatpush.msra.mxu0 %v3578
    %v3580 = vand.u32 %v2914, 4294901760
    %v3581 = vsub.f32 %v2914, %v3580
    %v3582 = vand.u32 %v3581, 4294901760
    %3583 = vmatpush.msra.mxu0 %v3582
    %v3584 = vand.u32 %v2913, 4294901760
    %v3585 = vsub.f32 %v2913, %v3584
    %v3586 = vand.u32 %v3585, 4294901760
    %3587 = vmatpush.msra.mxu0 %v3586
    %v3588 = vand.u32 %v2912, 4294901760
    %v3589 = vsub.f32 %v2912, %v3588
    %v3590 = vand.u32 %v3589, 4294901760
    %3591 = vmatpush.msra.mxu0 %v3590
    %v3592 = vand.u32 %v387, 4294901760
    %3593 = vmatmul.f32.gmra.mxu0 %v3592
    %v3594 = vpop.f32.mrf.mxu0
    %v3595 = vadd.f32 %v3526, %v3594
    %3596 = vdwg.mxu0
    %v3597 = vand.u32 %v2927, 4294901760
    %3598 = vmatpush.msra.mxu0 %v3597
    %v3599 = vand.u32 %v2926, 4294901760
    %3600 = vmatpush.msra.mxu0 %v3599
    %v3601 = vand.u32 %v2925, 4294901760
    %3602 = vmatpush.msra.mxu0 %v3601
    %v3603 = vand.u32 %v2924, 4294901760
    %3604 = vmatpush.msra.mxu0 %v3603
    %v3605 = vand.u32 %v2923, 4294901760
    %3606 = vmatpush.msra.mxu0 %v3605
    %v3607 = vand.u32 %v2922, 4294901760
    %3608 = vmatpush.msra.mxu0 %v3607
    %v3609 = vand.u32 %v2921, 4294901760
    %3610 = vmatpush.msra.mxu0 %v3609
    %v3611 = vand.u32 %v2920, 4294901760
    %3612 = vmatpush.msra.mxu0 %v3611
    %v3613 = vand.u32 %v2919, 4294901760
    %3614 = vmatpush.msra.mxu0 %v3613
    %v3615 = vand.u32 %v2918, 4294901760
    %3616 = vmatpush.msra.mxu0 %v3615
    %v3617 = vand.u32 %v2917, 4294901760
    %3618 = vmatpush.msra.mxu0 %v3617
    %v3619 = vand.u32 %v2916, 4294901760
    %3620 = vmatpush.msra.mxu0 %v3619
    %v3621 = vand.u32 %v2915, 4294901760
    %3622 = vmatpush.msra.mxu0 %v3621
    %v3623 = vand.u32 %v2914, 4294901760
    %3624 = vmatpush.msra.mxu0 %v3623
    %v3625 = vand.u32 %v2913, 4294901760
    %3626 = vmatpush.msra.mxu0 %v3625
    %v3627 = vand.u32 %v2912, 4294901760
    %3628 = vmatpush.msra.mxu0 %v3627
    %v3629 = vand.u32 %v387, 4294901760
    %3630 = vmatmul.f32.gmra.mxu0 %v3629
    %v3631 = vpop.f32.mrf.mxu0
    %v3632 = vadd.f32 %v3595, %v3631
    %3633 = vdwg.mxu0
    %v3634 = vand.u32 %v2943, 4294901760
    %3635 = vmatpush.msra.mxu0 %v3634
    %v3636 = vand.u32 %v2942, 4294901760
    %3637 = vmatpush.msra.mxu0 %v3636
    %v3638 = vand.u32 %v2941, 4294901760
    %3639 = vmatpush.msra.mxu0 %v3638
    %v3640 = vand.u32 %v2940, 4294901760
    %3641 = vmatpush.msra.mxu0 %v3640
    %v3642 = vand.u32 %v2939, 4294901760
    %3643 = vmatpush.msra.mxu0 %v3642
    %v3644 = vand.u32 %v2938, 4294901760
    %3645 = vmatpush.msra.mxu0 %v3644
    %v3646 = vand.u32 %v2937, 4294901760
    %3647 = vmatpush.msra.mxu0 %v3646
    %v3648 = vand.u32 %v2936, 4294901760
    %3649 = vmatpush.msra.mxu0 %v3648
    %v3650 = vand.u32 %v2935, 4294901760
    %3651 = vmatpush.msra.mxu0 %v3650
    %v3652 = vand.u32 %v2934, 4294901760
    %3653 = vmatpush.msra.mxu0 %v3652
    %v3654 = vand.u32 %v2933, 4294901760
    %3655 = vmatpush.msra.mxu0 %v3654
    %v3656 = vand.u32 %v2932, 4294901760
    %3657 = vmatpush.msra.mxu0 %v3656
    %v3658 = vand.u32 %v2931, 4294901760
    %3659 = vmatpush.msra.mxu0 %v3658
    %v3660 = vand.u32 %v2930, 4294901760
    %3661 = vmatpush.msra.mxu0 %v3660
    %v3662 = vand.u32 %v2929, 4294901760
    %3663 = vmatpush.msra.mxu0 %v3662
    %v3664 = vand.u32 %v2928, 4294901760
    %3665 = vmatpush.msra.mxu0 %v3664
    %v3666 = vand.u32 %v388, 4294901760
    %v3667 = vsub.f32 %v388, %v3666
    %v3668 = vand.u32 %v3667, 4294901760
    %v3669 = vsub.f32 %v3667, %v3668
    %v3670 = vand.u32 %v3669, 4294901760
    %3671 = vmatmul.f32.gmra.mxu0 %v3670
    %v3672 = vpop.f32.mrf.mxu0
    %v3673 = vadd.f32 %v3632, %v3672
    %3674 = vdwg.mxu0
    %v3675 = vand.u32 %v2943, 4294901760
    %v3676 = vsub.f32 %v2943, %v3675
    %v3677 = vand.u32 %v3676, 4294901760
    %v3678 = vsub.f32 %v3676, %v3677
    %v3679 = vand.u32 %v3678, 4294901760
    %3680 = vmatpush.msra.mxu0 %v3679
    %v3681 = vand.u32 %v2942, 4294901760
    %v3682 = vsub.f32 %v2942, %v3681
    %v3683 = vand.u32 %v3682, 4294901760
    %v3684 = vsub.f32 %v3682, %v3683
    %v3685 = vand.u32 %v3684, 4294901760
    %3686 = vmatpush.msra.mxu0 %v3685
    %v3687 = vand.u32 %v2941, 4294901760
    %v3688 = vsub.f32 %v2941, %v3687
    %v3689 = vand.u32 %v3688, 4294901760
    %v3690 = vsub.f32 %v3688, %v3689
    %v3691 = vand.u32 %v3690, 4294901760
    %3692 = vmatpush.msra.mxu0 %v3691
    %v3693 = vand.u32 %v2940, 4294901760
    %v3694 = vsub.f32 %v2940, %v3693
    %v3695 = vand.u32 %v3694, 4294901760
    %v3696 = vsub.f32 %v3694, %v3695
    %v3697 = vand.u32 %v3696, 4294901760
    %3698 = vmatpush.msra.mxu0 %v3697
    %v3699 = vand.u32 %v2939, 4294901760
    %v3700 = vsub.f32 %v2939, %v3699
    %v3701 = vand.u32 %v3700, 4294901760
    %v3702 = vsub.f32 %v3700, %v3701
    %v3703 = vand.u32 %v3702, 4294901760
    %3704 = vmatpush.msra.mxu0 %v3703
    %v3705 = vand.u32 %v2938, 4294901760
    %v3706 = vsub.f32 %v2938, %v3705
    %v3707 = vand.u32 %v3706, 4294901760
    %v3708 = vsub.f32 %v3706, %v3707
    %v3709 = vand.u32 %v3708, 4294901760
    %3710 = vmatpush.msra.mxu0 %v3709
    %v3711 = vand.u32 %v2937, 4294901760
    %v3712 = vsub.f32 %v2937, %v3711
    %v3713 = vand.u32 %v3712, 4294901760
    %v3714 = vsub.f32 %v3712, %v3713
    %v3715 = vand.u32 %v3714, 4294901760
    %3716 = vmatpush.msra.mxu0 %v3715
    %v3717 = vand.u32 %v2936, 4294901760
    %v3718 = vsub.f32 %v2936, %v3717
    %v3719 = vand.u32 %v3718, 4294901760
    %v3720 = vsub.f32 %v3718, %v3719
    %v3721 = vand.u32 %v3720, 4294901760
    %3722 = vmatpush.msra.mxu0 %v3721
    %v3723 = vand.u32 %v2935, 4294901760
    %v3724 = vsub.f32 %v2935, %v3723
    %v3725 = vand.u32 %v3724, 4294901760
    %v3726 = vsub.f32 %v3724, %v3725
    %v3727 = vand.u32 %v3726, 4294901760
    %3728 = vmatpush.msra.mxu0 %v3727
    %v3729 = vand.u32 %v2934, 4294901760
    %v3730 = vsub.f32 %v2934, %v3729
    %v3731 = vand.u32 %v3730, 4294901760
    %v3732 = vsub.f32 %v3730, %v3731
    %v3733 = vand.u32 %v3732, 4294901760
    %3734 = vmatpush.msra.mxu0 %v3733
    %v3735 = vand.u32 %v2933, 4294901760
    %v3736 = vsub.f32 %v2933, %v3735
    %v3737 = vand.u32 %v3736, 4294901760
    %v3738 = vsub.f32 %v3736, %v3737
    %v3739 = vand.u32 %v3738, 4294901760
    %3740 = vmatpush.msra.mxu0 %v3739
    %v3741 = vand.u32 %v2932, 4294901760
    %v3742 = vsub.f32 %v2932, %v3741
    %v3743 = vand.u32 %v3742, 4294901760
    %v3744 = vsub.f32 %v3742, %v3743
    %v3745 = vand.u32 %v3744, 4294901760
    %3746 = vmatpush.msra.mxu0 %v3745
    %v3747 = vand.u32 %v2931, 4294901760
    %v3748 = vsub.f32 %v2931, %v3747
    %v3749 = vand.u32 %v3748, 4294901760
    %v3750 = vsub.f32 %v3748, %v3749
    %v3751 = vand.u32 %v3750, 4294901760
    %3752 = vmatpush.msra.mxu0 %v3751
    %v3753 = vand.u32 %v2930, 4294901760
    %v3754 = vsub.f32 %v2930, %v3753
    %v3755 = vand.u32 %v3754, 4294901760
    %v3756 = vsub.f32 %v3754, %v3755
    %v3757 = vand.u32 %v3756, 4294901760
    %3758 = vmatpush.msra.mxu0 %v3757
    %v3759 = vand.u32 %v2929, 4294901760
    %v3760 = vsub.f32 %v2929, %v3759
    %v3761 = vand.u32 %v3760, 4294901760
    %v3762 = vsub.f32 %v3760, %v3761
    %v3763 = vand.u32 %v3762, 4294901760
    %3764 = vmatpush.msra.mxu0 %v3763
    %v3765 = vand.u32 %v2928, 4294901760
    %v3766 = vsub.f32 %v2928, %v3765
    %v3767 = vand.u32 %v3766, 4294901760
    %v3768 = vsub.f32 %v3766, %v3767
    %v3769 = vand.u32 %v3768, 4294901760
    %3770 = vmatpush.msra.mxu0 %v3769
    %v3771 = vand.u32 %v388, 4294901760
    %3772 = vmatmul.f32.gmra.mxu0 %v3771
    %v3773 = vpop.f32.mrf.mxu0
    %v3774 = vadd.f32 %v3673, %v3773
    %3775 = vdwg.mxu0
    %v3776 = vand.u32 %v2943, 4294901760
    %v3777 = vsub.f32 %v2943, %v3776
    %3778 = vmatpush.msra.mxu0 %v3777
    %v3779 = vand.u32 %v2942, 4294901760
    %v3780 = vsub.f32 %v2942, %v3779
    %3781 = vmatpush.msra.mxu0 %v3780
    %v3782 = vand.u32 %v2941, 4294901760
    %v3783 = vsub.f32 %v2941, %v3782
    %3784 = vmatpush.msra.mxu0 %v3783
    %v3785 = vand.u32 %v2940, 4294901760
    %v3786 = vsub.f32 %v2940, %v3785
    %3787 = vmatpush.msra.mxu0 %v3786
    %v3788 = vand.u32 %v2939, 4294901760
    %v3789 = vsub.f32 %v2939, %v3788
    %3790 = vmatpush.msra.mxu0 %v3789
    %v3791 = vand.u32 %v2938, 4294901760
    %v3792 = vsub.f32 %v2938, %v3791
    %3793 = vmatpush.msra.mxu0 %v3792
    %v3794 = vand.u32 %v2937, 4294901760
    %v3795 = vsub.f32 %v2937, %v3794
    %3796 = vmatpush.msra.mxu0 %v3795
    %v3797 = vand.u32 %v2936, 4294901760
    %v3798 = vsub.f32 %v2936, %v3797
    %3799 = vmatpush.msra.mxu0 %v3798
    %v3800 = vand.u32 %v2935, 4294901760
    %v3801 = vsub.f32 %v2935, %v3800
    %3802 = vmatpush.msra.mxu0 %v3801
    %v3803 = vand.u32 %v2934, 4294901760
    %v3804 = vsub.f32 %v2934, %v3803
    %3805 = vmatpush.msra.mxu0 %v3804
    %v3806 = vand.u32 %v2933, 4294901760
    %v3807 = vsub.f32 %v2933, %v3806
    %3808 = vmatpush.msra.mxu0 %v3807
    %v3809 = vand.u32 %v2932, 4294901760
    %v3810 = vsub.f32 %v2932, %v3809
    %3811 = vmatpush.msra.mxu0 %v3810
    %v3812 = vand.u32 %v2931, 4294901760
    %v3813 = vsub.f32 %v2931, %v3812
    %3814 = vmatpush.msra.mxu0 %v3813
    %v3815 = vand.u32 %v2930, 4294901760
    %v3816 = vsub.f32 %v2930, %v3815
    %3817 = vmatpush.msra.mxu0 %v3816
    %v3818 = vand.u32 %v2929, 4294901760
    %v3819 = vsub.f32 %v2929, %v3818
    %3820 = vmatpush.msra.mxu0 %v3819
    %v3821 = vand.u32 %v2928, 4294901760
    %v3822 = vsub.f32 %v2928, %v3821
    %3823 = vmatpush.msra.mxu0 %v3822
    %v3824 = vand.u32 %v388, 4294901760
    %v3825 = vsub.f32 %v388, %v3824
    %3826 = vmatmul.f32.gmra.mxu0 %v3825
    %v3827 = vpop.f32.mrf.mxu0
    %v3828 = vadd.f32 %v3774, %v3827
    %3829 = vdwg.mxu0
    %v3830 = vand.u32 %v2943, 4294901760
    %3831 = vmatpush.msra.mxu0 %v3830
    %v3832 = vand.u32 %v2942, 4294901760
    %3833 = vmatpush.msra.mxu0 %v3832
    %v3834 = vand.u32 %v2941, 4294901760
    %3835 = vmatpush.msra.mxu0 %v3834
    %v3836 = vand.u32 %v2940, 4294901760
    %3837 = vmatpush.msra.mxu0 %v3836
    %v3838 = vand.u32 %v2939, 4294901760
    %3839 = vmatpush.msra.mxu0 %v3838
    %v3840 = vand.u32 %v2938, 4294901760
    %3841 = vmatpush.msra.mxu0 %v3840
    %v3842 = vand.u32 %v2937, 4294901760
    %3843 = vmatpush.msra.mxu0 %v3842
    %v3844 = vand.u32 %v2936, 4294901760
    %3845 = vmatpush.msra.mxu0 %v3844
    %v3846 = vand.u32 %v2935, 4294901760
    %3847 = vmatpush.msra.mxu0 %v3846
    %v3848 = vand.u32 %v2934, 4294901760
    %3849 = vmatpush.msra.mxu0 %v3848
    %v3850 = vand.u32 %v2933, 4294901760
    %3851 = vmatpush.msra.mxu0 %v3850
    %v3852 = vand.u32 %v2932, 4294901760
    %3853 = vmatpush.msra.mxu0 %v3852
    %v3854 = vand.u32 %v2931, 4294901760
    %3855 = vmatpush.msra.mxu0 %v3854
    %v3856 = vand.u32 %v2930, 4294901760
    %3857 = vmatpush.msra.mxu0 %v3856
    %v3858 = vand.u32 %v2929, 4294901760
    %3859 = vmatpush.msra.mxu0 %v3858
    %v3860 = vand.u32 %v2928, 4294901760
    %3861 = vmatpush.msra.mxu0 %v3860
    %v3862 = vand.u32 %v388, 4294901760
    %v3863 = vsub.f32 %v388, %v3862
    %v3864 = vand.u32 %v3863, 4294901760
    %3865 = vmatmul.f32.gmra.mxu0 %v3864
    %v3866 = vpop.f32.mrf.mxu0
    %v3867 = vadd.f32 %v3828, %v3866
    %3868 = vdwg.mxu0
    %v3869 = vand.u32 %v2943, 4294901760
    %v3870 = vsub.f32 %v2943, %v3869
    %v3871 = vand.u32 %v3870, 4294901760
    %3872 = vmatpush.msra.mxu0 %v3871
    %v3873 = vand.u32 %v2942, 4294901760
    %v3874 = vsub.f32 %v2942, %v3873
    %v3875 = vand.u32 %v3874, 4294901760
    %3876 = vmatpush.msra.mxu0 %v3875
    %v3877 = vand.u32 %v2941, 4294901760
    %v3878 = vsub.f32 %v2941, %v3877
    %v3879 = vand.u32 %v3878, 4294901760
    %3880 = vmatpush.msra.mxu0 %v3879
    %v3881 = vand.u32 %v2940, 4294901760
    %v3882 = vsub.f32 %v2940, %v3881
    %v3883 = vand.u32 %v3882, 4294901760
    %3884 = vmatpush.msra.mxu0 %v3883
    %v3885 = vand.u32 %v2939, 4294901760
    %v3886 = vsub.f32 %v2939, %v3885
    %v3887 = vand.u32 %v3886, 4294901760
    %3888 = vmatpush.msra.mxu0 %v3887
    %v3889 = vand.u32 %v2938, 4294901760
    %v3890 = vsub.f32 %v2938, %v3889
    %v3891 = vand.u32 %v3890, 4294901760
    %3892 = vmatpush.msra.mxu0 %v3891
    %v3893 = vand.u32 %v2937, 4294901760
    %v3894 = vsub.f32 %v2937, %v3893
    %v3895 = vand.u32 %v3894, 4294901760
    %3896 = vmatpush.msra.mxu0 %v3895
    %v3897 = vand.u32 %v2936, 4294901760
    %v3898 = vsub.f32 %v2936, %v3897
    %v3899 = vand.u32 %v3898, 4294901760
    %3900 = vmatpush.msra.mxu0 %v3899
    %v3901 = vand.u32 %v2935, 4294901760
    %v3902 = vsub.f32 %v2935, %v3901
    %v3903 = vand.u32 %v3902, 4294901760
    %3904 = vmatpush.msra.mxu0 %v3903
    %v3905 = vand.u32 %v2934, 4294901760
    %v3906 = vsub.f32 %v2934, %v3905
    %v3907 = vand.u32 %v3906, 4294901760
    %3908 = vmatpush.msra.mxu0 %v3907
    %v3909 = vand.u32 %v2933, 4294901760
    %v3910 = vsub.f32 %v2933, %v3909
    %v3911 = vand.u32 %v3910, 4294901760
    %3912 = vmatpush.msra.mxu0 %v3911
    %v3913 = vand.u32 %v2932, 4294901760
    %v3914 = vsub.f32 %v2932, %v3913
    %v3915 = vand.u32 %v3914, 4294901760
    %3916 = vmatpush.msra.mxu0 %v3915
    %v3917 = vand.u32 %v2931, 4294901760
    %v3918 = vsub.f32 %v2931, %v3917
    %v3919 = vand.u32 %v3918, 4294901760
    %3920 = vmatpush.msra.mxu0 %v3919
    %v3921 = vand.u32 %v2930, 4294901760
    %v3922 = vsub.f32 %v2930, %v3921
    %v3923 = vand.u32 %v3922, 4294901760
    %3924 = vmatpush.msra.mxu0 %v3923
    %v3925 = vand.u32 %v2929, 4294901760
    %v3926 = vsub.f32 %v2929, %v3925
    %v3927 = vand.u32 %v3926, 4294901760
    %3928 = vmatpush.msra.mxu0 %v3927
    %v3929 = vand.u32 %v2928, 4294901760
    %v3930 = vsub.f32 %v2928, %v3929
    %v3931 = vand.u32 %v3930, 4294901760
    %3932 = vmatpush.msra.mxu0 %v3931
    %v3933 = vand.u32 %v388, 4294901760
    %3934 = vmatmul.f32.gmra.mxu0 %v3933
    %v3935 = vpop.f32.mrf.mxu0
    %v3936 = vadd.f32 %v3867, %v3935
    %3937 = vdwg.mxu0
    %v3938 = vand.u32 %v2943, 4294901760
    %3939 = vmatpush.msra.mxu0 %v3938
    %v3940 = vand.u32 %v2942, 4294901760
    %3941 = vmatpush.msra.mxu0 %v3940
    %v3942 = vand.u32 %v2941, 4294901760
    %3943 = vmatpush.msra.mxu0 %v3942
    %v3944 = vand.u32 %v2940, 4294901760
    %3945 = vmatpush.msra.mxu0 %v3944
    %v3946 = vand.u32 %v2939, 4294901760
    %3947 = vmatpush.msra.mxu0 %v3946
    %v3948 = vand.u32 %v2938, 4294901760
    %3949 = vmatpush.msra.mxu0 %v3948
    %v3950 = vand.u32 %v2937, 4294901760
    %3951 = vmatpush.msra.mxu0 %v3950
    %v3952 = vand.u32 %v2936, 4294901760
    %3953 = vmatpush.msra.mxu0 %v3952
    %v3954 = vand.u32 %v2935, 4294901760
    %3955 = vmatpush.msra.mxu0 %v3954
    %v3956 = vand.u32 %v2934, 4294901760
    %3957 = vmatpush.msra.mxu0 %v3956
    %v3958 = vand.u32 %v2933, 4294901760
    %3959 = vmatpush.msra.mxu0 %v3958
    %v3960 = vand.u32 %v2932, 4294901760
    %3961 = vmatpush.msra.mxu0 %v3960
    %v3962 = vand.u32 %v2931, 4294901760
    %3963 = vmatpush.msra.mxu0 %v3962
    %v3964 = vand.u32 %v2930, 4294901760
    %3965 = vmatpush.msra.mxu0 %v3964
    %v3966 = vand.u32 %v2929, 4294901760
    %3967 = vmatpush.msra.mxu0 %v3966
    %v3968 = vand.u32 %v2928, 4294901760
    %3969 = vmatpush.msra.mxu0 %v3968
    %v3970 = vand.u32 %v388, 4294901760
    %3971 = vmatmul.f32.gmra.mxu0 %v3970
    %v3972 = vpop.f32.mrf.mxu0
    %v3973 = vadd.f32 %v3936, %v3972
    %3974 = vdwg.mxu0
    %3975 = vmatpush.msra.mxu0 0.0
    %3976 = vmatpush.msra.mxu0 0.0
    %3977 = vmatpush.msra.mxu0 0.0
    %3978 = vmatpush.msra.mxu0 0.0
    %3979 = vmatpush.msra.mxu0 0.0
    %3980 = vmatpush.msra.mxu0 0.0
    %3981 = vmatpush.msra.mxu0 0.0
    %3982 = vmatpush.msra.mxu0 0.0
    %3983 = vmatpush.msra.mxu0 0.0
    %3984 = vmatpush.msra.mxu0 0.0
    %3985 = vmatpush.msra.mxu0 0.0
    %3986 = vmatpush.msra.mxu0 0.0
    %3987 = vmatpush.msra.mxu0 0.0
    %3988 = vmatpush.msra.mxu0 0.0
    %v3989 = vand.u32 %v2950, 4294901760
    %3990 = vmatpush.msra.mxu0 %v3989
    %v3991 = vand.u32 %v2944, 4294901760
    %3992 = vmatpush.msra.mxu0 %v3991
    %v3993 = vand.u32 %v2947, 4294901760
    %v3994 = vsub.f32 %v2947, %v3993
    %v3995 = vand.u32 %v3994, 4294901760
    %v3996 = vsub.f32 %v3994, %v3995
    %v3997 = vand.u32 %v3996, 4294901760
    %3998 = vmatmul.f32.gmra.mxu0 %v3997
    %v3999 = vpop.f32.mrf.mxu0
    %v4000 = vadd.f32 %v3973, %v3999
    %4001 = vdwg.mxu0
    %4002 = vmatpush.msra.mxu0 0.0
    %4003 = vmatpush.msra.mxu0 0.0
    %4004 = vmatpush.msra.mxu0 0.0
    %4005 = vmatpush.msra.mxu0 0.0
    %4006 = vmatpush.msra.mxu0 0.0
    %4007 = vmatpush.msra.mxu0 0.0
    %4008 = vmatpush.msra.mxu0 0.0
    %4009 = vmatpush.msra.mxu0 0.0
    %4010 = vmatpush.msra.mxu0 0.0
    %4011 = vmatpush.msra.mxu0 0.0
    %4012 = vmatpush.msra.mxu0 0.0
    %4013 = vmatpush.msra.mxu0 0.0
    %4014 = vmatpush.msra.mxu0 0.0
    %4015 = vmatpush.msra.mxu0 0.0
    %v4016 = vand.u32 %v2950, 4294901760
    %v4017 = vsub.f32 %v2950, %v4016
    %v4018 = vand.u32 %v4017, 4294901760
    %v4019 = vsub.f32 %v4017, %v4018
    %v4020 = vand.u32 %v4019, 4294901760
    %4021 = vmatpush.msra.mxu0 %v4020
    %v4022 = vand.u32 %v2944, 4294901760
    %v4023 = vsub.f32 %v2944, %v4022
    %v4024 = vand.u32 %v4023, 4294901760
    %v4025 = vsub.f32 %v4023, %v4024
    %v4026 = vand.u32 %v4025, 4294901760
    %4027 = vmatpush.msra.mxu0 %v4026
    %v4028 = vand.u32 %v2947, 4294901760
    %4029 = vmatmul.f32.gmra.mxu0 %v4028
    %v4030 = vpop.f32.mrf.mxu0
    %v4031 = vadd.f32 %v4000, %v4030
    %4032 = vdwg.mxu0
    %4033 = vmatpush.msra.mxu0 0.0
    %4034 = vmatpush.msra.mxu0 0.0
    %4035 = vmatpush.msra.mxu0 0.0
    %4036 = vmatpush.msra.mxu0 0.0
    %4037 = vmatpush.msra.mxu0 0.0
    %4038 = vmatpush.msra.mxu0 0.0
    %4039 = vmatpush.msra.mxu0 0.0
    %4040 = vmatpush.msra.mxu0 0.0
    %4041 = vmatpush.msra.mxu0 0.0
    %4042 = vmatpush.msra.mxu0 0.0
    %4043 = vmatpush.msra.mxu0 0.0
    %4044 = vmatpush.msra.mxu0 0.0
    %4045 = vmatpush.msra.mxu0 0.0
    %4046 = vmatpush.msra.mxu0 0.0
    %v4047 = vand.u32 %v2950, 4294901760
    %v4048 = vsub.f32 %v2950, %v4047
    %4049 = vmatpush.msra.mxu0 %v4048
    %v4050 = vand.u32 %v2944, 4294901760
    %v4051 = vsub.f32 %v2944, %v4050
    %4052 = vmatpush.msra.mxu0 %v4051
    %v4053 = vand.u32 %v2947, 4294901760
    %v4054 = vsub.f32 %v2947, %v4053
    %4055 = vmatmul.f32.gmra.mxu0 %v4054
    %v4056 = vpop.f32.mrf.mxu0
    %v4057 = vadd.f32 %v4031, %v4056
    %4058 = vdwg.mxu0
    %4059 = vmatpush.msra.mxu0 0.0
    %4060 = vmatpush.msra.mxu0 0.0
    %4061 = vmatpush.msra.mxu0 0.0
    %4062 = vmatpush.msra.mxu0 0.0
    %4063 = vmatpush.msra.mxu0 0.0
    %4064 = vmatpush.msra.mxu0 0.0
    %4065 = vmatpush.msra.mxu0 0.0
    %4066 = vmatpush.msra.mxu0 0.0
    %4067 = vmatpush.msra.mxu0 0.0
    %4068 = vmatpush.msra.mxu0 0.0
    %4069 = vmatpush.msra.mxu0 0.0
    %4070 = vmatpush.msra.mxu0 0.0
    %4071 = vmatpush.msra.mxu0 0.0
    %4072 = vmatpush.msra.mxu0 0.0
    %v4073 = vand.u32 %v2950, 4294901760
    %4074 = vmatpush.msra.mxu0 %v4073
    %v4075 = vand.u32 %v2944, 4294901760
    %4076 = vmatpush.msra.mxu0 %v4075
    %v4077 = vand.u32 %v2947, 4294901760
    %v4078 = vsub.f32 %v2947, %v4077
    %v4079 = vand.u32 %v4078, 4294901760
    %4080 = vmatmul.f32.gmra.mxu0 %v4079
    %v4081 = vpop.f32.mrf.mxu0
    %v4082 = vadd.f32 %v4057, %v4081
    %4083 = vdwg.mxu0
    %4084 = vmatpush.msra.mxu0 0.0
    %4085 = vmatpush.msra.mxu0 0.0
    %4086 = vmatpush.msra.mxu0 0.0
    %4087 = vmatpush.msra.mxu0 0.0
    %4088 = vmatpush.msra.mxu0 0.0
    %4089 = vmatpush.msra.mxu0 0.0
    %4090 = vmatpush.msra.mxu0 0.0
    %4091 = vmatpush.msra.mxu0 0.0
    %4092 = vmatpush.msra.mxu0 0.0
    %4093 = vmatpush.msra.mxu0 0.0
    %4094 = vmatpush.msra.mxu0 0.0
    %4095 = vmatpush.msra.mxu0 0.0
    %4096 = vmatpush.msra.mxu0 0.0
    %4097 = vmatpush.msra.mxu0 0.0
    %v4098 = vand.u32 %v2950, 4294901760
    %v4099 = vsub.f32 %v2950, %v4098
    %v4100 = vand.u32 %v4099, 4294901760
    %4101 = vmatpush.msra.mxu0 %v4100
    %v4102 = vand.u32 %v2944, 4294901760
    %v4103 = vsub.f32 %v2944, %v4102
    %v4104 = vand.u32 %v4103, 4294901760
    %4105 = vmatpush.msra.mxu0 %v4104
    %v4106 = vand.u32 %v2947, 4294901760
    %4107 = vmatmul.f32.gmra.mxu0 %v4106
    %v4108 = vpop.f32.mrf.mxu0
    %v4109 = vadd.f32 %v4082, %v4108
    %4110 = vdwg.mxu0
    %4111 = vmatpush.msra.mxu0 0.0
    %4112 = vmatpush.msra.mxu0 0.0
    %4113 = vmatpush.msra.mxu0 0.0
    %4114 = vmatpush.msra.mxu0 0.0
    %4115 = vmatpush.msra.mxu0 0.0
    %4116 = vmatpush.msra.mxu0 0.0
    %4117 = vmatpush.msra.mxu0 0.0
    %4118 = vmatpush.msra.mxu0 0.0
    %4119 = vmatpush.msra.mxu0 0.0
    %4120 = vmatpush.msra.mxu0 0.0
    %4121 = vmatpush.msra.mxu0 0.0
    %4122 = vmatpush.msra.mxu0 0.0
    %4123 = vmatpush.msra.mxu0 0.0
    %4124 = vmatpush.msra.mxu0 0.0
    %v4125 = vand.u32 %v2950, 4294901760
    %4126 = vmatpush.msra.mxu0 %v4125
    %v4127 = vand.u32 %v2944, 4294901760
    %4128 = vmatpush.msra.mxu0 %v4127
    %v4129 = vand.u32 %v2947, 4294901760
    %4130 = vmatmul.f32.gmra.mxu0 %v4129
    %v4131 = vpop.f32.mrf.mxu0
    %v4132 = vadd.f32 %v4109, %v4131
    %4133 = vdwg.mxu0
    %v4134 = vadd.f32 %v2893, %v4132
    %s4135 = scalar_lea.vmem %s5, 1200
    %v4136 = vld [vmem:[%s4135] sm:$0xff]
    %v4137 = vld [vmem:[%s4135 + $0x8] sm:$0xff]
    %v4138 = vld [vmem:[%s4135 + $0x10] sm:$0xff]
    %v4139 = vld [vmem:[%s4135 + $0x18] sm:$0xff]
    %v4140 = vld [vmem:[%s4135 + $0x20] sm:$0xff]
    %v4141 = vld [vmem:[%s4135 + $0x28] sm:$0xff]
    %v4142 = vld [vmem:[%s4135 + $0x30] sm:$0xff]
    %v4143 = vld [vmem:[%s4135 + $0x38] sm:$0xff]
    %v4144 = vld [vmem:[%s4135 + $0x40] sm:$0xff]
    %v4145 = vld [vmem:[%s4135 + $0x48] sm:$0xff]
    %v4146 = vld [vmem:[%s4135 + $0x50] sm:$0xff]
    %v4147 = vld [vmem:[%s4135 + $0x58] sm:$0xff]
    %v4148 = vld [vmem:[%s4135 + $0x60] sm:$0xff]
    %v4149 = vld [vmem:[%s4135 + $0x68] sm:$0xff]
    %v4150 = vld [vmem:[%s4135 + $0x70] sm:$0xff]
    %v4151 = vld [vmem:[%s4135 + $0x78] sm:$0xff]
    %v4152 = vld [vmem:[%s4135 + $0x80] sm:$0xff]
    %v4153 = vld [vmem:[%s4135 + $0x88] sm:$0xff]
    %v4154 = vld [vmem:[%s4135 + $0x90] sm:$0xff]
    %v4155 = vld [vmem:[%s4135 + $0x98] sm:$0xff]
    %v4156 = vld [vmem:[%s4135 + $0xa0] sm:$0xff]
    %v4157 = vld [vmem:[%s4135 + $0xa8] sm:$0xff]
    %v4158 = vld [vmem:[%s4135 + $0xb0] sm:$0xff]
    %v4159 = vld [vmem:[%s4135 + $0xb8] sm:$0xff]
    %v4160 = vld [vmem:[%s4135 + $0xc0] sm:$0xff]
    %v4161 = vld [vmem:[%s4135 + $0xc8] sm:$0xff]
    %v4162 = vld [vmem:[%s4135 + $0xd0] sm:$0xff]
    %v4163 = vld [vmem:[%s4135 + $0xd8] sm:$0xff]
    %v4164 = vld [vmem:[%s4135 + $0xe0] sm:$0xff]
    %v4165 = vld [vmem:[%s4135 + $0xe8] sm:$0xff]
    %v4166 = vld [vmem:[%s4135 + $0xf0] sm:$0xff]
    %v4167 = vld [vmem:[%s4135 + $0xf8] sm:$0xff]
    %v4168 = vld [vmem:[%s4135 + $0x100] sm:$0xff]
    %v4169 = vld [vmem:[%s4135 + $0x108] sm:$0xff]
    %v4170 = vld [vmem:[%s4135 + $0x110] sm:$0xff]
    %v4171 = vld [vmem:[%s4135 + $0x118] sm:$0xff]
    %v4172 = vld [vmem:[%s4135 + $0x120] sm:$0xff]
    %v4173 = vld [vmem:[%s4135 + $0x128] sm:$0xff]
    %v4174 = vld [vmem:[%s4135 + $0x130] sm:$0xff]
    %v4175 = vld [vmem:[%s4135 + $0x138] sm:$0xff]
    %v4176 = vld [vmem:[%s4135 + $0x140] sm:$0xff]
    %v4177 = vld [vmem:[%s4135 + $0x148] sm:$0xff]
    %v4178 = vld [vmem:[%s4135 + $0x150] sm:$0xff]
    %v4179 = vld [vmem:[%s4135 + $0x158] sm:$0xff]
    %v4180 = vld [vmem:[%s4135 + $0x160] sm:$0xff]
    %v4181 = vld [vmem:[%s4135 + $0x168] sm:$0xff]
    %v4182 = vld [vmem:[%s4135 + $0x170] sm:$0xff]
    %v4183 = vld [vmem:[%s4135 + $0x178] sm:$0xff]
    %v4184 = vld [vmem:[%s4135 + $0x180] sm:$0xff]
    %v4185 = vld [vmem:[%s4135 + $0x188] sm:$0xf]
    %v4187 = vsel %vm517, %v415, 0
    %v4190 = vsel %vm521, %v4185, 0
    %v4192 = vand.u32 %v4151, 4294901760
    %4193 = vmatpush.msra.mxu0 %v4192
    %v4194 = vand.u32 %v4150, 4294901760
    %4195 = vmatpush.msra.mxu0 %v4194
    %v4196 = vand.u32 %v4149, 4294901760
    %4197 = vmatpush.msra.mxu0 %v4196
    %v4198 = vand.u32 %v4148, 4294901760
    %4199 = vmatpush.msra.mxu0 %v4198
    %v4200 = vand.u32 %v4147, 4294901760
    %4201 = vmatpush.msra.mxu0 %v4200
    %v4202 = vand.u32 %v4146, 4294901760
    %4203 = vmatpush.msra.mxu0 %v4202
    %v4204 = vand.u32 %v4145, 4294901760
    %4205 = vmatpush.msra.mxu0 %v4204
    %v4206 = vand.u32 %v4144, 4294901760
    %4207 = vmatpush.msra.mxu0 %v4206
    %v4208 = vand.u32 %v4143, 4294901760
    %4209 = vmatpush.msra.mxu0 %v4208
    %v4210 = vand.u32 %v4142, 4294901760
    %4211 = vmatpush.msra.mxu0 %v4210
    %v4212 = vand.u32 %v4141, 4294901760
    %4213 = vmatpush.msra.mxu0 %v4212
    %v4214 = vand.u32 %v4140, 4294901760
    %4215 = vmatpush.msra.mxu0 %v4214
    %v4216 = vand.u32 %v4139, 4294901760
    %4217 = vmatpush.msra.mxu0 %v4216
    %v4218 = vand.u32 %v4138, 4294901760
    %4219 = vmatpush.msra.mxu0 %v4218
    %v4220 = vand.u32 %v4137, 4294901760
    %4221 = vmatpush.msra.mxu0 %v4220
    %v4222 = vand.u32 %v4136, 4294901760
    %4223 = vmatpush.msra.mxu0 %v4222
    %v4224 = vand.u32 %v412, 4294901760
    %v4225 = vsub.f32 %v412, %v4224
    %v4226 = vand.u32 %v4225, 4294901760
    %v4227 = vsub.f32 %v4225, %v4226
    %v4228 = vand.u32 %v4227, 4294901760
    %4229 = vmatmul.f32.gmra.mxu0 %v4228
    %v4230 = vpop.f32.mrf.mxu0
    %v4231 = vadd.f32 0.0, %v4230
    %4232 = vdwg.mxu0
    %v4233 = vand.u32 %v4151, 4294901760
    %v4234 = vsub.f32 %v4151, %v4233
    %v4235 = vand.u32 %v4234, 4294901760
    %v4236 = vsub.f32 %v4234, %v4235
    %v4237 = vand.u32 %v4236, 4294901760
    %4238 = vmatpush.msra.mxu0 %v4237
    %v4239 = vand.u32 %v4150, 4294901760
    %v4240 = vsub.f32 %v4150, %v4239
    %v4241 = vand.u32 %v4240, 4294901760
    %v4242 = vsub.f32 %v4240, %v4241
    %v4243 = vand.u32 %v4242, 4294901760
    %4244 = vmatpush.msra.mxu0 %v4243
    %v4245 = vand.u32 %v4149, 4294901760
    %v4246 = vsub.f32 %v4149, %v4245
    %v4247 = vand.u32 %v4246, 4294901760
    %v4248 = vsub.f32 %v4246, %v4247
    %v4249 = vand.u32 %v4248, 4294901760
    %4250 = vmatpush.msra.mxu0 %v4249
    %v4251 = vand.u32 %v4148, 4294901760
    %v4252 = vsub.f32 %v4148, %v4251
    %v4253 = vand.u32 %v4252, 4294901760
    %v4254 = vsub.f32 %v4252, %v4253
    %v4255 = vand.u32 %v4254, 4294901760
    %4256 = vmatpush.msra.mxu0 %v4255
    %v4257 = vand.u32 %v4147, 4294901760
    %v4258 = vsub.f32 %v4147, %v4257
    %v4259 = vand.u32 %v4258, 4294901760
    %v4260 = vsub.f32 %v4258, %v4259
    %v4261 = vand.u32 %v4260, 4294901760
    %4262 = vmatpush.msra.mxu0 %v4261
    %v4263 = vand.u32 %v4146, 4294901760
    %v4264 = vsub.f32 %v4146, %v4263
    %v4265 = vand.u32 %v4264, 4294901760
    %v4266 = vsub.f32 %v4264, %v4265
    %v4267 = vand.u32 %v4266, 4294901760
    %4268 = vmatpush.msra.mxu0 %v4267
    %v4269 = vand.u32 %v4145, 4294901760
    %v4270 = vsub.f32 %v4145, %v4269
    %v4271 = vand.u32 %v4270, 4294901760
    %v4272 = vsub.f32 %v4270, %v4271
    %v4273 = vand.u32 %v4272, 4294901760
    %4274 = vmatpush.msra.mxu0 %v4273
    %v4275 = vand.u32 %v4144, 4294901760
    %v4276 = vsub.f32 %v4144, %v4275
    %v4277 = vand.u32 %v4276, 4294901760
    %v4278 = vsub.f32 %v4276, %v4277
    %v4279 = vand.u32 %v4278, 4294901760
    %4280 = vmatpush.msra.mxu0 %v4279
    %v4281 = vand.u32 %v4143, 4294901760
    %v4282 = vsub.f32 %v4143, %v4281
    %v4283 = vand.u32 %v4282, 4294901760
    %v4284 = vsub.f32 %v4282, %v4283
    %v4285 = vand.u32 %v4284, 4294901760
    %4286 = vmatpush.msra.mxu0 %v4285
    %v4287 = vand.u32 %v4142, 4294901760
    %v4288 = vsub.f32 %v4142, %v4287
    %v4289 = vand.u32 %v4288, 4294901760
    %v4290 = vsub.f32 %v4288, %v4289
    %v4291 = vand.u32 %v4290, 4294901760
    %4292 = vmatpush.msra.mxu0 %v4291
    %v4293 = vand.u32 %v4141, 4294901760
    %v4294 = vsub.f32 %v4141, %v4293
    %v4295 = vand.u32 %v4294, 4294901760
    %v4296 = vsub.f32 %v4294, %v4295
    %v4297 = vand.u32 %v4296, 4294901760
    %4298 = vmatpush.msra.mxu0 %v4297
    %v4299 = vand.u32 %v4140, 4294901760
    %v4300 = vsub.f32 %v4140, %v4299
    %v4301 = vand.u32 %v4300, 4294901760
    %v4302 = vsub.f32 %v4300, %v4301
    %v4303 = vand.u32 %v4302, 4294901760
    %4304 = vmatpush.msra.mxu0 %v4303
    %v4305 = vand.u32 %v4139, 4294901760
    %v4306 = vsub.f32 %v4139, %v4305
    %v4307 = vand.u32 %v4306, 4294901760
    %v4308 = vsub.f32 %v4306, %v4307
    %v4309 = vand.u32 %v4308, 4294901760
    %4310 = vmatpush.msra.mxu0 %v4309
    %v4311 = vand.u32 %v4138, 4294901760
    %v4312 = vsub.f32 %v4138, %v4311
    %v4313 = vand.u32 %v4312, 4294901760
    %v4314 = vsub.f32 %v4312, %v4313
    %v4315 = vand.u32 %v4314, 4294901760
    %4316 = vmatpush.msra.mxu0 %v4315
    %v4317 = vand.u32 %v4137, 4294901760
    %v4318 = vsub.f32 %v4137, %v4317
    %v4319 = vand.u32 %v4318, 4294901760
    %v4320 = vsub.f32 %v4318, %v4319
    %v4321 = vand.u32 %v4320, 4294901760
    %4322 = vmatpush.msra.mxu0 %v4321
    %v4323 = vand.u32 %v4136, 4294901760
    %v4324 = vsub.f32 %v4136, %v4323
    %v4325 = vand.u32 %v4324, 4294901760
    %v4326 = vsub.f32 %v4324, %v4325
    %v4327 = vand.u32 %v4326, 4294901760
    %4328 = vmatpush.msra.mxu0 %v4327
    %v4329 = vand.u32 %v412, 4294901760
    %4330 = vmatmul.f32.gmra.mxu0 %v4329
    %v4331 = vpop.f32.mrf.mxu0
    %v4332 = vadd.f32 %v4231, %v4331
    %4333 = vdwg.mxu0
    %v4334 = vand.u32 %v4151, 4294901760
    %v4335 = vsub.f32 %v4151, %v4334
    %4336 = vmatpush.msra.mxu0 %v4335
    %v4337 = vand.u32 %v4150, 4294901760
    %v4338 = vsub.f32 %v4150, %v4337
    %4339 = vmatpush.msra.mxu0 %v4338
    %v4340 = vand.u32 %v4149, 4294901760
    %v4341 = vsub.f32 %v4149, %v4340
    %4342 = vmatpush.msra.mxu0 %v4341
    %v4343 = vand.u32 %v4148, 4294901760
    %v4344 = vsub.f32 %v4148, %v4343
    %4345 = vmatpush.msra.mxu0 %v4344
    %v4346 = vand.u32 %v4147, 4294901760
    %v4347 = vsub.f32 %v4147, %v4346
    %4348 = vmatpush.msra.mxu0 %v4347
    %v4349 = vand.u32 %v4146, 4294901760
    %v4350 = vsub.f32 %v4146, %v4349
    %4351 = vmatpush.msra.mxu0 %v4350
    %v4352 = vand.u32 %v4145, 4294901760
    %v4353 = vsub.f32 %v4145, %v4352
    %4354 = vmatpush.msra.mxu0 %v4353
    %v4355 = vand.u32 %v4144, 4294901760
    %v4356 = vsub.f32 %v4144, %v4355
    %4357 = vmatpush.msra.mxu0 %v4356
    %v4358 = vand.u32 %v4143, 4294901760
    %v4359 = vsub.f32 %v4143, %v4358
    %4360 = vmatpush.msra.mxu0 %v4359
    %v4361 = vand.u32 %v4142, 4294901760
    %v4362 = vsub.f32 %v4142, %v4361
    %4363 = vmatpush.msra.mxu0 %v4362
    %v4364 = vand.u32 %v4141, 4294901760
    %v4365 = vsub.f32 %v4141, %v4364
    %4366 = vmatpush.msra.mxu0 %v4365
    %v4367 = vand.u32 %v4140, 4294901760
    %v4368 = vsub.f32 %v4140, %v4367
    %4369 = vmatpush.msra.mxu0 %v4368
    %v4370 = vand.u32 %v4139, 4294901760
    %v4371 = vsub.f32 %v4139, %v4370
    %4372 = vmatpush.msra.mxu0 %v4371
    %v4373 = vand.u32 %v4138, 4294901760
    %v4374 = vsub.f32 %v4138, %v4373
    %4375 = vmatpush.msra.mxu0 %v4374
    %v4376 = vand.u32 %v4137, 4294901760
    %v4377 = vsub.f32 %v4137, %v4376
    %4378 = vmatpush.msra.mxu0 %v4377
    %v4379 = vand.u32 %v4136, 4294901760
    %v4380 = vsub.f32 %v4136, %v4379
    %4381 = vmatpush.msra.mxu0 %v4380
    %v4382 = vand.u32 %v412, 4294901760
    %v4383 = vsub.f32 %v412, %v4382
    %4384 = vmatmul.f32.gmra.mxu0 %v4383
    %v4385 = vpop.f32.mrf.mxu0
    %v4386 = vadd.f32 %v4332, %v4385
    %4387 = vdwg.mxu0
    %v4388 = vand.u32 %v4151, 4294901760
    %4389 = vmatpush.msra.mxu0 %v4388
    %v4390 = vand.u32 %v4150, 4294901760
    %4391 = vmatpush.msra.mxu0 %v4390
    %v4392 = vand.u32 %v4149, 4294901760
    %4393 = vmatpush.msra.mxu0 %v4392
    %v4394 = vand.u32 %v4148, 4294901760
    %4395 = vmatpush.msra.mxu0 %v4394
    %v4396 = vand.u32 %v4147, 4294901760
    %4397 = vmatpush.msra.mxu0 %v4396
    %v4398 = vand.u32 %v4146, 4294901760
    %4399 = vmatpush.msra.mxu0 %v4398
    %v4400 = vand.u32 %v4145, 4294901760
    %4401 = vmatpush.msra.mxu0 %v4400
    %v4402 = vand.u32 %v4144, 4294901760
    %4403 = vmatpush.msra.mxu0 %v4402
    %v4404 = vand.u32 %v4143, 4294901760
    %4405 = vmatpush.msra.mxu0 %v4404
    %v4406 = vand.u32 %v4142, 4294901760
    %4407 = vmatpush.msra.mxu0 %v4406
    %v4408 = vand.u32 %v4141, 4294901760
    %4409 = vmatpush.msra.mxu0 %v4408
    %v4410 = vand.u32 %v4140, 4294901760
    %4411 = vmatpush.msra.mxu0 %v4410
    %v4412 = vand.u32 %v4139, 4294901760
    %4413 = vmatpush.msra.mxu0 %v4412
    %v4414 = vand.u32 %v4138, 4294901760
    %4415 = vmatpush.msra.mxu0 %v4414
    %v4416 = vand.u32 %v4137, 4294901760
    %4417 = vmatpush.msra.mxu0 %v4416
    %v4418 = vand.u32 %v4136, 4294901760
    %4419 = vmatpush.msra.mxu0 %v4418
    %v4420 = vand.u32 %v412, 4294901760
    %v4421 = vsub.f32 %v412, %v4420
    %v4422 = vand.u32 %v4421, 4294901760
    %4423 = vmatmul.f32.gmra.mxu0 %v4422
    %v4424 = vpop.f32.mrf.mxu0
    %v4425 = vadd.f32 %v4386, %v4424
    %4426 = vdwg.mxu0
    %v4427 = vand.u32 %v4151, 4294901760
    %v4428 = vsub.f32 %v4151, %v4427
    %v4429 = vand.u32 %v4428, 4294901760
    %4430 = vmatpush.msra.mxu0 %v4429
    %v4431 = vand.u32 %v4150, 4294901760
    %v4432 = vsub.f32 %v4150, %v4431
    %v4433 = vand.u32 %v4432, 4294901760
    %4434 = vmatpush.msra.mxu0 %v4433
    %v4435 = vand.u32 %v4149, 4294901760
    %v4436 = vsub.f32 %v4149, %v4435
    %v4437 = vand.u32 %v4436, 4294901760
    %4438 = vmatpush.msra.mxu0 %v4437
    %v4439 = vand.u32 %v4148, 4294901760
    %v4440 = vsub.f32 %v4148, %v4439
    %v4441 = vand.u32 %v4440, 4294901760
    %4442 = vmatpush.msra.mxu0 %v4441
    %v4443 = vand.u32 %v4147, 4294901760
    %v4444 = vsub.f32 %v4147, %v4443
    %v4445 = vand.u32 %v4444, 4294901760
    %4446 = vmatpush.msra.mxu0 %v4445
    %v4447 = vand.u32 %v4146, 4294901760
    %v4448 = vsub.f32 %v4146, %v4447
    %v4449 = vand.u32 %v4448, 4294901760
    %4450 = vmatpush.msra.mxu0 %v4449
    %v4451 = vand.u32 %v4145, 4294901760
    %v4452 = vsub.f32 %v4145, %v4451
    %v4453 = vand.u32 %v4452, 4294901760
    %4454 = vmatpush.msra.mxu0 %v4453
    %v4455 = vand.u32 %v4144, 4294901760
    %v4456 = vsub.f32 %v4144, %v4455
    %v4457 = vand.u32 %v4456, 4294901760
    %4458 = vmatpush.msra.mxu0 %v4457
    %v4459 = vand.u32 %v4143, 4294901760
    %v4460 = vsub.f32 %v4143, %v4459
    %v4461 = vand.u32 %v4460, 4294901760
    %4462 = vmatpush.msra.mxu0 %v4461
    %v4463 = vand.u32 %v4142, 4294901760
    %v4464 = vsub.f32 %v4142, %v4463
    %v4465 = vand.u32 %v4464, 4294901760
    %4466 = vmatpush.msra.mxu0 %v4465
    %v4467 = vand.u32 %v4141, 4294901760
    %v4468 = vsub.f32 %v4141, %v4467
    %v4469 = vand.u32 %v4468, 4294901760
    %4470 = vmatpush.msra.mxu0 %v4469
    %v4471 = vand.u32 %v4140, 4294901760
    %v4472 = vsub.f32 %v4140, %v4471
    %v4473 = vand.u32 %v4472, 4294901760
    %4474 = vmatpush.msra.mxu0 %v4473
    %v4475 = vand.u32 %v4139, 4294901760
    %v4476 = vsub.f32 %v4139, %v4475
    %v4477 = vand.u32 %v4476, 4294901760
    %4478 = vmatpush.msra.mxu0 %v4477
    %v4479 = vand.u32 %v4138, 4294901760
    %v4480 = vsub.f32 %v4138, %v4479
    %v4481 = vand.u32 %v4480, 4294901760
    %4482 = vmatpush.msra.mxu0 %v4481
    %v4483 = vand.u32 %v4137, 4294901760
    %v4484 = vsub.f32 %v4137, %v4483
    %v4485 = vand.u32 %v4484, 4294901760
    %4486 = vmatpush.msra.mxu0 %v4485
    %v4487 = vand.u32 %v4136, 4294901760
    %v4488 = vsub.f32 %v4136, %v4487
    %v4489 = vand.u32 %v4488, 4294901760
    %4490 = vmatpush.msra.mxu0 %v4489
    %v4491 = vand.u32 %v412, 4294901760
    %4492 = vmatmul.f32.gmra.mxu0 %v4491
    %v4493 = vpop.f32.mrf.mxu0
    %v4494 = vadd.f32 %v4425, %v4493
    %4495 = vdwg.mxu0
    %v4496 = vand.u32 %v4151, 4294901760
    %4497 = vmatpush.msra.mxu0 %v4496
    %v4498 = vand.u32 %v4150, 4294901760
    %4499 = vmatpush.msra.mxu0 %v4498
    %v4500 = vand.u32 %v4149, 4294901760
    %4501 = vmatpush.msra.mxu0 %v4500
    %v4502 = vand.u32 %v4148, 4294901760
    %4503 = vmatpush.msra.mxu0 %v4502
    %v4504 = vand.u32 %v4147, 4294901760
    %4505 = vmatpush.msra.mxu0 %v4504
    %v4506 = vand.u32 %v4146, 4294901760
    %4507 = vmatpush.msra.mxu0 %v4506
    %v4508 = vand.u32 %v4145, 4294901760
    %4509 = vmatpush.msra.mxu0 %v4508
    %v4510 = vand.u32 %v4144, 4294901760
    %4511 = vmatpush.msra.mxu0 %v4510
    %v4512 = vand.u32 %v4143, 4294901760
    %4513 = vmatpush.msra.mxu0 %v4512
    %v4514 = vand.u32 %v4142, 4294901760
    %4515 = vmatpush.msra.mxu0 %v4514
    %v4516 = vand.u32 %v4141, 4294901760
    %4517 = vmatpush.msra.mxu0 %v4516
    %v4518 = vand.u32 %v4140, 4294901760
    %4519 = vmatpush.msra.mxu0 %v4518
    %v4520 = vand.u32 %v4139, 4294901760
    %4521 = vmatpush.msra.mxu0 %v4520
    %v4522 = vand.u32 %v4138, 4294901760
    %4523 = vmatpush.msra.mxu0 %v4522
    %v4524 = vand.u32 %v4137, 4294901760
    %4525 = vmatpush.msra.mxu0 %v4524
    %v4526 = vand.u32 %v4136, 4294901760
    %4527 = vmatpush.msra.mxu0 %v4526
    %v4528 = vand.u32 %v412, 4294901760
    %4529 = vmatmul.f32.gmra.mxu0 %v4528
    %v4530 = vpop.f32.mrf.mxu0
    %v4531 = vadd.f32 %v4494, %v4530
    %4532 = vdwg.mxu0
    %v4533 = vand.u32 %v4167, 4294901760
    %4534 = vmatpush.msra.mxu0 %v4533
    %v4535 = vand.u32 %v4166, 4294901760
    %4536 = vmatpush.msra.mxu0 %v4535
    %v4537 = vand.u32 %v4165, 4294901760
    %4538 = vmatpush.msra.mxu0 %v4537
    %v4539 = vand.u32 %v4164, 4294901760
    %4540 = vmatpush.msra.mxu0 %v4539
    %v4541 = vand.u32 %v4163, 4294901760
    %4542 = vmatpush.msra.mxu0 %v4541
    %v4543 = vand.u32 %v4162, 4294901760
    %4544 = vmatpush.msra.mxu0 %v4543
    %v4545 = vand.u32 %v4161, 4294901760
    %4546 = vmatpush.msra.mxu0 %v4545
    %v4547 = vand.u32 %v4160, 4294901760
    %4548 = vmatpush.msra.mxu0 %v4547
    %v4549 = vand.u32 %v4159, 4294901760
    %4550 = vmatpush.msra.mxu0 %v4549
    %v4551 = vand.u32 %v4158, 4294901760
    %4552 = vmatpush.msra.mxu0 %v4551
    %v4553 = vand.u32 %v4157, 4294901760
    %4554 = vmatpush.msra.mxu0 %v4553
    %v4555 = vand.u32 %v4156, 4294901760
    %4556 = vmatpush.msra.mxu0 %v4555
    %v4557 = vand.u32 %v4155, 4294901760
    %4558 = vmatpush.msra.mxu0 %v4557
    %v4559 = vand.u32 %v4154, 4294901760
    %4560 = vmatpush.msra.mxu0 %v4559
    %v4561 = vand.u32 %v4153, 4294901760
    %4562 = vmatpush.msra.mxu0 %v4561
    %v4563 = vand.u32 %v4152, 4294901760
    %4564 = vmatpush.msra.mxu0 %v4563
    %v4565 = vand.u32 %v413, 4294901760
    %v4566 = vsub.f32 %v413, %v4565
    %v4567 = vand.u32 %v4566, 4294901760
    %v4568 = vsub.f32 %v4566, %v4567
    %v4569 = vand.u32 %v4568, 4294901760
    %4570 = vmatmul.f32.gmra.mxu0 %v4569
    %v4571 = vpop.f32.mrf.mxu0
    %v4572 = vadd.f32 %v4531, %v4571
    %4573 = vdwg.mxu0
    %v4574 = vand.u32 %v4167, 4294901760
    %v4575 = vsub.f32 %v4167, %v4574
    %v4576 = vand.u32 %v4575, 4294901760
    %v4577 = vsub.f32 %v4575, %v4576
    %v4578 = vand.u32 %v4577, 4294901760
    %4579 = vmatpush.msra.mxu0 %v4578
    %v4580 = vand.u32 %v4166, 4294901760
    %v4581 = vsub.f32 %v4166, %v4580
    %v4582 = vand.u32 %v4581, 4294901760
    %v4583 = vsub.f32 %v4581, %v4582
    %v4584 = vand.u32 %v4583, 4294901760
    %4585 = vmatpush.msra.mxu0 %v4584
    %v4586 = vand.u32 %v4165, 4294901760
    %v4587 = vsub.f32 %v4165, %v4586
    %v4588 = vand.u32 %v4587, 4294901760
    %v4589 = vsub.f32 %v4587, %v4588
    %v4590 = vand.u32 %v4589, 4294901760
    %4591 = vmatpush.msra.mxu0 %v4590
    %v4592 = vand.u32 %v4164, 4294901760
    %v4593 = vsub.f32 %v4164, %v4592
    %v4594 = vand.u32 %v4593, 4294901760
    %v4595 = vsub.f32 %v4593, %v4594
    %v4596 = vand.u32 %v4595, 4294901760
    %4597 = vmatpush.msra.mxu0 %v4596
    %v4598 = vand.u32 %v4163, 4294901760
    %v4599 = vsub.f32 %v4163, %v4598
    %v4600 = vand.u32 %v4599, 4294901760
    %v4601 = vsub.f32 %v4599, %v4600
    %v4602 = vand.u32 %v4601, 4294901760
    %4603 = vmatpush.msra.mxu0 %v4602
    %v4604 = vand.u32 %v4162, 4294901760
    %v4605 = vsub.f32 %v4162, %v4604
    %v4606 = vand.u32 %v4605, 4294901760
    %v4607 = vsub.f32 %v4605, %v4606
    %v4608 = vand.u32 %v4607, 4294901760
    %4609 = vmatpush.msra.mxu0 %v4608
    %v4610 = vand.u32 %v4161, 4294901760
    %v4611 = vsub.f32 %v4161, %v4610
    %v4612 = vand.u32 %v4611, 4294901760
    %v4613 = vsub.f32 %v4611, %v4612
    %v4614 = vand.u32 %v4613, 4294901760
    %4615 = vmatpush.msra.mxu0 %v4614
    %v4616 = vand.u32 %v4160, 4294901760
    %v4617 = vsub.f32 %v4160, %v4616
    %v4618 = vand.u32 %v4617, 4294901760
    %v4619 = vsub.f32 %v4617, %v4618
    %v4620 = vand.u32 %v4619, 4294901760
    %4621 = vmatpush.msra.mxu0 %v4620
    %v4622 = vand.u32 %v4159, 4294901760
    %v4623 = vsub.f32 %v4159, %v4622
    %v4624 = vand.u32 %v4623, 4294901760
    %v4625 = vsub.f32 %v4623, %v4624
    %v4626 = vand.u32 %v4625, 4294901760
    %4627 = vmatpush.msra.mxu0 %v4626
    %v4628 = vand.u32 %v4158, 4294901760
    %v4629 = vsub.f32 %v4158, %v4628
    %v4630 = vand.u32 %v4629, 4294901760
    %v4631 = vsub.f32 %v4629, %v4630
    %v4632 = vand.u32 %v4631, 4294901760
    %4633 = vmatpush.msra.mxu0 %v4632
    %v4634 = vand.u32 %v4157, 4294901760
    %v4635 = vsub.f32 %v4157, %v4634
    %v4636 = vand.u32 %v4635, 4294901760
    %v4637 = vsub.f32 %v4635, %v4636
    %v4638 = vand.u32 %v4637, 4294901760
    %4639 = vmatpush.msra.mxu0 %v4638
    %v4640 = vand.u32 %v4156, 4294901760
    %v4641 = vsub.f32 %v4156, %v4640
    %v4642 = vand.u32 %v4641, 4294901760
    %v4643 = vsub.f32 %v4641, %v4642
    %v4644 = vand.u32 %v4643, 4294901760
    %4645 = vmatpush.msra.mxu0 %v4644
    %v4646 = vand.u32 %v4155, 4294901760
    %v4647 = vsub.f32 %v4155, %v4646
    %v4648 = vand.u32 %v4647, 4294901760
    %v4649 = vsub.f32 %v4647, %v4648
    %v4650 = vand.u32 %v4649, 4294901760
    %4651 = vmatpush.msra.mxu0 %v4650
    %v4652 = vand.u32 %v4154, 4294901760
    %v4653 = vsub.f32 %v4154, %v4652
    %v4654 = vand.u32 %v4653, 4294901760
    %v4655 = vsub.f32 %v4653, %v4654
    %v4656 = vand.u32 %v4655, 4294901760
    %4657 = vmatpush.msra.mxu0 %v4656
    %v4658 = vand.u32 %v4153, 4294901760
    %v4659 = vsub.f32 %v4153, %v4658
    %v4660 = vand.u32 %v4659, 4294901760
    %v4661 = vsub.f32 %v4659, %v4660
    %v4662 = vand.u32 %v4661, 4294901760
    %4663 = vmatpush.msra.mxu0 %v4662
    %v4664 = vand.u32 %v4152, 4294901760
    %v4665 = vsub.f32 %v4152, %v4664
    %v4666 = vand.u32 %v4665, 4294901760
    %v4667 = vsub.f32 %v4665, %v4666
    %v4668 = vand.u32 %v4667, 4294901760
    %4669 = vmatpush.msra.mxu0 %v4668
    %v4670 = vand.u32 %v413, 4294901760
    %4671 = vmatmul.f32.gmra.mxu0 %v4670
    %v4672 = vpop.f32.mrf.mxu0
    %v4673 = vadd.f32 %v4572, %v4672
    %4674 = vdwg.mxu0
    %v4675 = vand.u32 %v4167, 4294901760
    %v4676 = vsub.f32 %v4167, %v4675
    %4677 = vmatpush.msra.mxu0 %v4676
    %v4678 = vand.u32 %v4166, 4294901760
    %v4679 = vsub.f32 %v4166, %v4678
    %4680 = vmatpush.msra.mxu0 %v4679
    %v4681 = vand.u32 %v4165, 4294901760
    %v4682 = vsub.f32 %v4165, %v4681
    %4683 = vmatpush.msra.mxu0 %v4682
    %v4684 = vand.u32 %v4164, 4294901760
    %v4685 = vsub.f32 %v4164, %v4684
    %4686 = vmatpush.msra.mxu0 %v4685
    %v4687 = vand.u32 %v4163, 4294901760
    %v4688 = vsub.f32 %v4163, %v4687
    %4689 = vmatpush.msra.mxu0 %v4688
    %v4690 = vand.u32 %v4162, 4294901760
    %v4691 = vsub.f32 %v4162, %v4690
    %4692 = vmatpush.msra.mxu0 %v4691
    %v4693 = vand.u32 %v4161, 4294901760
    %v4694 = vsub.f32 %v4161, %v4693
    %4695 = vmatpush.msra.mxu0 %v4694
    %v4696 = vand.u32 %v4160, 4294901760
    %v4697 = vsub.f32 %v4160, %v4696
    %4698 = vmatpush.msra.mxu0 %v4697
    %v4699 = vand.u32 %v4159, 4294901760
    %v4700 = vsub.f32 %v4159, %v4699
    %4701 = vmatpush.msra.mxu0 %v4700
    %v4702 = vand.u32 %v4158, 4294901760
    %v4703 = vsub.f32 %v4158, %v4702
    %4704 = vmatpush.msra.mxu0 %v4703
    %v4705 = vand.u32 %v4157, 4294901760
    %v4706 = vsub.f32 %v4157, %v4705
    %4707 = vmatpush.msra.mxu0 %v4706
    %v4708 = vand.u32 %v4156, 4294901760
    %v4709 = vsub.f32 %v4156, %v4708
    %4710 = vmatpush.msra.mxu0 %v4709
    %v4711 = vand.u32 %v4155, 4294901760
    %v4712 = vsub.f32 %v4155, %v4711
    %4713 = vmatpush.msra.mxu0 %v4712
    %v4714 = vand.u32 %v4154, 4294901760
    %v4715 = vsub.f32 %v4154, %v4714
    %4716 = vmatpush.msra.mxu0 %v4715
    %v4717 = vand.u32 %v4153, 4294901760
    %v4718 = vsub.f32 %v4153, %v4717
    %4719 = vmatpush.msra.mxu0 %v4718
    %v4720 = vand.u32 %v4152, 4294901760
    %v4721 = vsub.f32 %v4152, %v4720
    %4722 = vmatpush.msra.mxu0 %v4721
    %v4723 = vand.u32 %v413, 4294901760
    %v4724 = vsub.f32 %v413, %v4723
    %4725 = vmatmul.f32.gmra.mxu0 %v4724
    %v4726 = vpop.f32.mrf.mxu0
    %v4727 = vadd.f32 %v4673, %v4726
    %4728 = vdwg.mxu0
    %v4729 = vand.u32 %v4167, 4294901760
    %4730 = vmatpush.msra.mxu0 %v4729
    %v4731 = vand.u32 %v4166, 4294901760
    %4732 = vmatpush.msra.mxu0 %v4731
    %v4733 = vand.u32 %v4165, 4294901760
    %4734 = vmatpush.msra.mxu0 %v4733
    %v4735 = vand.u32 %v4164, 4294901760
    %4736 = vmatpush.msra.mxu0 %v4735
    %v4737 = vand.u32 %v4163, 4294901760
    %4738 = vmatpush.msra.mxu0 %v4737
    %v4739 = vand.u32 %v4162, 4294901760
    %4740 = vmatpush.msra.mxu0 %v4739
    %v4741 = vand.u32 %v4161, 4294901760
    %4742 = vmatpush.msra.mxu0 %v4741
    %v4743 = vand.u32 %v4160, 4294901760
    %4744 = vmatpush.msra.mxu0 %v4743
    %v4745 = vand.u32 %v4159, 4294901760
    %4746 = vmatpush.msra.mxu0 %v4745
    %v4747 = vand.u32 %v4158, 4294901760
    %4748 = vmatpush.msra.mxu0 %v4747
    %v4749 = vand.u32 %v4157, 4294901760
    %4750 = vmatpush.msra.mxu0 %v4749
    %v4751 = vand.u32 %v4156, 4294901760
    %4752 = vmatpush.msra.mxu0 %v4751
    %v4753 = vand.u32 %v4155, 4294901760
    %4754 = vmatpush.msra.mxu0 %v4753
    %v4755 = vand.u32 %v4154, 4294901760
    %4756 = vmatpush.msra.mxu0 %v4755
    %v4757 = vand.u32 %v4153, 4294901760
    %4758 = vmatpush.msra.mxu0 %v4757
    %v4759 = vand.u32 %v4152, 4294901760
    %4760 = vmatpush.msra.mxu0 %v4759
    %v4761 = vand.u32 %v413, 4294901760
    %v4762 = vsub.f32 %v413, %v4761
    %v4763 = vand.u32 %v4762, 4294901760
    %4764 = vmatmul.f32.gmra.mxu0 %v4763
    %v4765 = vpop.f32.mrf.mxu0
    %v4766 = vadd.f32 %v4727, %v4765
    %4767 = vdwg.mxu0
    %v4768 = vand.u32 %v4167, 4294901760
    %v4769 = vsub.f32 %v4167, %v4768
    %v4770 = vand.u32 %v4769, 4294901760
    %4771 = vmatpush.msra.mxu0 %v4770
    %v4772 = vand.u32 %v4166, 4294901760
    %v4773 = vsub.f32 %v4166, %v4772
    %v4774 = vand.u32 %v4773, 4294901760
    %4775 = vmatpush.msra.mxu0 %v4774
    %v4776 = vand.u32 %v4165, 4294901760
    %v4777 = vsub.f32 %v4165, %v4776
    %v4778 = vand.u32 %v4777, 4294901760
    %4779 = vmatpush.msra.mxu0 %v4778
    %v4780 = vand.u32 %v4164, 4294901760
    %v4781 = vsub.f32 %v4164, %v4780
    %v4782 = vand.u32 %v4781, 4294901760
    %4783 = vmatpush.msra.mxu0 %v4782
    %v4784 = vand.u32 %v4163, 4294901760
    %v4785 = vsub.f32 %v4163, %v4784
    %v4786 = vand.u32 %v4785, 4294901760
    %4787 = vmatpush.msra.mxu0 %v4786
    %v4788 = vand.u32 %v4162, 4294901760
    %v4789 = vsub.f32 %v4162, %v4788
    %v4790 = vand.u32 %v4789, 4294901760
    %4791 = vmatpush.msra.mxu0 %v4790
    %v4792 = vand.u32 %v4161, 4294901760
    %v4793 = vsub.f32 %v4161, %v4792
    %v4794 = vand.u32 %v4793, 4294901760
    %4795 = vmatpush.msra.mxu0 %v4794
    %v4796 = vand.u32 %v4160, 4294901760
    %v4797 = vsub.f32 %v4160, %v4796
    %v4798 = vand.u32 %v4797, 4294901760
    %4799 = vmatpush.msra.mxu0 %v4798
    %v4800 = vand.u32 %v4159, 4294901760
    %v4801 = vsub.f32 %v4159, %v4800
    %v4802 = vand.u32 %v4801, 4294901760
    %4803 = vmatpush.msra.mxu0 %v4802
    %v4804 = vand.u32 %v4158, 4294901760
    %v4805 = vsub.f32 %v4158, %v4804
    %v4806 = vand.u32 %v4805, 4294901760
    %4807 = vmatpush.msra.mxu0 %v4806
    %v4808 = vand.u32 %v4157, 4294901760
    %v4809 = vsub.f32 %v4157, %v4808
    %v4810 = vand.u32 %v4809, 4294901760
    %4811 = vmatpush.msra.mxu0 %v4810
    %v4812 = vand.u32 %v4156, 4294901760
    %v4813 = vsub.f32 %v4156, %v4812
    %v4814 = vand.u32 %v4813, 4294901760
    %4815 = vmatpush.msra.mxu0 %v4814
    %v4816 = vand.u32 %v4155, 4294901760
    %v4817 = vsub.f32 %v4155, %v4816
    %v4818 = vand.u32 %v4817, 4294901760
    %4819 = vmatpush.msra.mxu0 %v4818
    %v4820 = vand.u32 %v4154, 4294901760
    %v4821 = vsub.f32 %v4154, %v4820
    %v4822 = vand.u32 %v4821, 4294901760
    %4823 = vmatpush.msra.mxu0 %v4822
    %v4824 = vand.u32 %v4153, 4294901760
    %v4825 = vsub.f32 %v4153, %v4824
    %v4826 = vand.u32 %v4825, 4294901760
    %4827 = vmatpush.msra.mxu0 %v4826
    %v4828 = vand.u32 %v4152, 4294901760
    %v4829 = vsub.f32 %v4152, %v4828
    %v4830 = vand.u32 %v4829, 4294901760
    %4831 = vmatpush.msra.mxu0 %v4830
    %v4832 = vand.u32 %v413, 4294901760
    %4833 = vmatmul.f32.gmra.mxu0 %v4832
    %v4834 = vpop.f32.mrf.mxu0
    %v4835 = vadd.f32 %v4766, %v4834
    %4836 = vdwg.mxu0
    %v4837 = vand.u32 %v4167, 4294901760
    %4838 = vmatpush.msra.mxu0 %v4837
    %v4839 = vand.u32 %v4166, 4294901760
    %4840 = vmatpush.msra.mxu0 %v4839
    %v4841 = vand.u32 %v4165, 4294901760
    %4842 = vmatpush.msra.mxu0 %v4841
    %v4843 = vand.u32 %v4164, 4294901760
    %4844 = vmatpush.msra.mxu0 %v4843
    %v4845 = vand.u32 %v4163, 4294901760
    %4846 = vmatpush.msra.mxu0 %v4845
    %v4847 = vand.u32 %v4162, 4294901760
    %4848 = vmatpush.msra.mxu0 %v4847
    %v4849 = vand.u32 %v4161, 4294901760
    %4850 = vmatpush.msra.mxu0 %v4849
    %v4851 = vand.u32 %v4160, 4294901760
    %4852 = vmatpush.msra.mxu0 %v4851
    %v4853 = vand.u32 %v4159, 4294901760
    %4854 = vmatpush.msra.mxu0 %v4853
    %v4855 = vand.u32 %v4158, 4294901760
    %4856 = vmatpush.msra.mxu0 %v4855
    %v4857 = vand.u32 %v4157, 4294901760
    %4858 = vmatpush.msra.mxu0 %v4857
    %v4859 = vand.u32 %v4156, 4294901760
    %4860 = vmatpush.msra.mxu0 %v4859
    %v4861 = vand.u32 %v4155, 4294901760
    %4862 = vmatpush.msra.mxu0 %v4861
    %v4863 = vand.u32 %v4154, 4294901760
    %4864 = vmatpush.msra.mxu0 %v4863
    %v4865 = vand.u32 %v4153, 4294901760
    %4866 = vmatpush.msra.mxu0 %v4865
    %v4867 = vand.u32 %v4152, 4294901760
    %4868 = vmatpush.msra.mxu0 %v4867
    %v4869 = vand.u32 %v413, 4294901760
    %4870 = vmatmul.f32.gmra.mxu0 %v4869
    %v4871 = vpop.f32.mrf.mxu0
    %v4872 = vadd.f32 %v4835, %v4871
    %4873 = vdwg.mxu0
    %v4874 = vand.u32 %v4183, 4294901760
    %4875 = vmatpush.msra.mxu0 %v4874
    %v4876 = vand.u32 %v4182, 4294901760
    %4877 = vmatpush.msra.mxu0 %v4876
    %v4878 = vand.u32 %v4181, 4294901760
    %4879 = vmatpush.msra.mxu0 %v4878
    %v4880 = vand.u32 %v4180, 4294901760
    %4881 = vmatpush.msra.mxu0 %v4880
    %v4882 = vand.u32 %v4179, 4294901760
    %4883 = vmatpush.msra.mxu0 %v4882
    %v4884 = vand.u32 %v4178, 4294901760
    %4885 = vmatpush.msra.mxu0 %v4884
    %v4886 = vand.u32 %v4177, 4294901760
    %4887 = vmatpush.msra.mxu0 %v4886
    %v4888 = vand.u32 %v4176, 4294901760
    %4889 = vmatpush.msra.mxu0 %v4888
    %v4890 = vand.u32 %v4175, 4294901760
    %4891 = vmatpush.msra.mxu0 %v4890
    %v4892 = vand.u32 %v4174, 4294901760
    %4893 = vmatpush.msra.mxu0 %v4892
    %v4894 = vand.u32 %v4173, 4294901760
    %4895 = vmatpush.msra.mxu0 %v4894
    %v4896 = vand.u32 %v4172, 4294901760
    %4897 = vmatpush.msra.mxu0 %v4896
    %v4898 = vand.u32 %v4171, 4294901760
    %4899 = vmatpush.msra.mxu0 %v4898
    %v4900 = vand.u32 %v4170, 4294901760
    %4901 = vmatpush.msra.mxu0 %v4900
    %v4902 = vand.u32 %v4169, 4294901760
    %4903 = vmatpush.msra.mxu0 %v4902
    %v4904 = vand.u32 %v4168, 4294901760
    %4905 = vmatpush.msra.mxu0 %v4904
    %v4906 = vand.u32 %v414, 4294901760
    %v4907 = vsub.f32 %v414, %v4906
    %v4908 = vand.u32 %v4907, 4294901760
    %v4909 = vsub.f32 %v4907, %v4908
    %v4910 = vand.u32 %v4909, 4294901760
    %4911 = vmatmul.f32.gmra.mxu0 %v4910
    %v4912 = vpop.f32.mrf.mxu0
    %v4913 = vadd.f32 %v4872, %v4912
    %4914 = vdwg.mxu0
    %v4915 = vand.u32 %v4183, 4294901760
    %v4916 = vsub.f32 %v4183, %v4915
    %v4917 = vand.u32 %v4916, 4294901760
    %v4918 = vsub.f32 %v4916, %v4917
    %v4919 = vand.u32 %v4918, 4294901760
    %4920 = vmatpush.msra.mxu0 %v4919
    %v4921 = vand.u32 %v4182, 4294901760
    %v4922 = vsub.f32 %v4182, %v4921
    %v4923 = vand.u32 %v4922, 4294901760
    %v4924 = vsub.f32 %v4922, %v4923
    %v4925 = vand.u32 %v4924, 4294901760
    %4926 = vmatpush.msra.mxu0 %v4925
    %v4927 = vand.u32 %v4181, 4294901760
    %v4928 = vsub.f32 %v4181, %v4927
    %v4929 = vand.u32 %v4928, 4294901760
    %v4930 = vsub.f32 %v4928, %v4929
    %v4931 = vand.u32 %v4930, 4294901760
    %4932 = vmatpush.msra.mxu0 %v4931
    %v4933 = vand.u32 %v4180, 4294901760
    %v4934 = vsub.f32 %v4180, %v4933
    %v4935 = vand.u32 %v4934, 4294901760
    %v4936 = vsub.f32 %v4934, %v4935
    %v4937 = vand.u32 %v4936, 4294901760
    %4938 = vmatpush.msra.mxu0 %v4937
    %v4939 = vand.u32 %v4179, 4294901760
    %v4940 = vsub.f32 %v4179, %v4939
    %v4941 = vand.u32 %v4940, 4294901760
    %v4942 = vsub.f32 %v4940, %v4941
    %v4943 = vand.u32 %v4942, 4294901760
    %4944 = vmatpush.msra.mxu0 %v4943
    %v4945 = vand.u32 %v4178, 4294901760
    %v4946 = vsub.f32 %v4178, %v4945
    %v4947 = vand.u32 %v4946, 4294901760
    %v4948 = vsub.f32 %v4946, %v4947
    %v4949 = vand.u32 %v4948, 4294901760
    %4950 = vmatpush.msra.mxu0 %v4949
    %v4951 = vand.u32 %v4177, 4294901760
    %v4952 = vsub.f32 %v4177, %v4951
    %v4953 = vand.u32 %v4952, 4294901760
    %v4954 = vsub.f32 %v4952, %v4953
    %v4955 = vand.u32 %v4954, 4294901760
    %4956 = vmatpush.msra.mxu0 %v4955
    %v4957 = vand.u32 %v4176, 4294901760
    %v4958 = vsub.f32 %v4176, %v4957
    %v4959 = vand.u32 %v4958, 4294901760
    %v4960 = vsub.f32 %v4958, %v4959
    %v4961 = vand.u32 %v4960, 4294901760
    %4962 = vmatpush.msra.mxu0 %v4961
    %v4963 = vand.u32 %v4175, 4294901760
    %v4964 = vsub.f32 %v4175, %v4963
    %v4965 = vand.u32 %v4964, 4294901760
    %v4966 = vsub.f32 %v4964, %v4965
    %v4967 = vand.u32 %v4966, 4294901760
    %4968 = vmatpush.msra.mxu0 %v4967
    %v4969 = vand.u32 %v4174, 4294901760
    %v4970 = vsub.f32 %v4174, %v4969
    %v4971 = vand.u32 %v4970, 4294901760
    %v4972 = vsub.f32 %v4970, %v4971
    %v4973 = vand.u32 %v4972, 4294901760
    %4974 = vmatpush.msra.mxu0 %v4973
    %v4975 = vand.u32 %v4173, 4294901760
    %v4976 = vsub.f32 %v4173, %v4975
    %v4977 = vand.u32 %v4976, 4294901760
    %v4978 = vsub.f32 %v4976, %v4977
    %v4979 = vand.u32 %v4978, 4294901760
    %4980 = vmatpush.msra.mxu0 %v4979
    %v4981 = vand.u32 %v4172, 4294901760
    %v4982 = vsub.f32 %v4172, %v4981
    %v4983 = vand.u32 %v4982, 4294901760
    %v4984 = vsub.f32 %v4982, %v4983
    %v4985 = vand.u32 %v4984, 4294901760
    %4986 = vmatpush.msra.mxu0 %v4985
    %v4987 = vand.u32 %v4171, 4294901760
    %v4988 = vsub.f32 %v4171, %v4987
    %v4989 = vand.u32 %v4988, 4294901760
    %v4990 = vsub.f32 %v4988, %v4989
    %v4991 = vand.u32 %v4990, 4294901760
    %4992 = vmatpush.msra.mxu0 %v4991
    %v4993 = vand.u32 %v4170, 4294901760
    %v4994 = vsub.f32 %v4170, %v4993
    %v4995 = vand.u32 %v4994, 4294901760
    %v4996 = vsub.f32 %v4994, %v4995
    %v4997 = vand.u32 %v4996, 4294901760
    %4998 = vmatpush.msra.mxu0 %v4997
    %v4999 = vand.u32 %v4169, 4294901760
    %v5000 = vsub.f32 %v4169, %v4999
    %v5001 = vand.u32 %v5000, 4294901760
    %v5002 = vsub.f32 %v5000, %v5001
    %v5003 = vand.u32 %v5002, 4294901760
    %5004 = vmatpush.msra.mxu0 %v5003
    %v5005 = vand.u32 %v4168, 4294901760
    %v5006 = vsub.f32 %v4168, %v5005
    %v5007 = vand.u32 %v5006, 4294901760
    %v5008 = vsub.f32 %v5006, %v5007
    %v5009 = vand.u32 %v5008, 4294901760
    %5010 = vmatpush.msra.mxu0 %v5009
    %v5011 = vand.u32 %v414, 4294901760
    %5012 = vmatmul.f32.gmra.mxu0 %v5011
    %v5013 = vpop.f32.mrf.mxu0
    %v5014 = vadd.f32 %v4913, %v5013
    %5015 = vdwg.mxu0
    %v5016 = vand.u32 %v4183, 4294901760
    %v5017 = vsub.f32 %v4183, %v5016
    %5018 = vmatpush.msra.mxu0 %v5017
    %v5019 = vand.u32 %v4182, 4294901760
    %v5020 = vsub.f32 %v4182, %v5019
    %5021 = vmatpush.msra.mxu0 %v5020
    %v5022 = vand.u32 %v4181, 4294901760
    %v5023 = vsub.f32 %v4181, %v5022
    %5024 = vmatpush.msra.mxu0 %v5023
    %v5025 = vand.u32 %v4180, 4294901760
    %v5026 = vsub.f32 %v4180, %v5025
    %5027 = vmatpush.msra.mxu0 %v5026
    %v5028 = vand.u32 %v4179, 4294901760
    %v5029 = vsub.f32 %v4179, %v5028
    %5030 = vmatpush.msra.mxu0 %v5029
    %v5031 = vand.u32 %v4178, 4294901760
    %v5032 = vsub.f32 %v4178, %v5031
    %5033 = vmatpush.msra.mxu0 %v5032
    %v5034 = vand.u32 %v4177, 4294901760
    %v5035 = vsub.f32 %v4177, %v5034
    %5036 = vmatpush.msra.mxu0 %v5035
    %v5037 = vand.u32 %v4176, 4294901760
    %v5038 = vsub.f32 %v4176, %v5037
    %5039 = vmatpush.msra.mxu0 %v5038
    %v5040 = vand.u32 %v4175, 4294901760
    %v5041 = vsub.f32 %v4175, %v5040
    %5042 = vmatpush.msra.mxu0 %v5041
    %v5043 = vand.u32 %v4174, 4294901760
    %v5044 = vsub.f32 %v4174, %v5043
    %5045 = vmatpush.msra.mxu0 %v5044
    %v5046 = vand.u32 %v4173, 4294901760
    %v5047 = vsub.f32 %v4173, %v5046
    %5048 = vmatpush.msra.mxu0 %v5047
    %v5049 = vand.u32 %v4172, 4294901760
    %v5050 = vsub.f32 %v4172, %v5049
    %5051 = vmatpush.msra.mxu0 %v5050
    %v5052 = vand.u32 %v4171, 4294901760
    %v5053 = vsub.f32 %v4171, %v5052
    %5054 = vmatpush.msra.mxu0 %v5053
    %v5055 = vand.u32 %v4170, 4294901760
    %v5056 = vsub.f32 %v4170, %v5055
    %5057 = vmatpush.msra.mxu0 %v5056
    %v5058 = vand.u32 %v4169, 4294901760
    %v5059 = vsub.f32 %v4169, %v5058
    %5060 = vmatpush.msra.mxu0 %v5059
    %v5061 = vand.u32 %v4168, 4294901760
    %v5062 = vsub.f32 %v4168, %v5061
    %5063 = vmatpush.msra.mxu0 %v5062
    %v5064 = vand.u32 %v414, 4294901760
    %v5065 = vsub.f32 %v414, %v5064
    %5066 = vmatmul.f32.gmra.mxu0 %v5065
    %v5067 = vpop.f32.mrf.mxu0
    %v5068 = vadd.f32 %v5014, %v5067
    %5069 = vdwg.mxu0
    %v5070 = vand.u32 %v4183, 4294901760
    %5071 = vmatpush.msra.mxu0 %v5070
    %v5072 = vand.u32 %v4182, 4294901760
    %5073 = vmatpush.msra.mxu0 %v5072
    %v5074 = vand.u32 %v4181, 4294901760
    %5075 = vmatpush.msra.mxu0 %v5074
    %v5076 = vand.u32 %v4180, 4294901760
    %5077 = vmatpush.msra.mxu0 %v5076
    %v5078 = vand.u32 %v4179, 4294901760
    %5079 = vmatpush.msra.mxu0 %v5078
    %v5080 = vand.u32 %v4178, 4294901760
    %5081 = vmatpush.msra.mxu0 %v5080
    %v5082 = vand.u32 %v4177, 4294901760
    %5083 = vmatpush.msra.mxu0 %v5082
    %v5084 = vand.u32 %v4176, 4294901760
    %5085 = vmatpush.msra.mxu0 %v5084
    %v5086 = vand.u32 %v4175, 4294901760
    %5087 = vmatpush.msra.mxu0 %v5086
    %v5088 = vand.u32 %v4174, 4294901760
    %5089 = vmatpush.msra.mxu0 %v5088
    %v5090 = vand.u32 %v4173, 4294901760
    %5091 = vmatpush.msra.mxu0 %v5090
    %v5092 = vand.u32 %v4172, 4294901760
    %5093 = vmatpush.msra.mxu0 %v5092
    %v5094 = vand.u32 %v4171, 4294901760
    %5095 = vmatpush.msra.mxu0 %v5094
    %v5096 = vand.u32 %v4170, 4294901760
    %5097 = vmatpush.msra.mxu0 %v5096
    %v5098 = vand.u32 %v4169, 4294901760
    %5099 = vmatpush.msra.mxu0 %v5098
    %v5100 = vand.u32 %v4168, 4294901760
    %5101 = vmatpush.msra.mxu0 %v5100
    %v5102 = vand.u32 %v414, 4294901760
    %v5103 = vsub.f32 %v414, %v5102
    %v5104 = vand.u32 %v5103, 4294901760
    %5105 = vmatmul.f32.gmra.mxu0 %v5104
    %v5106 = vpop.f32.mrf.mxu0
    %v5107 = vadd.f32 %v5068, %v5106
    %5108 = vdwg.mxu0
    %v5109 = vand.u32 %v4183, 4294901760
    %v5110 = vsub.f32 %v4183, %v5109
    %v5111 = vand.u32 %v5110, 4294901760
    %5112 = vmatpush.msra.mxu0 %v5111
    %v5113 = vand.u32 %v4182, 4294901760
    %v5114 = vsub.f32 %v4182, %v5113
    %v5115 = vand.u32 %v5114, 4294901760
    %5116 = vmatpush.msra.mxu0 %v5115
    %v5117 = vand.u32 %v4181, 4294901760
    %v5118 = vsub.f32 %v4181, %v5117
    %v5119 = vand.u32 %v5118, 4294901760
    %5120 = vmatpush.msra.mxu0 %v5119
    %v5121 = vand.u32 %v4180, 4294901760
    %v5122 = vsub.f32 %v4180, %v5121
    %v5123 = vand.u32 %v5122, 4294901760
    %5124 = vmatpush.msra.mxu0 %v5123
    %v5125 = vand.u32 %v4179, 4294901760
    %v5126 = vsub.f32 %v4179, %v5125
    %v5127 = vand.u32 %v5126, 4294901760
    %5128 = vmatpush.msra.mxu0 %v5127
    %v5129 = vand.u32 %v4178, 4294901760
    %v5130 = vsub.f32 %v4178, %v5129
    %v5131 = vand.u32 %v5130, 4294901760
    %5132 = vmatpush.msra.mxu0 %v5131
    %v5133 = vand.u32 %v4177, 4294901760
    %v5134 = vsub.f32 %v4177, %v5133
    %v5135 = vand.u32 %v5134, 4294901760
    %5136 = vmatpush.msra.mxu0 %v5135
    %v5137 = vand.u32 %v4176, 4294901760
    %v5138 = vsub.f32 %v4176, %v5137
    %v5139 = vand.u32 %v5138, 4294901760
    %5140 = vmatpush.msra.mxu0 %v5139
    %v5141 = vand.u32 %v4175, 4294901760
    %v5142 = vsub.f32 %v4175, %v5141
    %v5143 = vand.u32 %v5142, 4294901760
    %5144 = vmatpush.msra.mxu0 %v5143
    %v5145 = vand.u32 %v4174, 4294901760
    %v5146 = vsub.f32 %v4174, %v5145
    %v5147 = vand.u32 %v5146, 4294901760
    %5148 = vmatpush.msra.mxu0 %v5147
    %v5149 = vand.u32 %v4173, 4294901760
    %v5150 = vsub.f32 %v4173, %v5149
    %v5151 = vand.u32 %v5150, 4294901760
    %5152 = vmatpush.msra.mxu0 %v5151
    %v5153 = vand.u32 %v4172, 4294901760
    %v5154 = vsub.f32 %v4172, %v5153
    %v5155 = vand.u32 %v5154, 4294901760
    %5156 = vmatpush.msra.mxu0 %v5155
    %v5157 = vand.u32 %v4171, 4294901760
    %v5158 = vsub.f32 %v4171, %v5157
    %v5159 = vand.u32 %v5158, 4294901760
    %5160 = vmatpush.msra.mxu0 %v5159
    %v5161 = vand.u32 %v4170, 4294901760
    %v5162 = vsub.f32 %v4170, %v5161
    %v5163 = vand.u32 %v5162, 4294901760
    %5164 = vmatpush.msra.mxu0 %v5163
    %v5165 = vand.u32 %v4169, 4294901760
    %v5166 = vsub.f32 %v4169, %v5165
    %v5167 = vand.u32 %v5166, 4294901760
    %5168 = vmatpush.msra.mxu0 %v5167
    %v5169 = vand.u32 %v4168, 4294901760
    %v5170 = vsub.f32 %v4168, %v5169
    %v5171 = vand.u32 %v5170, 4294901760
    %5172 = vmatpush.msra.mxu0 %v5171
    %v5173 = vand.u32 %v414, 4294901760
    %5174 = vmatmul.f32.gmra.mxu0 %v5173
    %v5175 = vpop.f32.mrf.mxu0
    %v5176 = vadd.f32 %v5107, %v5175
    %5177 = vdwg.mxu0
    %v5178 = vand.u32 %v4183, 4294901760
    %5179 = vmatpush.msra.mxu0 %v5178
    %v5180 = vand.u32 %v4182, 4294901760
    %5181 = vmatpush.msra.mxu0 %v5180
    %v5182 = vand.u32 %v4181, 4294901760
    %5183 = vmatpush.msra.mxu0 %v5182
    %v5184 = vand.u32 %v4180, 4294901760
    %5185 = vmatpush.msra.mxu0 %v5184
    %v5186 = vand.u32 %v4179, 4294901760
    %5187 = vmatpush.msra.mxu0 %v5186
    %v5188 = vand.u32 %v4178, 4294901760
    %5189 = vmatpush.msra.mxu0 %v5188
    %v5190 = vand.u32 %v4177, 4294901760
    %5191 = vmatpush.msra.mxu0 %v5190
    %v5192 = vand.u32 %v4176, 4294901760
    %5193 = vmatpush.msra.mxu0 %v5192
    %v5194 = vand.u32 %v4175, 4294901760
    %5195 = vmatpush.msra.mxu0 %v5194
    %v5196 = vand.u32 %v4174, 4294901760
    %5197 = vmatpush.msra.mxu0 %v5196
    %v5198 = vand.u32 %v4173, 4294901760
    %5199 = vmatpush.msra.mxu0 %v5198
    %v5200 = vand.u32 %v4172, 4294901760
    %5201 = vmatpush.msra.mxu0 %v5200
    %v5202 = vand.u32 %v4171, 4294901760
    %5203 = vmatpush.msra.mxu0 %v5202
    %v5204 = vand.u32 %v4170, 4294901760
    %5205 = vmatpush.msra.mxu0 %v5204
    %v5206 = vand.u32 %v4169, 4294901760
    %5207 = vmatpush.msra.mxu0 %v5206
    %v5208 = vand.u32 %v4168, 4294901760
    %5209 = vmatpush.msra.mxu0 %v5208
    %v5210 = vand.u32 %v414, 4294901760
    %5211 = vmatmul.f32.gmra.mxu0 %v5210
    %v5212 = vpop.f32.mrf.mxu0
    %v5213 = vadd.f32 %v5176, %v5212
    %5214 = vdwg.mxu0
    %5215 = vmatpush.msra.mxu0 0.0
    %5216 = vmatpush.msra.mxu0 0.0
    %5217 = vmatpush.msra.mxu0 0.0
    %5218 = vmatpush.msra.mxu0 0.0
    %5219 = vmatpush.msra.mxu0 0.0
    %5220 = vmatpush.msra.mxu0 0.0
    %5221 = vmatpush.msra.mxu0 0.0
    %5222 = vmatpush.msra.mxu0 0.0
    %5223 = vmatpush.msra.mxu0 0.0
    %5224 = vmatpush.msra.mxu0 0.0
    %5225 = vmatpush.msra.mxu0 0.0
    %5226 = vmatpush.msra.mxu0 0.0
    %5227 = vmatpush.msra.mxu0 0.0
    %5228 = vmatpush.msra.mxu0 0.0
    %v5229 = vand.u32 %v4190, 4294901760
    %5230 = vmatpush.msra.mxu0 %v5229
    %v5231 = vand.u32 %v4184, 4294901760
    %5232 = vmatpush.msra.mxu0 %v5231
    %v5233 = vand.u32 %v4187, 4294901760
    %v5234 = vsub.f32 %v4187, %v5233
    %v5235 = vand.u32 %v5234, 4294901760
    %v5236 = vsub.f32 %v5234, %v5235
    %v5237 = vand.u32 %v5236, 4294901760
    %5238 = vmatmul.f32.gmra.mxu0 %v5237
    %v5239 = vpop.f32.mrf.mxu0
    %v5240 = vadd.f32 %v5213, %v5239
    %5241 = vdwg.mxu0
    %5242 = vmatpush.msra.mxu0 0.0
    %5243 = vmatpush.msra.mxu0 0.0
    %5244 = vmatpush.msra.mxu0 0.0
    %5245 = vmatpush.msra.mxu0 0.0
    %5246 = vmatpush.msra.mxu0 0.0
    %5247 = vmatpush.msra.mxu0 0.0
    %5248 = vmatpush.msra.mxu0 0.0
    %5249 = vmatpush.msra.mxu0 0.0
    %5250 = vmatpush.msra.mxu0 0.0
    %5251 = vmatpush.msra.mxu0 0.0
    %5252 = vmatpush.msra.mxu0 0.0
    %5253 = vmatpush.msra.mxu0 0.0
    %5254 = vmatpush.msra.mxu0 0.0
    %5255 = vmatpush.msra.mxu0 0.0
    %v5256 = vand.u32 %v4190, 4294901760
    %v5257 = vsub.f32 %v4190, %v5256
    %v5258 = vand.u32 %v5257, 4294901760
    %v5259 = vsub.f32 %v5257, %v5258
    %v5260 = vand.u32 %v5259, 4294901760
    %5261 = vmatpush.msra.mxu0 %v5260
    %v5262 = vand.u32 %v4184, 4294901760
    %v5263 = vsub.f32 %v4184, %v5262
    %v5264 = vand.u32 %v5263, 4294901760
    %v5265 = vsub.f32 %v5263, %v5264
    %v5266 = vand.u32 %v5265, 4294901760
    %5267 = vmatpush.msra.mxu0 %v5266
    %v5268 = vand.u32 %v4187, 4294901760
    %5269 = vmatmul.f32.gmra.mxu0 %v5268
    %v5270 = vpop.f32.mrf.mxu0
    %v5271 = vadd.f32 %v5240, %v5270
    %5272 = vdwg.mxu0
    %5273 = vmatpush.msra.mxu0 0.0
    %5274 = vmatpush.msra.mxu0 0.0
    %5275 = vmatpush.msra.mxu0 0.0
    %5276 = vmatpush.msra.mxu0 0.0
    %5277 = vmatpush.msra.mxu0 0.0
    %5278 = vmatpush.msra.mxu0 0.0
    %5279 = vmatpush.msra.mxu0 0.0
    %5280 = vmatpush.msra.mxu0 0.0
    %5281 = vmatpush.msra.mxu0 0.0
    %5282 = vmatpush.msra.mxu0 0.0
    %5283 = vmatpush.msra.mxu0 0.0
    %5284 = vmatpush.msra.mxu0 0.0
    %5285 = vmatpush.msra.mxu0 0.0
    %5286 = vmatpush.msra.mxu0 0.0
    %v5287 = vand.u32 %v4190, 4294901760
    %v5288 = vsub.f32 %v4190, %v5287
    %5289 = vmatpush.msra.mxu0 %v5288
    %v5290 = vand.u32 %v4184, 4294901760
    %v5291 = vsub.f32 %v4184, %v5290
    %5292 = vmatpush.msra.mxu0 %v5291
    %v5293 = vand.u32 %v4187, 4294901760
    %v5294 = vsub.f32 %v4187, %v5293
    %5295 = vmatmul.f32.gmra.mxu0 %v5294
    %v5296 = vpop.f32.mrf.mxu0
    %v5297 = vadd.f32 %v5271, %v5296
    %5298 = vdwg.mxu0
    %5299 = vmatpush.msra.mxu0 0.0
    %5300 = vmatpush.msra.mxu0 0.0
    %5301 = vmatpush.msra.mxu0 0.0
    %5302 = vmatpush.msra.mxu0 0.0
    %5303 = vmatpush.msra.mxu0 0.0
    %5304 = vmatpush.msra.mxu0 0.0
    %5305 = vmatpush.msra.mxu0 0.0
    %5306 = vmatpush.msra.mxu0 0.0
    %5307 = vmatpush.msra.mxu0 0.0
    %5308 = vmatpush.msra.mxu0 0.0
    %5309 = vmatpush.msra.mxu0 0.0
    %5310 = vmatpush.msra.mxu0 0.0
    %5311 = vmatpush.msra.mxu0 0.0
    %5312 = vmatpush.msra.mxu0 0.0
    %v5313 = vand.u32 %v4190, 4294901760
    %5314 = vmatpush.msra.mxu0 %v5313
    %v5315 = vand.u32 %v4184, 4294901760
    %5316 = vmatpush.msra.mxu0 %v5315
    %v5317 = vand.u32 %v4187, 4294901760
    %v5318 = vsub.f32 %v4187, %v5317
    %v5319 = vand.u32 %v5318, 4294901760
    %5320 = vmatmul.f32.gmra.mxu0 %v5319
    %v5321 = vpop.f32.mrf.mxu0
    %v5322 = vadd.f32 %v5297, %v5321
    %5323 = vdwg.mxu0
    %5324 = vmatpush.msra.mxu0 0.0
    %5325 = vmatpush.msra.mxu0 0.0
    %5326 = vmatpush.msra.mxu0 0.0
    %5327 = vmatpush.msra.mxu0 0.0
    %5328 = vmatpush.msra.mxu0 0.0
    %5329 = vmatpush.msra.mxu0 0.0
    %5330 = vmatpush.msra.mxu0 0.0
    %5331 = vmatpush.msra.mxu0 0.0
    %5332 = vmatpush.msra.mxu0 0.0
    %5333 = vmatpush.msra.mxu0 0.0
    %5334 = vmatpush.msra.mxu0 0.0
    %5335 = vmatpush.msra.mxu0 0.0
    %5336 = vmatpush.msra.mxu0 0.0
    %5337 = vmatpush.msra.mxu0 0.0
    %v5338 = vand.u32 %v4190, 4294901760
    %v5339 = vsub.f32 %v4190, %v5338
    %v5340 = vand.u32 %v5339, 4294901760
    %5341 = vmatpush.msra.mxu0 %v5340
    %v5342 = vand.u32 %v4184, 4294901760
    %v5343 = vsub.f32 %v4184, %v5342
    %v5344 = vand.u32 %v5343, 4294901760
    %5345 = vmatpush.msra.mxu0 %v5344
    %v5346 = vand.u32 %v4187, 4294901760
    %5347 = vmatmul.f32.gmra.mxu0 %v5346
    %v5348 = vpop.f32.mrf.mxu0
    %v5349 = vadd.f32 %v5322, %v5348
    %5350 = vdwg.mxu0
    %5351 = vmatpush.msra.mxu0 0.0
    %5352 = vmatpush.msra.mxu0 0.0
    %5353 = vmatpush.msra.mxu0 0.0
    %5354 = vmatpush.msra.mxu0 0.0
    %5355 = vmatpush.msra.mxu0 0.0
    %5356 = vmatpush.msra.mxu0 0.0
    %5357 = vmatpush.msra.mxu0 0.0
    %5358 = vmatpush.msra.mxu0 0.0
    %5359 = vmatpush.msra.mxu0 0.0
    %5360 = vmatpush.msra.mxu0 0.0
    %5361 = vmatpush.msra.mxu0 0.0
    %5362 = vmatpush.msra.mxu0 0.0
    %5363 = vmatpush.msra.mxu0 0.0
    %5364 = vmatpush.msra.mxu0 0.0
    %v5365 = vand.u32 %v4190, 4294901760
    %5366 = vmatpush.msra.mxu0 %v5365
    %v5367 = vand.u32 %v4184, 4294901760
    %5368 = vmatpush.msra.mxu0 %v5367
    %v5369 = vand.u32 %v4187, 4294901760
    %5370 = vmatmul.f32.gmra.mxu0 %v5369
    %v5371 = vpop.f32.mrf.mxu0
    %v5372 = vadd.f32 %v5349, %v5371
    %5373 = vdwg.mxu0
    %v5374 = vadd.f32 %v4134, %v5372
    %v5375 = vld [vmem:[%s6] sm:$0x1]
    %v5377 = vperm.slane %v5375, 0
    %v5379 = vadd.f32 %v5374, %v5377
    %vm5380 = vcmask 31744
    %v5381 = vsel %vm5380, %v5379, -inf
    %5382 = vmax.xlane.f32.xlu0 %v5381
    %v5383 = vpop.xlane.xlu0 %5382
    %v5384 = vsub.f32 %v5379, %v5383
    %v5385 = vmul.f32 %v5384, 1.442695
    %v5386 = vpow.pop %v5385
    %v5387 = vsel %vm5380, %v5386, 0.0
    %5388 = vadd.xlane.f32.xlu0 %v5387
    %v5389 = vpop.xlane.xlu0 %5388
    %v5390 = vrcp.pop %v5389
    %v5391 = vmul.f32 %v5389, %v5390
    %v5392 = vsub.f32 1.0, %v5391
    %v5393 = vmul.f32 %v5390, %v5392
    %v5394 = vadd.f32 %v5390, %v5393
    %vm5395 = vweird.f32 %v5389
    %vm5396 = vweird.f32 %v5390
    %vm5397 = vmor %vm5395, %vm5396
    %v5398 = vsel %vm5397, %v5390, %v5394
    %v5399 = vand.u32 2147483647, %v5389
    %vm5400 = vcmp.eq.f32.partialorder %v5399, 8.507059e+37
    %v5401 = vand.u32 %v5389, 2147483648
    %v5402 = vor.u32 1.1754944e-38, %v5401
    %v5403 = vsel %vm5400, %v5402, %v5398
    %v5404 = vmul.f32 %v5386, %v5403
    %5405 = vst.msk [vmem:[%s7] sm:$0xff] %vm5380, %v5404
    // Predicated region
    $region46: #{target_net_forward.1} parent=1 // pred_check
      _
    $region47: #{target_net_forward.1} parent=1 // pred_check_branch
      %5407 = sbr.rel (0) target = $region49
    $region48: #{target_net_forward.1} parent=1 // pred_region
      _
    $region49: #{target_net_forward.1} parent=1 // pred_fallthru
      _
    // Predicated region
    $region50: #{target_net_forward.1} parent=1 // pred_check
      _
    $region51: #{target_net_forward.1} parent=1 // pred_check_branch
      %5409 = sbr.rel (0) target = $region53
    $region52: #{target_net_forward.1} parent=1 // pred_region
      _
    $region53: #{target_net_forward.1} parent=1 // pred_fallthru
      _
    %5410 = vsyncpa [#allocation3], 1
    %5411 = vsyncpa [#allocation5], 1
    %5412 = vsyncpa [#allocation8], 1

</llo_original>
